<compile_context>
chip_gen: v7x
topology: tpu7x:2x2x1
jax: 0.10.0
libtpu: 0.0.40
codegen_flags: <defaults>
</compile_context>

<pallas_src>
import jax
import jax.numpy as jnp
from jax import lax
from jax.experimental import pallas as pl
from jax.experimental.pallas import tpu as pltpu

EPS = 1e-5  # nn.BatchNorm3d default


def _round_up(x, m):
    return ((x + m - 1) // m) * m


# ---------------------------------------------------------------------------
# Pallas kernels
# ---------------------------------------------------------------------------
def _conv3d_kernel(xp_ref, w_ref, y_ref, s_ref, ss_ref):
    """One batch element per grid step.

    xp_ref : (D+2, H*W, 9*Cin) bf16 -- (kh,kw)-im2col panel, halo'd (padded) depth
    w_ref  : (3, 9*Cin, Cout)  bf16 -- weights, kd-major K order
    y_ref  : (D*H*W, Cout)     bf16 -- conv output (written exactly once)
    s_ref  : (1, Cout)         f32  -- per-step sum            (BatchNorm)
    ss_ref : (1, Cout)         f32  -- per-step sum of squares (BatchNorm)
    """
    Dp, HW, K = xp_ref.shape
    D = Dp - 2
    M = D * HW

    w = w_ref[...]                                        # single weight load
    acc = jnp.dot(xp_ref[0:D, :, :].reshape(M, K), w[0],
                  preferred_element_type=jnp.float32)
    for kd in (1, 2):                                     # 3 deep-K matmuls total
        acc = acc + jnp.dot(xp_ref[kd:kd + D, :, :].reshape(M, K), w[kd],
                            preferred_element_type=jnp.float32)

    y_ref[...] = acc.astype(y_ref.dtype)                  # single store
    s_ref[...] = jnp.sum(acc, axis=0, keepdims=True)
    ss_ref[...] = jnp.sum(acc * acc, axis=0, keepdims=True)


def _scale_shift_relu_kernel(y_ref, s_ref, t_ref, o_ref):
    """Lane-dense BatchNorm apply + ReLU: o = max(y * scale + shift, 0)."""
    y = y_ref[...].astype(jnp.float32)
    o_ref[...] = jnp.maximum(y * s_ref[...] + t_ref[...], 0.0).astype(o_ref.dtype)


# ---------------------------------------------------------------------------
# Wrappers
# ---------------------------------------------------------------------------
def _epilogue_row_tile(rows):
    if rows <= 16:
        return rows
    # >=2 blocks when possible (2 TensorCores on v7x), <=1024 rows per block
    # (~512 KiB at 128 f32 lanes) for HBM-streaming efficiency on all gens.
    return min(1024, _round_up((rows + 1) // 2, 8))


def conv3d_bn_relu(x_ndhwc, weight, bias, gamma, beta, *,
                   out_dtype=jnp.bfloat16, compute_dtype=jnp.bfloat16):
    """3x3x3 'same' Conv3d + training-mode BatchNorm3d + ReLU (channels-last)."""
    del bias  # cancels exactly against the batch mean in training-mode BN
    N, D, H, W, Cin = x_ndhwc.shape
    Cout = weight.shape[0]
    HW, M = H * W, D * H * W
    P = N * M
    K9 = 9 * Cin

    # Zero-pad once; build the (kh, kw) im2col panel in the wrapper so the
    # kernel's contraction depth is 9*Cin.  Depth stays padded: the kd halo is
    # handled with 3 leading-axis slices inside the kernel (HBM read is 1x).
    xp = jnp.pad(x_ndhwc.astype(compute_dtype),
                 ((0, 0), (1, 1), (1, 1), (1, 1), (0, 0)))   # (N, D+2, H+2, W+2, Cin)
    panel = jnp.concatenate(
        [xp[:, :, kh:kh + H, kw:kw + W, :] for kh in range(3) for kw in range(3)],
        axis=-1).reshape(N, D + 2, HW, K9)                   # (N, D+2, HW, 9*Cin)

    # (Cout, Cin, 3,3,3) -> (kd, (kh,kw,ci), Cout), matching the panel's K order.
    wt = jnp.transpose(weight, (2, 3, 4, 1, 0)).reshape(3, K9, Cout)
    wt = wt.astype(compute_dtype)

    y, ssum, ssq = pl.pallas_call(
        _conv3d_kernel,
        grid=(N,),
        in_specs=[
            pl.BlockSpec((None, D + 2, HW, K9), lambda n: (n, 0, 0, 0)),
            pl.BlockSpec((3, K9, Cout), lambda n: (0, 0, 0)),
        ],
        out_specs=(
            pl.BlockSpec((None, M, Cout), lambda n: (n, 0, 0)),
            pl.BlockSpec((None, 1, Cout), lambda n: (n, 0, 0)),
            pl.BlockSpec((None, 1, Cout), lambda n: (n, 0, 0)),
        ),
        out_shape=(
            jax.ShapeDtypeStruct((N, M, Cout), jnp.bfloat16),
            jax.ShapeDtypeStruct((N, 1, Cout), jnp.float32),
            jax.ShapeDtypeStruct((N, 1, Cout), jnp.float32),
        ),
        compiler_params=pltpu.CompilerParams(
            dimension_semantics=("parallel",)),
    )(panel, wt)

    # ---- cross-step BatchNorm statistics (training-mode batch stats) --------
    mean_z = ssum.sum(axis=(0, 1)) / P
    var = jnp.maximum(ssq.sum(axis=(0, 1)) / P - mean_z * mean_z, 0.0)
    scale = gamma * lax.rsqrt(var + EPS)
    shift = beta - mean_z * scale            # conv bias cancels exactly here

    # ---- lane-dense scale/shift/ReLU epilogue --------------------------------
    if Cout <= 128 and 128 % Cout == 0 and (P * Cout) % 128 == 0:
        L = 128                              # pack 128//Cout pixels per lane row
    else:
        L = Cout                             # fallback: correct, masked lanes
    G = L // Cout
    rows = (P * Cout) // L
    tr = _epilogue_row_tile(rows)
    rows_p = _round_up(rows, tr)

    y_dense = y.reshape(rows, L)             # free row-major view of (N, M, Cout)
    if rows_p != rows:
        y_dense = jnp.pad(y_dense, ((0, rows_p - rows), (0, 0)))
    s_dense = jnp.tile(scale, G).reshape(1, L).astype(jnp.float32)
    t_dense = jnp.tile(shift, G).reshape(1, L).astype(jnp.float32)

    out_dense = pl.pallas_call(
        _scale_shift_relu_kernel,
        grid=(rows_p // tr,),
        in_specs=[
            pl.BlockSpec((tr, L), lambda i: (i, 0)),
            pl.BlockSpec((1, L), lambda i: (0, 0)),
            pl.BlockSpec((1, L), lambda i: (0, 0)),
        ],
        out_specs=pl.BlockSpec((tr, L), lambda i: (i, 0)),
        out_shape=jax.ShapeDtypeStruct((rows_p, L), out_dtype),
        compiler_params=pltpu.CompilerParams(
            dimension_semantics=("parallel",)),
    )(y_dense, s_dense, t_dense)

    if rows_p != rows:
        out_dense = out_dense[:rows]
    return out_dense.reshape(N, D, H, W, Cout)


def _maxpool3d_2x2x2(x_ndhwc):
    # Trivial memory-bound window max; kept as XLA reshape+reduce glue.
    N, D, H, W, C = x_ndhwc.shape
    return x_ndhwc.reshape(N, D // 2, 2, H // 2, 2, W // 2, 2, C).max(axis=(2, 4, 6))


def down_forward(x_ncdhw, params):
    """Equivalent of Down.forward; x is NCDHW like the PyTorch module."""
    x = jnp.transpose(x_ncdhw, (0, 2, 3, 4, 1))          # NCDHW -> NDHWC
    x = _maxpool3d_2x2x2(x)
    h = conv3d_bn_relu(x, params["w1"], params["b1"], params["g1"],
                       params["beta1"], out_dtype=jnp.bfloat16)
    y = conv3d_bn_relu(h, params["w2"], params["b2"], params["g2"],
                       params["beta2"], out_dtype=jnp.float32)
    return jnp.transpose(y, (0, 4, 1, 2, 3))             # NDHWC -> NCDHW


# ---------------------------------------------------------------------------
# Pure-JAX reference (bf16 MXU inputs, otherwise f32) for the correctness check
# ---------------------------------------------------------------------------
def _ref_conv_bn_relu(x_ncdhw, w, b, g, beta):
    y = lax.conv_general_dilated(
        x_ncdhw.astype(jnp.bfloat16), w.astype(jnp.bfloat16),
        window_strides=(1, 1, 1), padding=((1, 1), (1, 1), (1, 1)),
        dimension_numbers=("NCDHW", "OIDHW", "NCDHW"),
        preferred_element_type=jnp.float32)
    y = y + b.reshape(1, -1, 1, 1, 1)
    mu = jnp.mean(y, axis=(0, 2, 3, 4), keepdims=True)
    var = jnp.mean((y - mu) ** 2, axis=(0, 2, 3, 4), keepdims=True)
    y_hat = (y - mu) * lax.rsqrt(var + EPS)
    return jnp.maximum(y_hat * g.reshape(1, -1, 1, 1, 1)
                       + beta.reshape(1, -1, 1, 1, 1), 0.0)


def _ref_down(x_ncdhw, params):
    N, C, D, H, W = x_ncdhw.shape
    x = x_ncdhw.reshape(N, C, D // 2, 2, H // 2, 2, W // 2, 2).max(axis=(3, 5, 7))
    y = _ref_conv_bn_relu(x, params["w1"], params["b1"], params["g1"], params["beta1"])
    return _ref_conv_bn_relu(y, params["w2"], params["b2"], params["g2"], params["beta2"])


# ---------------------------------------------------------------------------
if __name__ == "__main__":
    # Down(in_channels=4, out_channels=8) on a (2, 4, 16, 16, 16) input.
    N, Cin, Cout, D, H, W = 2, 4, 8, 16, 16, 16
    key = jax.random.PRNGKey(0)
    ks = jax.random.split(key, 9)

    x = jax.random.normal(ks[0], (N, Cin, D, H, W), jnp.float32)
    params = dict(
        w1=0.2 * jax.random.normal(ks[1], (Cout, Cin, 3, 3, 3), jnp.float32),
        b1=0.1 * jax.random.normal(ks[2], (Cout,), jnp.float32),
        g1=1.0 + 0.1 * jax.random.normal(ks[3], (Cout,), jnp.float32),
        beta1=0.1 * jax.random.normal(ks[4], (Cout,), jnp.float32),
        w2=0.2 * jax.random.normal(ks[5], (Cout, Cout, 3, 3, 3), jnp.float32),
        b2=0.1 * jax.random.normal(ks[6], (Cout,), jnp.float32),
        g2=1.0 + 0.1 * jax.random.normal(ks[7], (Cout,), jnp.float32),
        beta2=0.1 * jax.random.normal(ks[8], (Cout,), jnp.float32),
    )

    out = jax.block_until_ready(jax.jit(down_forward)(x, params))
    assert out.shape == (N, Cout, D // 2, H // 2, W // 2)

    ref = _ref_down(x, params)
    max_err = float(jnp.max(jnp.abs(out - ref)))
    # bf16 MXU inputs (matched in the reference) + bf16 intermediate activation
    # storage in the kernel path -> tolerance above the resulting re-rounding
    # noise; a real algorithmic bug produces O(1) errors.
    assert max_err < 5e-2, f"max abs error too large: {max_err}"

    print("KERNEL_OK")
</pallas_src>

<mosaic_0001>
module attributes {stable_mosaic.version = 11 : i64} {
  func.func @_conv3d_kernel(%arg0: i32, %arg1: memref<1x10x64x36xbf16, #tpu.memory_space<vmem>>, %arg2: memref<3x36x8xbf16, #tpu.memory_space<vmem>>, %arg3: memref<1x512x8xbf16, #tpu.memory_space<vmem>>, %arg4: memref<1x1x8xf32, #tpu.memory_space<vmem>>, %arg5: memref<1x1x8xf32, #tpu.memory_space<vmem>>) attributes {dimension_semantics = [#tpu.dimension_semantics<parallel>], iteration_bounds = array<i64: 2>, scalar_prefetch = 0 : i64, scratch_operands = 0 : i64, tpu.core_type = #tpu.core_type<tc>, window_params = [{transform_indices = @transform_0, window_bounds = array<i64: 1, 10, 64, 36>}, {pipeline_mode = #tpu.pipeline_mode<synchronous>, transform_indices = @transform_1, window_bounds = array<i64: 3, 36, 8>}, {transform_indices = @transform_2, window_bounds = array<i64: 1, 512, 8>}, {transform_indices = @transform_3, window_bounds = array<i64: 1, 1, 8>}, {transform_indices = @transform_4, window_bounds = array<i64: 1, 1, 8>}]} {
    %c0 = arith.constant 0 : index
    %c0_0 = arith.constant 0 : index
    %c0_1 = arith.constant 0 : index
    %0 = vector.load %arg2[%c0, %c0_0, %c0_1] : memref<3x36x8xbf16, #tpu.memory_space<vmem>>, vector<3x36x8xbf16>
    %c0_2 = arith.constant 0 : index
    %c0_3 = arith.constant 0 : index
    %c0_4 = arith.constant 0 : index
    %c0_5 = arith.constant 0 : index
    %1 = vector.load %arg1[%c0_2, %c0_3, %c0_4, %c0_5] : memref<1x10x64x36xbf16, #tpu.memory_space<vmem>>, vector<1x8x64x36xbf16>
    %2 = vector.shape_cast %1 : vector<1x8x64x36xbf16> to vector<8x64x36xbf16>
    %3 = vector.shape_cast %2 : vector<8x64x36xbf16> to vector<512x36xbf16>
    %4 = vector.extract_strided_slice %0 {offsets = [0, 0, 0], sizes = [1, 36, 8], strides = [1, 1, 1]} : vector<3x36x8xbf16> to vector<1x36x8xbf16>
    %5 = vector.shape_cast %4 : vector<1x36x8xbf16> to vector<36x8xbf16>
    %cst = arith.constant dense<0.000000e+00> : vector<512x8xf32>
    %6 = tpu.matmul %3, %5, %cst {dimension_numbers = #tpu.dot_dimension_numbers<[1], [0], [0], [1], [0, 0, 1, 1], [], []>} : vector<512x36xbf16>, vector<36x8xbf16>, vector<512x8xf32> -> vector<512x8xf32>
    %c0_6 = arith.constant 0 : index
    %c1 = arith.constant 1 : index
    %c0_7 = arith.constant 0 : index
    %c0_8 = arith.constant 0 : index
    %7 = vector.load %arg1[%c0_6, %c1, %c0_7, %c0_8] : memref<1x10x64x36xbf16, #tpu.memory_space<vmem>>, vector<1x8x64x36xbf16>
    %8 = vector.shape_cast %7 : vector<1x8x64x36xbf16> to vector<8x64x36xbf16>
    %9 = vector.shape_cast %8 : vector<8x64x36xbf16> to vector<512x36xbf16>
    %10 = vector.extract_strided_slice %0 {offsets = [1, 0, 0], sizes = [1, 36, 8], strides = [1, 1, 1]} : vector<3x36x8xbf16> to vector<1x36x8xbf16>
    %11 = vector.shape_cast %10 : vector<1x36x8xbf16> to vector<36x8xbf16>
    %cst_9 = arith.constant dense<0.000000e+00> : vector<512x8xf32>
    %12 = tpu.matmul %9, %11, %cst_9 {dimension_numbers = #tpu.dot_dimension_numbers<[1], [0], [0], [1], [0, 0, 1, 1], [], []>} : vector<512x36xbf16>, vector<36x8xbf16>, vector<512x8xf32> -> vector<512x8xf32>
    %13 = arith.addf %6, %12 : vector<512x8xf32>
    %c0_10 = arith.constant 0 : index
    %c2 = arith.constant 2 : index
    %c0_11 = arith.constant 0 : index
    %c0_12 = arith.constant 0 : index
    %14 = vector.load %arg1[%c0_10, %c2, %c0_11, %c0_12] : memref<1x10x64x36xbf16, #tpu.memory_space<vmem>>, vector<1x8x64x36xbf16>
    %15 = vector.shape_cast %14 : vector<1x8x64x36xbf16> to vector<8x64x36xbf16>
    %16 = vector.shape_cast %15 : vector<8x64x36xbf16> to vector<512x36xbf16>
    %17 = vector.extract_strided_slice %0 {offsets = [2, 0, 0], sizes = [1, 36, 8], strides = [1, 1, 1]} : vector<3x36x8xbf16> to vector<1x36x8xbf16>
    %18 = vector.shape_cast %17 : vector<1x36x8xbf16> to vector<36x8xbf16>
    %cst_13 = arith.constant dense<0.000000e+00> : vector<512x8xf32>
    %19 = tpu.matmul %16, %18, %cst_13 {dimension_numbers = #tpu.dot_dimension_numbers<[1], [0], [0], [1], [0, 0, 1, 1], [], []>} : vector<512x36xbf16>, vector<36x8xbf16>, vector<512x8xf32> -> vector<512x8xf32>
    %20 = arith.addf %13, %19 : vector<512x8xf32>
    %21 = arith.truncf %20 : vector<512x8xf32> to vector<512x8xbf16>
    %c0_14 = arith.constant 0 : index
    %c0_15 = arith.constant 0 : index
    %c0_16 = arith.constant 0 : index
    %22 = vector.load %arg3[%c0_14, %c0_15, %c0_16] : memref<1x512x8xbf16, #tpu.memory_space<vmem>>, vector<1x512x8xbf16>
    %23 = vector.shape_cast %22 : vector<1x512x8xbf16> to vector<512x8xbf16>
    %24 = vector.shape_cast %21 : vector<512x8xbf16> to vector<1x512x8xbf16>
    tpu.vector_store %arg3[%c0_14, %c0_15, %c0_16], %24 {strides = array<i32>} : memref<1x512x8xbf16, #tpu.memory_space<vmem>>, vector<1x512x8xbf16>,
    %cst_17 = arith.constant dense<0.000000e+00> : vector<8xf32>
    %25 = vector.multi_reduction <add>, %20, %cst_17 [0] : vector<512x8xf32> to vector<8xf32>
    %26 = vector.shape_cast %25 : vector<8xf32> to vector<1x8xf32>
    %c0_18 = arith.constant 0 : index
    %c0_19 = arith.constant 0 : index
    %c0_20 = arith.constant 0 : index
    %27 = vector.load %arg4[%c0_18, %c0_19, %c0_20] : memref<1x1x8xf32, #tpu.memory_space<vmem>>, vector<1x1x8xf32>
    %28 = vector.shape_cast %27 : vector<1x1x8xf32> to vector<1x8xf32>
    %29 = vector.shape_cast %26 : vector<1x8xf32> to vector<1x1x8xf32>
    tpu.vector_store %arg4[%c0_18, %c0_19, %c0_20], %29 {strides = array<i32>} : memref<1x1x8xf32, #tpu.memory_space<vmem>>, vector<1x1x8xf32>,
    %30 = arith.mulf %20, %20 : vector<512x8xf32>
    %cst_21 = arith.constant dense<0.000000e+00> : vector<8xf32>
    %31 = vector.multi_reduction <add>, %30, %cst_21 [0] : vector<512x8xf32> to vector<8xf32>
    %32 = vector.shape_cast %31 : vector<8xf32> to vector<1x8xf32>
    %c0_22 = arith.constant 0 : index
    %c0_23 = arith.constant 0 : index
    %c0_24 = arith.constant 0 : index
    %33 = vector.load %arg5[%c0_22, %c0_23, %c0_24] : memref<1x1x8xf32, #tpu.memory_space<vmem>>, vector<1x1x8xf32>
    %34 = vector.shape_cast %33 : vector<1x1x8xf32> to vector<1x8xf32>
    %35 = vector.shape_cast %32 : vector<1x8xf32> to vector<1x1x8xf32>
    tpu.vector_store %arg5[%c0_22, %c0_23, %c0_24], %35 {strides = array<i32>} : memref<1x1x8xf32, #tpu.memory_space<vmem>>, vector<1x1x8xf32>,
    return
  }
  func.func @transform_0(%arg0: i32) -> (i32, i32, i32, i32) {
    %c0_i32 = arith.constant 0 : i32
    %c0_i32_0 = arith.constant 0 : i32
    %c0_i32_1 = arith.constant 0 : i32
    %c0_i32_2 = arith.constant 0 : i32
    return %arg0, %c0_i32, %c0_i32_0, %c0_i32_1 : i32, i32, i32, i32
  }
  func.func @transform_1(%arg0: i32) -> (i32, i32, i32) {
    %c0_i32 = arith.constant 0 : i32
    %c0_i32_0 = arith.constant 0 : i32
    %c0_i32_1 = arith.constant 0 : i32
    %c0_i32_2 = arith.constant 0 : i32
    return %c0_i32, %c0_i32_0, %c0_i32_1 : i32, i32, i32
  }
  func.func @transform_2(%arg0: i32) -> (i32, i32, i32) {
    %c0_i32 = arith.constant 0 : i32
    %c0_i32_0 = arith.constant 0 : i32
    %c0_i32_1 = arith.constant 0 : i32
    return %arg0, %c0_i32, %c0_i32_0 : i32, i32, i32
  }
  func.func @transform_3(%arg0: i32) -> (i32, i32, i32) {
    %c0_i32 = arith.constant 0 : i32
    %c0_i32_0 = arith.constant 0 : i32
    %c0_i32_1 = arith.constant 0 : i32
    return %arg0, %c0_i32, %c0_i32_0 : i32, i32, i32
  }
  func.func @transform_4(%arg0: i32) -> (i32, i32, i32) {
    %c0_i32 = arith.constant 0 : i32
    %c0_i32_0 = arith.constant 0 : i32
    %c0_i32_1 = arith.constant 0 : i32
    return %arg0, %c0_i32, %c0_i32_0 : i32, i32, i32
  }
}

module attributes {stable_mosaic.version = 11 : i64} {
  func.func @_scale_shift_relu_kernel(%arg0: i32, %arg1: memref<32x128xbf16, #tpu.memory_space<vmem>>, %arg2: memref<1x128xf32, #tpu.memory_space<vmem>>, %arg3: memref<1x128xf32, #tpu.memory_space<vmem>>, %arg4: memref<32x128xbf16, #tpu.memory_space<vmem>>) attributes {dimension_semantics = [#tpu.dimension_semantics<parallel>], iteration_bounds = array<i64: 2>, scalar_prefetch = 0 : i64, scratch_operands = 0 : i64, tpu.core_type = #tpu.core_type<tc>, window_params = [{transform_indices = @transform_0, window_bounds = array<i64: 32, 128>}, {pipeline_mode = #tpu.pipeline_mode<synchronous>, transform_indices = @transform_1, window_bounds = array<i64: 1, 128>}, {pipeline_mode = #tpu.pipeline_mode<synchronous>, transform_indices = @transform_2, window_bounds = array<i64: 1, 128>}, {transform_indices = @transform_3, window_bounds = array<i64: 32, 128>}]} {
    %c0 = arith.constant 0 : index
    %c0_0 = arith.constant 0 : index
    %0 = vector.load %arg1[%c0, %c0_0] : memref<32x128xbf16, #tpu.memory_space<vmem>>, vector<32x128xbf16>
    %1 = arith.extf %0 : vector<32x128xbf16> to vector<32x128xf32>
    %c0_1 = arith.constant 0 : index
    %c0_2 = arith.constant 0 : index
    %2 = vector.load %arg2[%c0_1, %c0_2] : memref<1x128xf32, #tpu.memory_space<vmem>>, vector<1x128xf32>
    %3 = vector.broadcast %2 : vector<1x128xf32> to vector<32x128xf32>
    %4 = arith.mulf %1, %3 : vector<32x128xf32>
    %c0_3 = arith.constant 0 : index
    %c0_4 = arith.constant 0 : index
    %5 = vector.load %arg3[%c0_3, %c0_4] : memref<1x128xf32, #tpu.memory_space<vmem>>, vector<1x128xf32>
    %6 = vector.broadcast %5 : vector<1x128xf32> to vector<32x128xf32>
    %7 = arith.addf %4, %6 : vector<32x128xf32>
    %cst = arith.constant 0.000000e+00 : f32
    %8 = vector.broadcast %cst : f32 to vector<32x128xf32>
    %9 = arith.maximumf %7, %8 : vector<32x128xf32>
    %10 = arith.truncf %9 : vector<32x128xf32> to vector<32x128xbf16>
    %c0_5 = arith.constant 0 : index
    %c0_6 = arith.constant 0 : index
    %11 = vector.load %arg4[%c0_5, %c0_6] : memref<32x128xbf16, #tpu.memory_space<vmem>>, vector<32x128xbf16>
    tpu.vector_store %arg4[%c0_5, %c0_6], %10 {strides = array<i32>} : memref<32x128xbf16, #tpu.memory_space<vmem>>, vector<32x128xbf16>,
    return
  }
  func.func @transform_0(%arg0: i32) -> (i32, i32) {
    %c0_i32 = arith.constant 0 : i32
    %c0_i32_0 = arith.constant 0 : i32
    return %arg0, %c0_i32 : i32, i32
  }
  func.func @transform_1(%arg0: i32) -> (i32, i32) {
    %c0_i32 = arith.constant 0 : i32
    %c0_i32_0 = arith.constant 0 : i32
    %c0_i32_1 = arith.constant 0 : i32
    return %c0_i32, %c0_i32_0 : i32, i32
  }
  func.func @transform_2(%arg0: i32) -> (i32, i32) {
    %c0_i32 = arith.constant 0 : i32
    %c0_i32_0 = arith.constant 0 : i32
    %c0_i32_1 = arith.constant 0 : i32
    return %c0_i32, %c0_i32_0 : i32, i32
  }
  func.func @transform_3(%arg0: i32) -> (i32, i32) {
    %c0_i32 = arith.constant 0 : i32
    %c0_i32_0 = arith.constant 0 : i32
    return %arg0, %c0_i32 : i32, i32
  }
}

module attributes {stable_mosaic.version = 11 : i64} {
  func.func @_conv3d_kernel(%arg0: i32, %arg1: memref<1x10x64x72xbf16, #tpu.memory_space<vmem>>, %arg2: memref<3x72x8xbf16, #tpu.memory_space<vmem>>, %arg3: memref<1x512x8xbf16, #tpu.memory_space<vmem>>, %arg4: memref<1x1x8xf32, #tpu.memory_space<vmem>>, %arg5: memref<1x1x8xf32, #tpu.memory_space<vmem>>) attributes {dimension_semantics = [#tpu.dimension_semantics<parallel>], iteration_bounds = array<i64: 2>, scalar_prefetch = 0 : i64, scratch_operands = 0 : i64, tpu.core_type = #tpu.core_type<tc>, window_params = [{transform_indices = @transform_0, window_bounds = array<i64: 1, 10, 64, 72>}, {pipeline_mode = #tpu.pipeline_mode<synchronous>, transform_indices = @transform_1, window_bounds = array<i64: 3, 72, 8>}, {transform_indices = @transform_2, window_bounds = array<i64: 1, 512, 8>}, {transform_indices = @transform_3, window_bounds = array<i64: 1, 1, 8>}, {transform_indices = @transform_4, window_bounds = array<i64: 1, 1, 8>}]} {
    %c0 = arith.constant 0 : index
    %c0_0 = arith.constant 0 : index
    %c0_1 = arith.constant 0 : index
    %0 = vector.load %arg2[%c0, %c0_0, %c0_1] : memref<3x72x8xbf16, #tpu.memory_space<vmem>>, vector<3x72x8xbf16>
    %c0_2 = arith.constant 0 : index
    %c0_3 = arith.constant 0 : index
    %c0_4 = arith.constant 0 : index
    %c0_5 = arith.constant 0 : index
    %1 = vector.load %arg1[%c0_2, %c0_3, %c0_4, %c0_5] : memref<1x10x64x72xbf16, #tpu.memory_space<vmem>>, vector<1x8x64x72xbf16>
    %2 = vector.shape_cast %1 : vector<1x8x64x72xbf16> to vector<8x64x72xbf16>
    %3 = vector.shape_cast %2 : vector<8x64x72xbf16> to vector<512x72xbf16>
    %4 = vector.extract_strided_slice %0 {offsets = [0, 0, 0], sizes = [1, 72, 8], strides = [1, 1, 1]} : vector<3x72x8xbf16> to vector<1x72x8xbf16>
    %5 = vector.shape_cast %4 : vector<1x72x8xbf16> to vector<72x8xbf16>
    %cst = arith.constant dense<0.000000e+00> : vector<512x8xf32>
    %6 = tpu.matmul %3, %5, %cst {dimension_numbers = #tpu.dot_dimension_numbers<[1], [0], [0], [1], [0, 0, 1, 1], [], []>} : vector<512x72xbf16>, vector<72x8xbf16>, vector<512x8xf32> -> vector<512x8xf32>
    %c0_6 = arith.constant 0 : index
    %c1 = arith.constant 1 : index
    %c0_7 = arith.constant 0 : index
    %c0_8 = arith.constant 0 : index
    %7 = vector.load %arg1[%c0_6, %c1, %c0_7, %c0_8] : memref<1x10x64x72xbf16, #tpu.memory_space<vmem>>, vector<1x8x64x72xbf16>
    %8 = vector.shape_cast %7 : vector<1x8x64x72xbf16> to vector<8x64x72xbf16>
    %9 = vector.shape_cast %8 : vector<8x64x72xbf16> to vector<512x72xbf16>
    %10 = vector.extract_strided_slice %0 {offsets = [1, 0, 0], sizes = [1, 72, 8], strides = [1, 1, 1]} : vector<3x72x8xbf16> to vector<1x72x8xbf16>
    %11 = vector.shape_cast %10 : vector<1x72x8xbf16> to vector<72x8xbf16>
    %cst_9 = arith.constant dense<0.000000e+00> : vector<512x8xf32>
    %12 = tpu.matmul %9, %11, %cst_9 {dimension_numbers = #tpu.dot_dimension_numbers<[1], [0], [0], [1], [0, 0, 1, 1], [], []>} : vector<512x72xbf16>, vector<72x8xbf16>, vector<512x8xf32> -> vector<512x8xf32>
    %13 = arith.addf %6, %12 : vector<512x8xf32>
    %c0_10 = arith.constant 0 : index
    %c2 = arith.constant 2 : index
    %c0_11 = arith.constant 0 : index
    %c0_12 = arith.constant 0 : index
    %14 = vector.load %arg1[%c0_10, %c2, %c0_11, %c0_12] : memref<1x10x64x72xbf16, #tpu.memory_space<vmem>>, vector<1x8x64x72xbf16>
    %15 = vector.shape_cast %14 : vector<1x8x64x72xbf16> to vector<8x64x72xbf16>
    %16 = vector.shape_cast %15 : vector<8x64x72xbf16> to vector<512x72xbf16>
    %17 = vector.extract_strided_slice %0 {offsets = [2, 0, 0], sizes = [1, 72, 8], strides = [1, 1, 1]} : vector<3x72x8xbf16> to vector<1x72x8xbf16>
    %18 = vector.shape_cast %17 : vector<1x72x8xbf16> to vector<72x8xbf16>
    %cst_13 = arith.constant dense<0.000000e+00> : vector<512x8xf32>
    %19 = tpu.matmul %16, %18, %cst_13 {dimension_numbers = #tpu.dot_dimension_numbers<[1], [0], [0], [1], [0, 0, 1, 1], [], []>} : vector<512x72xbf16>, vector<72x8xbf16>, vector<512x8xf32> -> vector<512x8xf32>
    %20 = arith.addf %13, %19 : vector<512x8xf32>
    %21 = arith.truncf %20 : vector<512x8xf32> to vector<512x8xbf16>
    %c0_14 = arith.constant 0 : index
    %c0_15 = arith.constant 0 : index
    %c0_16 = arith.constant 0 : index
    %22 = vector.load %arg3[%c0_14, %c0_15, %c0_16] : memref<1x512x8xbf16, #tpu.memory_space<vmem>>, vector<1x512x8xbf16>
    %23 = vector.shape_cast %22 : vector<1x512x8xbf16> to vector<512x8xbf16>
    %24 = vector.shape_cast %21 : vector<512x8xbf16> to vector<1x512x8xbf16>
    tpu.vector_store %arg3[%c0_14, %c0_15, %c0_16], %24 {strides = array<i32>} : memref<1x512x8xbf16, #tpu.memory_space<vmem>>, vector<1x512x8xbf16>,
    %cst_17 = arith.constant dense<0.000000e+00> : vector<8xf32>
    %25 = vector.multi_reduction <add>, %20, %cst_17 [0] : vector<512x8xf32> to vector<8xf32>
    %26 = vector.shape_cast %25 : vector<8xf32> to vector<1x8xf32>
    %c0_18 = arith.constant 0 : index
    %c0_19 = arith.constant 0 : index
    %c0_20 = arith.constant 0 : index
    %27 = vector.load %arg4[%c0_18, %c0_19, %c0_20] : memref<1x1x8xf32, #tpu.memory_space<vmem>>, vector<1x1x8xf32>
    %28 = vector.shape_cast %27 : vector<1x1x8xf32> to vector<1x8xf32>
    %29 = vector.shape_cast %26 : vector<1x8xf32> to vector<1x1x8xf32>
    tpu.vector_store %arg4[%c0_18, %c0_19, %c0_20], %29 {strides = array<i32>} : memref<1x1x8xf32, #tpu.memory_space<vmem>>, vector<1x1x8xf32>,
    %30 = arith.mulf %20, %20 : vector<512x8xf32>
    %cst_21 = arith.constant dense<0.000000e+00> : vector<8xf32>
    %31 = vector.multi_reduction <add>, %30, %cst_21 [0] : vector<512x8xf32> to vector<8xf32>
    %32 = vector.shape_cast %31 : vector<8xf32> to vector<1x8xf32>
    %c0_22 = arith.constant 0 : index
    %c0_23 = arith.constant 0 : index
    %c0_24 = arith.constant 0 : index
    %33 = vector.load %arg5[%c0_22, %c0_23, %c0_24] : memref<1x1x8xf32, #tpu.memory_space<vmem>>, vector<1x1x8xf32>
    %34 = vector.shape_cast %33 : vector<1x1x8xf32> to vector<1x8xf32>
    %35 = vector.shape_cast %32 : vector<1x8xf32> to vector<1x1x8xf32>
    tpu.vector_store %arg5[%c0_22, %c0_23, %c0_24], %35 {strides = array<i32>} : memref<1x1x8xf32, #tpu.memory_space<vmem>>, vector<1x1x8xf32>,
    return
  }
  func.func @transform_0(%arg0: i32) -> (i32, i32, i32, i32) {
    %c0_i32 = arith.constant 0 : i32
    %c0_i32_0 = arith.constant 0 : i32
    %c0_i32_1 = arith.constant 0 : i32
    %c0_i32_2 = arith.constant 0 : i32
    return %arg0, %c0_i32, %c0_i32_0, %c0_i32_1 : i32, i32, i32, i32
  }
  func.func @transform_1(%arg0: i32) -> (i32, i32, i32) {
    %c0_i32 = arith.constant 0 : i32
    %c0_i32_0 = arith.constant 0 : i32
    %c0_i32_1 = arith.constant 0 : i32
    %c0_i32_2 = arith.constant 0 : i32
    return %c0_i32, %c0_i32_0, %c0_i32_1 : i32, i32, i32
  }
  func.func @transform_2(%arg0: i32) -> (i32, i32, i32) {
    %c0_i32 = arith.constant 0 : i32
    %c0_i32_0 = arith.constant 0 : i32
    %c0_i32_1 = arith.constant 0 : i32
    return %arg0, %c0_i32, %c0_i32_0 : i32, i32, i32
  }
  func.func @transform_3(%arg0: i32) -> (i32, i32, i32) {
    %c0_i32 = arith.constant 0 : i32
    %c0_i32_0 = arith.constant 0 : i32
    %c0_i32_1 = arith.constant 0 : i32
    return %arg0, %c0_i32, %c0_i32_0 : i32, i32, i32
  }
  func.func @transform_4(%arg0: i32) -> (i32, i32, i32) {
    %c0_i32 = arith.constant 0 : i32
    %c0_i32_0 = arith.constant 0 : i32
    %c0_i32_1 = arith.constant 0 : i32
    return %arg0, %c0_i32, %c0_i32_0 : i32, i32, i32
  }
}

module attributes {stable_mosaic.version = 11 : i64} {
  func.func @_scale_shift_relu_kernel(%arg0: i32, %arg1: memref<32x128xbf16, #tpu.memory_space<vmem>>, %arg2: memref<1x128xf32, #tpu.memory_space<vmem>>, %arg3: memref<1x128xf32, #tpu.memory_space<vmem>>, %arg4: memref<32x128xf32, #tpu.memory_space<vmem>>) attributes {dimension_semantics = [#tpu.dimension_semantics<parallel>], iteration_bounds = array<i64: 2>, scalar_prefetch = 0 : i64, scratch_operands = 0 : i64, tpu.core_type = #tpu.core_type<tc>, window_params = [{transform_indices = @transform_0, window_bounds = array<i64: 32, 128>}, {pipeline_mode = #tpu.pipeline_mode<synchronous>, transform_indices = @transform_1, window_bounds = array<i64: 1, 128>}, {pipeline_mode = #tpu.pipeline_mode<synchronous>, transform_indices = @transform_2, window_bounds = array<i64: 1, 128>}, {transform_indices = @transform_3, window_bounds = array<i64: 32, 128>}]} {
    %c0 = arith.constant 0 : index
    %c0_0 = arith.constant 0 : index
    %0 = vector.load %arg1[%c0, %c0_0] : memref<32x128xbf16, #tpu.memory_space<vmem>>, vector<32x128xbf16>
    %1 = arith.extf %0 : vector<32x128xbf16> to vector<32x128xf32>
    %c0_1 = arith.constant 0 : index
    %c0_2 = arith.constant 0 : index
    %2 = vector.load %arg2[%c0_1, %c0_2] : memref<1x128xf32, #tpu.memory_space<vmem>>, vector<1x128xf32>
    %3 = vector.broadcast %2 : vector<1x128xf32> to vector<32x128xf32>
    %4 = arith.mulf %1, %3 : vector<32x128xf32>
    %c0_3 = arith.constant 0 : index
    %c0_4 = arith.constant 0 : index
    %5 = vector.load %arg3[%c0_3, %c0_4] : memref<1x128xf32, #tpu.memory_space<vmem>>, vector<1x128xf32>
    %6 = vector.broadcast %5 : vector<1x128xf32> to vector<32x128xf32>
    %7 = arith.addf %4, %6 : vector<32x128xf32>
    %cst = arith.constant 0.000000e+00 : f32
    %8 = vector.broadcast %cst : f32 to vector<32x128xf32>
    %9 = arith.maximumf %7, %8 : vector<32x128xf32>
    %c0_5 = arith.constant 0 : index
    %c0_6 = arith.constant 0 : index
    %10 = vector.load %arg4[%c0_5, %c0_6] : memref<32x128xf32, #tpu.memory_space<vmem>>, vector<32x128xf32>
    tpu.vector_store %arg4[%c0_5, %c0_6], %9 {strides = array<i32>} : memref<32x128xf32, #tpu.memory_space<vmem>>, vector<32x128xf32>,
    return
  }
  func.func @transform_0(%arg0: i32) -> (i32, i32) {
    %c0_i32 = arith.constant 0 : i32
    %c0_i32_0 = arith.constant 0 : i32
    return %arg0, %c0_i32 : i32, i32
  }
  func.func @transform_1(%arg0: i32) -> (i32, i32) {
    %c0_i32 = arith.constant 0 : i32
    %c0_i32_0 = arith.constant 0 : i32
    %c0_i32_1 = arith.constant 0 : i32
    return %c0_i32, %c0_i32_0 : i32, i32
  }
  func.func @transform_2(%arg0: i32) -> (i32, i32) {
    %c0_i32 = arith.constant 0 : i32
    %c0_i32_0 = arith.constant 0 : i32
    %c0_i32_1 = arith.constant 0 : i32
    return %c0_i32, %c0_i32_0 : i32, i32
  }
  func.func @transform_3(%arg0: i32) -> (i32, i32) {
    %c0_i32 = arith.constant 0 : i32
    %c0_i32_0 = arith.constant 0 : i32
    return %arg0, %c0_i32 : i32, i32
  }
}

</mosaic_0001>

<llo_original>
// kernel: down_forward.4
$region0: #{down_forward.4}
  #allocation0 [shape = 'u32[]', space=smem, size = 0x4, offset = 0x4, fixed_abs, tag = 'smem constant byte address 0x4 - core index']
  #allocation1 [shape = 'u32[144,128]{1,0:T(1,128)}', space=vmem, size = 0x12000, scoped, tag = 'internal scratch']
  %s0 = inlined_call_operand.vmem [shape: bf16[2,10,64,36], index: 0, kind: input, shape index: {}]
  %s1 = inlined_call_operand.vmem [shape: bf16[3,36,8], index: 1, kind: input, shape index: {}]
  %s2 = inlined_call_operand.vmem [shape: bf16[2,512,8], index: 2, kind: output, shape index: {0}]
  %s3 = inlined_call_operand.vmem [shape: f32[2,1,8], index: 3, kind: output, shape index: {1}]
  %s4 = inlined_call_operand.vmem [shape: f32[2,1,8], index: 4, kind: output, shape index: {2}]
  %5 = xla_tuple %s2, %s3, %s4
  %s6 = sld [smem:[#allocation0]]
  $region57: #{down_forward.4} parent=0
    _
  %s8 = ssub.s32 1, %s6
  %s9 = scalar_select 0, %s8, %s6
  loop: start=0, step=1, limit=4
  $region2: #{down_forward.4} parent=0 // loop_pre_header
    _
  $region3: #{down_forward.4} parent=0 // loop_header
    %s11 = sphi 0, %s15
    %p12 = scmp.ge.s32.totalorder %s11, 4
    %s21 = sphi 0, %s23
    %s24 = sphi 0, %s21
    %s25 = sphi 0, %s24
    %s41 = sphi 0, %s25
    %s45 = sphi 0, %s45
    %s47 = sphi 0, %s45
    %s48 = sphi 0, %s47
    %s62 = sphi 0, %s48
    %s68 = sphi 0, %s70
    %s71 = sphi 0, %s68
    %s72 = sphi 0, %s71
    %s88 = sphi 0, %s72
    %s94 = sphi 0, %s96
    %s97 = sphi 0, %s94
    %s98 = sphi 0, %s97
    %s114 = sphi 0, %s98
    %s120 = sphi 0, %s122
    %s123 = sphi 0, %s120
    %s124 = sphi 0, %s123
    %s140 = sphi 0, %s124
  $region4: #{down_forward.4} parent=0 // loop_header_branch
    %14 = sbr.rel (%p12) target = $region8
  $region5: #{down_forward.4} parent=0 // loop_body
    %s16 = ssub.s32 %s11, 1
    %s17 = ssub.s32 %s11, 2
    %s18 = sadd.s32 %s11, 1
    %s19 = ssub.s32 %s11, %s18
    %p20 = scmp.eq.s32.totalorder %s19, 0
    %s22 = sadd.s32 %s21, 1
    %s23 = scalar_select %p20, %s21, %s22
    %p26 = pneg %p20
    %p27 = scmp.eq.s32.totalorder %s11, 1
    %p28 = por %p26, %p27
    %p29 = scmp.ne.s32.totalorder %s21, %s24
    %p30 = scmp.eq.s32.totalorder %s11, 0
    %p31 = por %p29, %p30
    %p32 = scmp.ne.s32.totalorder %s21, %s24
    %p33 = scmp.eq.s32.totalorder %s16, 1
    %p34 = por %p32, %p33
    %p35 = scmp.ne.s32.totalorder %s24, %s25
    %p36 = scmp.eq.s32.totalorder %s16, 0
    %p37 = por %p35, %p36
    %p38 = scmp.ne.s32.totalorder %s24, %s25
    %p39 = scmp.eq.s32.totalorder %s17, 1
    %p40 = por %p38, %p39
    %p42 = scmp.ne.s32.totalorder %s25, %s41
    %p43 = scmp.eq.s32.totalorder %s17, 0
    %p44 = por %p42, %p43
    %s46 = sadd.s32 %s45, 1
    %p49 = scmp.eq.s32.totalorder %s11, 1
    %p50 = scmp.ne.s32.totalorder %s45, %s47
    %p51 = scmp.eq.s32.totalorder %s11, 0
    %p52 = por %p50, %p51
    %p53 = scmp.ne.s32.totalorder %s45, %s47
    %p54 = scmp.eq.s32.totalorder %s16, 1
    %p55 = por %p53, %p54
    %p56 = scmp.ne.s32.totalorder %s47, %s48
    %p57 = scmp.eq.s32.totalorder %s16, 0
    %p58 = por %p56, %p57
    %p59 = scmp.ne.s32.totalorder %s47, %s48
    %p60 = scmp.eq.s32.totalorder %s17, 1
    %p61 = por %p59, %p60
    %p63 = scmp.ne.s32.totalorder %s48, %s62
    %p64 = scmp.eq.s32.totalorder %s17, 0
    %p65 = por %p63, %p64
    %s66 = ssub.s32 %s11, %s18
    %p67 = scmp.eq.s32.totalorder %s66, 0
    %s69 = sadd.s32 %s68, 1
    %s70 = scalar_select %p67, %s68, %s69
    %p73 = pneg %p67
    %p74 = scmp.eq.s32.totalorder %s11, 1
    %p75 = por %p73, %p74
    %p76 = scmp.ne.s32.totalorder %s68, %s71
    %p77 = scmp.eq.s32.totalorder %s11, 0
    %p78 = por %p76, %p77
    %p79 = scmp.ne.s32.totalorder %s68, %s71
    %p80 = scmp.eq.s32.totalorder %s16, 1
    %p81 = por %p79, %p80
    %p82 = scmp.ne.s32.totalorder %s71, %s72
    %p83 = scmp.eq.s32.totalorder %s16, 0
    %p84 = por %p82, %p83
    %p85 = scmp.ne.s32.totalorder %s71, %s72
    %p86 = scmp.eq.s32.totalorder %s17, 1
    %p87 = por %p85, %p86
    %p89 = scmp.ne.s32.totalorder %s72, %s88
    %p90 = scmp.eq.s32.totalorder %s17, 0
    %p91 = por %p89, %p90
    %s92 = ssub.s32 %s11, %s18
    %p93 = scmp.eq.s32.totalorder %s92, 0
    %s95 = sadd.s32 %s94, 1
    %s96 = scalar_select %p93, %s94, %s95
    %p99 = pneg %p93
    %p100 = scmp.eq.s32.totalorder %s11, 1
    %p101 = por %p99, %p100
    %p102 = scmp.ne.s32.totalorder %s94, %s97
    %p103 = scmp.eq.s32.totalorder %s11, 0
    %p104 = por %p102, %p103
    %p105 = scmp.ne.s32.totalorder %s94, %s97
    %p106 = scmp.eq.s32.totalorder %s16, 1
    %p107 = por %p105, %p106
    %p108 = scmp.ne.s32.totalorder %s97, %s98
    %p109 = scmp.eq.s32.totalorder %s16, 0
    %p110 = por %p108, %p109
    %p111 = scmp.ne.s32.totalorder %s97, %s98
    %p112 = scmp.eq.s32.totalorder %s17, 1
    %p113 = por %p111, %p112
    %p115 = scmp.ne.s32.totalorder %s98, %s114
    %p116 = scmp.eq.s32.totalorder %s17, 0
    %p117 = por %p115, %p116
    %s118 = ssub.s32 %s11, %s18
    %p119 = scmp.eq.s32.totalorder %s118, 0
    %s121 = sadd.s32 %s120, 1
    %s122 = scalar_select %p119, %s120, %s121
    %p125 = pneg %p119
    %p126 = scmp.eq.s32.totalorder %s11, 1
    %p127 = por %p125, %p126
    %p128 = scmp.ne.s32.totalorder %s120, %s123
    %p129 = scmp.eq.s32.totalorder %s11, 0
    %p130 = por %p128, %p129
    %p131 = scmp.ne.s32.totalorder %s120, %s123
    %p132 = scmp.eq.s32.totalorder %s16, 1
    %p133 = por %p131, %p132
    %p134 = scmp.ne.s32.totalorder %s123, %s124
    %p135 = scmp.eq.s32.totalorder %s16, 0
    %p136 = por %p134, %p135
    %p137 = scmp.ne.s32.totalorder %s123, %s124
    %p138 = scmp.eq.s32.totalorder %s17, 1
    %p139 = por %p137, %p138
    %p141 = scmp.ne.s32.totalorder %s124, %s140
    %p142 = scmp.eq.s32.totalorder %s17, 0
    %p143 = por %p141, %p142
    %p144 = scmp.le.s32.totalorder 1, %s11
    %p145 = scmp.lt.s32.totalorder %s11, 3
    %p146 = pnand %p144, %p145
    %p147 = pneg %p146
    // Predicated region
    $region9: #{down_forward.4} parent=5 // pred_check
      _
    $region10: #{down_forward.4} parent=5 // pred_check_branch
      %149 = sbr.rel (%p146) target = $region12
    $region11: #{down_forward.4} parent=5 // pred_region
      %s150 = ssub.s32 %s11, 1
      // Predicated region
      $region13: #{down_forward.4} parent=11 // pred_check
        %p151 = pneg %p58
      $region14: #{down_forward.4} parent=11 // pred_check_branch
        %153 = sbr.rel (%p151) target = $region16
      $region15: #{down_forward.4} parent=11 // pred_region
        _
      $region16: #{down_forward.4} parent=11 // pred_fallthru
        _
    $region12: #{down_forward.4} parent=5 // pred_fallthru
      _
    %p154 = scmp.lt.s32.totalorder %s11, 2
    // Predicated region
    $region17: #{down_forward.4} parent=5 // pred_check
      %p155 = pneg %p154
    $region18: #{down_forward.4} parent=5 // pred_check_branch
      %157 = sbr.rel (%p155) target = $region20
    $region19: #{down_forward.4} parent=5 // pred_region
      // Predicated region
      $region21: #{down_forward.4} parent=19 // pred_check
        %p158 = pneg %p31
      $region22: #{down_forward.4} parent=19 // pred_check_branch
        %160 = sbr.rel (%p158) target = $region24
      $region23: #{down_forward.4} parent=19 // pred_region
        %p161 = scmp.lt.s32.totalorder %s11, 1
        %s162 = scalar_select %p161, %s11, 1
        %s163 = smul.addr %s162, 80
        %s164 = smul.addr %s163, 4
        %s165 = scalar_lea.vmem %s0, %s164
      $region24: #{down_forward.4} parent=19 // pred_fallthru
        _
    $region20: #{down_forward.4} parent=5 // pred_fallthru
      _
    %p166 = scmp.le.s32.totalorder 1, %s11
    %p167 = scmp.lt.s32.totalorder %s11, 3
    %p168 = pnand %p166, %p167
    %p169 = pneg %p168
    // Predicated region
    $region25: #{down_forward.4} parent=5 // pred_check
      _
    $region26: #{down_forward.4} parent=5 // pred_check_branch
      %171 = sbr.rel (%p168) target = $region28
    $region27: #{down_forward.4} parent=5 // pred_region
      %s172 = ssub.s32 %s11, 1
      %p173 = scmp.lt.s32.totalorder %s16, 1
      %s174 = scalar_select %p173, %s16, 1
      %s175 = smul.addr %s174, 80
      %s176 = smul.addr %s175, 4
      %s177 = scalar_lea.vmem %s0, %s176
      %p178 = pneg %p37
      %p179 = pneg %p34
      %p180 = pneg %p58
      %p181 = pneg %p55
      %p182 = pneg %p84
      %p183 = pneg %p81
      %p184 = scmp.lt.s32.totalorder %s16, 1
      %s185 = scalar_select %p184, %s16, 1
      %s186 = smul.addr %s185, 64
      %s187 = smul.addr %s186, 4
      %s188 = scalar_lea.vmem %s2, %s187
      %p189 = pneg %p110
      %p190 = pneg %p107
      %p191 = scmp.lt.s32.totalorder %s16, 1
      %s192 = scalar_select %p191, %s16, 1
      %s193 = scalar_lea.vmem %s3, %s192
      %p194 = pneg %p136
      %p195 = pneg %p133
      %p196 = scmp.lt.s32.totalorder %s16, 1
      %s197 = scalar_select %p196, %s16, 1
      %s198 = scalar_lea.vmem %s4, %s197
      %p199 = scmp.lt.s32.totalorder %s16, 1
      %s200 = scalar_select %p199, %s16, 1
      %s201 = smul.addr %s200, 80
      %s202 = smul.addr %s201, 4
      %s203 = scalar_lea.vmem %s0, %s202
      %p204 = scmp.lt.s32.totalorder %s16, 1
      %s205 = scalar_select %p204, %s16, 1
      %s206 = smul.addr %s205, 64
      %s207 = smul.addr %s206, 4
      %s208 = scalar_lea.vmem %s2, %s207
      %p209 = scmp.lt.s32.totalorder %s16, 1
      %s210 = scalar_select %p209, %s16, 1
      %s211 = scalar_lea.vmem %s3, %s210
      %p212 = scmp.lt.s32.totalorder %s16, 1
      %s213 = scalar_select %p212, %s16, 1
      %s214 = scalar_lea.vmem %s4, %s213
      %v216 = vld [vmem:[%s1] sm:$0xf]
      %v217 = vld [vmem:[%s1 + $0x4] sm:$0xf]
      %v218 = vld [vmem:[%s1 + $0x8] sm:$0xf]
      %v219 = vld [vmem:[%s1 + $0xc] sm:$0xf]
      %v220 = vld [vmem:[%s1 + $0x10] sm:$0x3]
      %v221 = vld [vmem:[%s1 + $0x14] sm:$0xf]
      %v222 = vld [vmem:[%s1 + $0x18] sm:$0xf]
      %v223 = vld [vmem:[%s1 + $0x1c] sm:$0xf]
      %v224 = vld [vmem:[%s1 + $0x20] sm:$0xf]
      %v225 = vld [vmem:[%s1 + $0x24] sm:$0x3]
      %v226 = vld [vmem:[%s1 + $0x28] sm:$0xf]
      %v227 = vld [vmem:[%s1 + $0x2c] sm:$0xf]
      %v228 = vld [vmem:[%s1 + $0x30] sm:$0xf]
      %v229 = vld [vmem:[%s1 + $0x34] sm:$0xf]
      %v230 = vld [vmem:[%s1 + $0x38] sm:$0x3]
      %v231 = vld [vmem:[%s203] sm:$0xf]
      %v232 = vld [vmem:[%s203 + $0x4] sm:$0xf]
      %v233 = vld [vmem:[%s203 + $0x8] sm:$0xf]
      %v234 = vld [vmem:[%s203 + $0xc] sm:$0xf]
      %v235 = vld [vmem:[%s203 + $0x10] sm:$0xf]
      %v236 = vld [vmem:[%s203 + $0x14] sm:$0xf]
      %v237 = vld [vmem:[%s203 + $0x18] sm:$0xf]
      %v238 = vld [vmem:[%s203 + $0x1c] sm:$0xf]
      %v239 = vld [vmem:[%s203 + $0x20] sm:$0xf]
      %v240 = vld [vmem:[%s203 + $0x24] sm:$0xf]
      %v241 = vld [vmem:[%s203 + $0x28] sm:$0xf]
      %v242 = vld [vmem:[%s203 + $0x2c] sm:$0xf]
      %v243 = vld [vmem:[%s203 + $0x30] sm:$0xf]
      %v244 = vld [vmem:[%s203 + $0x34] sm:$0xf]
      %v245 = vld [vmem:[%s203 + $0x38] sm:$0xf]
      %v246 = vld [vmem:[%s203 + $0x3c] sm:$0xf]
      %v247 = vld [vmem:[%s203 + $0x40] sm:$0xf]
      %v248 = vld [vmem:[%s203 + $0x44] sm:$0xf]
      %v249 = vld [vmem:[%s203 + $0x48] sm:$0xf]
      %v250 = vld [vmem:[%s203 + $0x4c] sm:$0xf]
      %v251 = vld [vmem:[%s203 + $0x50] sm:$0xf]
      %v252 = vld [vmem:[%s203 + $0x54] sm:$0xf]
      %v253 = vld [vmem:[%s203 + $0x58] sm:$0xf]
      %v254 = vld [vmem:[%s203 + $0x5c] sm:$0xf]
      %v255 = vld [vmem:[%s203 + $0x60] sm:$0xf]
      %v256 = vld [vmem:[%s203 + $0x64] sm:$0xf]
      %v257 = vld [vmem:[%s203 + $0x68] sm:$0xf]
      %v258 = vld [vmem:[%s203 + $0x6c] sm:$0xf]
      %v259 = vld [vmem:[%s203 + $0x70] sm:$0xf]
      %v260 = vld [vmem:[%s203 + $0x74] sm:$0xf]
      %v261 = vld [vmem:[%s203 + $0x78] sm:$0xf]
      %v262 = vld [vmem:[%s203 + $0x7c] sm:$0xf]
      %v263 = vld [vmem:[%s203 + $0x80] sm:$0xf]
      %v264 = vld [vmem:[%s203 + $0x84] sm:$0xf]
      %v265 = vld [vmem:[%s203 + $0x88] sm:$0xf]
      %v266 = vld [vmem:[%s203 + $0x8c] sm:$0xf]
      %v267 = vld [vmem:[%s203 + $0x90] sm:$0xf]
      %v268 = vld [vmem:[%s203 + $0x94] sm:$0xf]
      %v269 = vld [vmem:[%s203 + $0x98] sm:$0xf]
      %v270 = vld [vmem:[%s203 + $0x9c] sm:$0xf]
      %v271 = vld [vmem:[%s203 + $0xa0] sm:$0xf]
      %v272 = vld [vmem:[%s203 + $0xa4] sm:$0xf]
      %v273 = vld [vmem:[%s203 + $0xa8] sm:$0xf]
      %v274 = vld [vmem:[%s203 + $0xac] sm:$0xf]
      %v275 = vld [vmem:[%s203 + $0xb0] sm:$0xf]
      %v276 = vld [vmem:[%s203 + $0xb4] sm:$0xf]
      %v277 = vld [vmem:[%s203 + $0xb8] sm:$0xf]
      %v278 = vld [vmem:[%s203 + $0xbc] sm:$0xf]
      %v279 = vld [vmem:[%s203 + $0xc0] sm:$0xf]
      %v280 = vld [vmem:[%s203 + $0xc4] sm:$0xf]
      %v281 = vld [vmem:[%s203 + $0xc8] sm:$0xf]
      %v282 = vld [vmem:[%s203 + $0xcc] sm:$0xf]
      %v283 = vld [vmem:[%s203 + $0xd0] sm:$0xf]
      %v284 = vld [vmem:[%s203 + $0xd4] sm:$0xf]
      %v285 = vld [vmem:[%s203 + $0xd8] sm:$0xf]
      %v286 = vld [vmem:[%s203 + $0xdc] sm:$0xf]
      %v287 = vld [vmem:[%s203 + $0xe0] sm:$0xf]
      %v288 = vld [vmem:[%s203 + $0xe4] sm:$0xf]
      %v289 = vld [vmem:[%s203 + $0xe8] sm:$0xf]
      %v290 = vld [vmem:[%s203 + $0xec] sm:$0xf]
      %v291 = vld [vmem:[%s203 + $0xf0] sm:$0xf]
      %v292 = vld [vmem:[%s203 + $0xf4] sm:$0xf]
      %v293 = vld [vmem:[%s203 + $0xf8] sm:$0xf]
      %v294 = vld [vmem:[%s203 + $0xfc] sm:$0xf]
      %s295 = scalar_lea.vmem %s203, 32
      %v296 = vld [vmem:[%s295] sm:$0xf]
      %v297 = vld [vmem:[%s295 + $0x4] sm:$0xf]
      %v298 = vld [vmem:[%s295 + $0x8] sm:$0xf]
      %v299 = vld [vmem:[%s295 + $0xc] sm:$0xf]
      %v300 = vld [vmem:[%s295 + $0x10] sm:$0xf]
      %v301 = vld [vmem:[%s295 + $0x14] sm:$0xf]
      %v302 = vld [vmem:[%s295 + $0x18] sm:$0xf]
      %v303 = vld [vmem:[%s295 + $0x1c] sm:$0xf]
      %v304 = vld [vmem:[%s295 + $0x20] sm:$0xf]
      %v305 = vld [vmem:[%s295 + $0x24] sm:$0xf]
      %v306 = vld [vmem:[%s295 + $0x28] sm:$0xf]
      %v307 = vld [vmem:[%s295 + $0x2c] sm:$0xf]
      %v308 = vld [vmem:[%s295 + $0x30] sm:$0xf]
      %v309 = vld [vmem:[%s295 + $0x34] sm:$0xf]
      %v310 = vld [vmem:[%s295 + $0x38] sm:$0xf]
      %v311 = vld [vmem:[%s295 + $0x3c] sm:$0xf]
      %v312 = vld [vmem:[%s295 + $0x40] sm:$0xf]
      %v313 = vld [vmem:[%s295 + $0x44] sm:$0xf]
      %v314 = vld [vmem:[%s295 + $0x48] sm:$0xf]
      %v315 = vld [vmem:[%s295 + $0x4c] sm:$0xf]
      %v316 = vld [vmem:[%s295 + $0x50] sm:$0xf]
      %v317 = vld [vmem:[%s295 + $0x54] sm:$0xf]
      %v318 = vld [vmem:[%s295 + $0x58] sm:$0xf]
      %v319 = vld [vmem:[%s295 + $0x5c] sm:$0xf]
      %v320 = vld [vmem:[%s295 + $0x60] sm:$0xf]
      %v321 = vld [vmem:[%s295 + $0x64] sm:$0xf]
      %v322 = vld [vmem:[%s295 + $0x68] sm:$0xf]
      %v323 = vld [vmem:[%s295 + $0x6c] sm:$0xf]
      %v324 = vld [vmem:[%s295 + $0x70] sm:$0xf]
      %v325 = vld [vmem:[%s295 + $0x74] sm:$0xf]
      %v326 = vld [vmem:[%s295 + $0x78] sm:$0xf]
      %v327 = vld [vmem:[%s295 + $0x7c] sm:$0xf]
      %v328 = vld [vmem:[%s295 + $0x80] sm:$0xf]
      %v329 = vld [vmem:[%s295 + $0x84] sm:$0xf]
      %v330 = vld [vmem:[%s295 + $0x88] sm:$0xf]
      %v331 = vld [vmem:[%s295 + $0x8c] sm:$0xf]
      %v332 = vld [vmem:[%s295 + $0x90] sm:$0xf]
      %v333 = vld [vmem:[%s295 + $0x94] sm:$0xf]
      %v334 = vld [vmem:[%s295 + $0x98] sm:$0xf]
      %v335 = vld [vmem:[%s295 + $0x9c] sm:$0xf]
      %v336 = vld [vmem:[%s295 + $0xa0] sm:$0xf]
      %v337 = vld [vmem:[%s295 + $0xa4] sm:$0xf]
      %v338 = vld [vmem:[%s295 + $0xa8] sm:$0xf]
      %v339 = vld [vmem:[%s295 + $0xac] sm:$0xf]
      %v340 = vld [vmem:[%s295 + $0xb0] sm:$0xf]
      %v341 = vld [vmem:[%s295 + $0xb4] sm:$0xf]
      %v342 = vld [vmem:[%s295 + $0xb8] sm:$0xf]
      %v343 = vld [vmem:[%s295 + $0xbc] sm:$0xf]
      %v344 = vld [vmem:[%s295 + $0xc0] sm:$0xf]
      %v345 = vld [vmem:[%s295 + $0xc4] sm:$0xf]
      %v346 = vld [vmem:[%s295 + $0xc8] sm:$0xf]
      %v347 = vld [vmem:[%s295 + $0xcc] sm:$0xf]
      %v348 = vld [vmem:[%s295 + $0xd0] sm:$0xf]
      %v349 = vld [vmem:[%s295 + $0xd4] sm:$0xf]
      %v350 = vld [vmem:[%s295 + $0xd8] sm:$0xf]
      %v351 = vld [vmem:[%s295 + $0xdc] sm:$0xf]
      %v352 = vld [vmem:[%s295 + $0xe0] sm:$0xf]
      %v353 = vld [vmem:[%s295 + $0xe4] sm:$0xf]
      %v354 = vld [vmem:[%s295 + $0xe8] sm:$0xf]
      %v355 = vld [vmem:[%s295 + $0xec] sm:$0xf]
      %v356 = vld [vmem:[%s295 + $0xf0] sm:$0xf]
      %v357 = vld [vmem:[%s295 + $0xf4] sm:$0xf]
      %v358 = vld [vmem:[%s295 + $0xf8] sm:$0xf]
      %v359 = vld [vmem:[%s295 + $0xfc] sm:$0xf]
      %v424 = vunpack.c.l.b16 %v296
      %v425 = vunpack.c.l.b16 %v297
      %v426 = vunpack.c.l.b16 %v298
      %v427 = vunpack.c.l.b16 %v299
      %v428 = vunpack.c.l.b16 %v300
      %v429 = vunpack.c.l.b16 %v301
      %v430 = vunpack.c.l.b16 %v302
      %v431 = vunpack.c.l.b16 %v303
      %v432 = vunpack.c.l.b16 %v304
      %v433 = vunpack.c.l.b16 %v305
      %v434 = vunpack.c.l.b16 %v306
      %v435 = vunpack.c.l.b16 %v307
      %v436 = vunpack.c.l.b16 %v308
      %v437 = vunpack.c.l.b16 %v309
      %v438 = vunpack.c.l.b16 %v310
      %v439 = vunpack.c.l.b16 %v311
      %v440 = vunpack.c.l.b16 %v312
      %v441 = vunpack.c.l.b16 %v313
      %v442 = vunpack.c.l.b16 %v314
      %v443 = vunpack.c.l.b16 %v315
      %v444 = vunpack.c.l.b16 %v316
      %v445 = vunpack.c.l.b16 %v317
      %v446 = vunpack.c.l.b16 %v318
      %v447 = vunpack.c.l.b16 %v319
      %v448 = vunpack.c.l.b16 %v320
      %v449 = vunpack.c.l.b16 %v321
      %v450 = vunpack.c.l.b16 %v322
      %v451 = vunpack.c.l.b16 %v323
      %v452 = vunpack.c.l.b16 %v324
      %v453 = vunpack.c.l.b16 %v325
      %v454 = vunpack.c.l.b16 %v326
      %v455 = vunpack.c.l.b16 %v327
      %v456 = vunpack.c.l.b16 %v328
      %v457 = vunpack.c.l.b16 %v329
      %v458 = vunpack.c.l.b16 %v330
      %v459 = vunpack.c.l.b16 %v331
      %v460 = vunpack.c.l.b16 %v332
      %v461 = vunpack.c.l.b16 %v333
      %v462 = vunpack.c.l.b16 %v334
      %v463 = vunpack.c.l.b16 %v335
      %v464 = vunpack.c.l.b16 %v336
      %v465 = vunpack.c.l.b16 %v337
      %v466 = vunpack.c.l.b16 %v338
      %v467 = vunpack.c.l.b16 %v339
      %v468 = vunpack.c.l.b16 %v340
      %v469 = vunpack.c.l.b16 %v341
      %v470 = vunpack.c.l.b16 %v342
      %v471 = vunpack.c.l.b16 %v343
      %v472 = vunpack.c.l.b16 %v344
      %v473 = vunpack.c.l.b16 %v345
      %v474 = vunpack.c.l.b16 %v346
      %v475 = vunpack.c.l.b16 %v347
      %v476 = vunpack.c.l.b16 %v348
      %v477 = vunpack.c.l.b16 %v349
      %v478 = vunpack.c.l.b16 %v350
      %v479 = vunpack.c.l.b16 %v351
      %v480 = vunpack.c.l.b16 %v352
      %v481 = vunpack.c.l.b16 %v353
      %v482 = vunpack.c.l.b16 %v354
      %v483 = vunpack.c.l.b16 %v355
      %v484 = vunpack.c.l.b16 %v356
      %v485 = vunpack.c.l.b16 %v357
      %v486 = vunpack.c.l.b16 %v358
      %v487 = vunpack.c.l.b16 %v359
      %v488 = vpack.c.b16 %v425, %v424
      %v489 = vpack.c.b16 %v427, %v426
      %v490 = vpack.c.b16 %v429, %v428
      %v491 = vpack.c.b16 %v431, %v430
      %v492 = vpack.c.b16 %v433, %v432
      %v493 = vpack.c.b16 %v435, %v434
      %v494 = vpack.c.b16 %v437, %v436
      %v495 = vpack.c.b16 %v439, %v438
      %v496 = vpack.c.b16 %v441, %v440
      %v497 = vpack.c.b16 %v443, %v442
      %v498 = vpack.c.b16 %v445, %v444
      %v499 = vpack.c.b16 %v447, %v446
      %v500 = vpack.c.b16 %v449, %v448
      %v501 = vpack.c.b16 %v451, %v450
      %v502 = vpack.c.b16 %v453, %v452
      %v503 = vpack.c.b16 %v455, %v454
      %v504 = vpack.c.b16 %v457, %v456
      %v505 = vpack.c.b16 %v459, %v458
      %v506 = vpack.c.b16 %v461, %v460
      %v507 = vpack.c.b16 %v463, %v462
      %v508 = vpack.c.b16 %v465, %v464
      %v509 = vpack.c.b16 %v467, %v466
      %v510 = vpack.c.b16 %v469, %v468
      %v511 = vpack.c.b16 %v471, %v470
      %v512 = vpack.c.b16 %v473, %v472
      %v513 = vpack.c.b16 %v475, %v474
      %v514 = vpack.c.b16 %v477, %v476
      %v515 = vpack.c.b16 %v479, %v478
      %v516 = vpack.c.b16 %v481, %v480
      %v517 = vpack.c.b16 %v483, %v482
      %v518 = vpack.c.b16 %v485, %v484
      %v519 = vpack.c.b16 %v487, %v486
      %v525 = vunpack.c.l.b16 %v221
      %v526 = vunpack.c.l.b16 %v222
      %v527 = vunpack.c.l.b16 %v223
      %v528 = vunpack.c.l.b16 %v224
      %v529 = vunpack.c.l.b16 %v225
      %v530 = vpack.c.b16 %v526, %v525
      %v531 = vpack.c.b16 %v528, %v527
      %v532 = vpack.c.b16 %v529, %v529
      %vm535 = vcmask 293888
      %v537 = vsel %vm535, %v488, 0
      %v540 = vsel %vm535, %v489, 0
      %v543 = vsel %vm535, %v490, 0
      %v546 = vsel %vm535, %v491, 0
      %v549 = vsel %vm535, %v492, 0
      %v552 = vsel %vm535, %v493, 0
      %v555 = vsel %vm535, %v494, 0
      %v558 = vsel %vm535, %v495, 0
      %v561 = vsel %vm535, %v496, 0
      %v564 = vsel %vm535, %v497, 0
      %v567 = vsel %vm535, %v498, 0
      %v570 = vsel %vm535, %v499, 0
      %v573 = vsel %vm535, %v500, 0
      %v576 = vsel %vm535, %v501, 0
      %v579 = vsel %vm535, %v502, 0
      %v582 = vsel %vm535, %v503, 0
      %v585 = vsel %vm535, %v504, 0
      %v588 = vsel %vm535, %v505, 0
      %v591 = vsel %vm535, %v506, 0
      %v594 = vsel %vm535, %v507, 0
      %v597 = vsel %vm535, %v508, 0
      %v600 = vsel %vm535, %v509, 0
      %v603 = vsel %vm535, %v510, 0
      %v606 = vsel %vm535, %v511, 0
      %v609 = vsel %vm535, %v512, 0
      %v612 = vsel %vm535, %v513, 0
      %v615 = vsel %vm535, %v514, 0
      %v618 = vsel %vm535, %v515, 0
      %v621 = vsel %vm535, %v516, 0
      %v624 = vsel %vm535, %v517, 0
      %v627 = vsel %vm535, %v518, 0
      %v630 = vsel %vm535, %v519, 0
      %vm632 = vcmask 1041408
      %v634 = vsel %vm632, %v532, 0
      %636 = vmatprep.subr.bf16.mxu0 0
      %637 = vmatpush1.bf16.msra.mxu0 %v530
      %638 = vmatprep.subr.bf16.mxu0 0
      %639 = vmatpush1.bf16.msra.mxu0 %v531
      %640 = vmatprep.subr.bf16.mxu0 0
      %641 = vmatpush1.bf16.msra.mxu0 %v634
      %642 = vmatprep.subr.bf16.mxu0 0
      %643 = vmatpush1.bf16.msra.mxu0 0
      %644 = vmatprep.subr.bf16.mxu0 0
      %645 = vmatpush1.bf16.msra.mxu0 0
      %646 = vmatprep.subr.bf16.mxu0 0
      %647 = vmatpush1.bf16.msra.mxu0 0
      %648 = vmatprep.subr.bf16.mxu0 0
      %649 = vmatpush1.bf16.msra.mxu0 0
      %650 = vmatprep.subr.bf16.mxu0 0
      %651 = vmatpush1.bf16.msra.mxu0 0
      %652 = vmatprep.subr.bf16.mxu0 0
      %653 = vmatpush1.bf16.msra.mxu0 0
      %654 = vmatprep.subr.bf16.mxu0 0
      %655 = vmatpush1.bf16.msra.mxu0 0
      %656 = vmatprep.subr.bf16.mxu0 0
      %657 = vmatpush1.bf16.msra.mxu0 0
      %658 = vmatprep.subr.bf16.mxu0 0
      %659 = vmatpush1.bf16.msra.mxu0 0
      %660 = vmatprep.subr.bf16.mxu0 0
      %661 = vmatpush1.bf16.msra.mxu0 0
      %662 = vmatprep.subr.bf16.mxu0 0
      %663 = vmatpush1.bf16.msra.mxu0 0
      %664 = vmatprep.subr.bf16.mxu0 0
      %665 = vmatpush1.bf16.msra.mxu0 0
      %666 = vmatprep.subr.bf16.mxu0 0
      %667 = vmatpush1.bf16.msra.mxu0 0
      %668 = vmatprep.mubr.bf16.mxu0 0
      %669 = vmatmul.mubr.bf16.gmra.mrb[0].mxu0 %v537
      %v670 = vpop.f32.mrb[0].mxu0
      %v671 = vadd.f32 0.0, %v670
      %v672 = vpop.f32.mrb[0].mxu0
      %v673 = vpop.f32.mrb[0].mxu0
      %v674 = vadd.f32 0.0, %v673
      %v675 = vpop.f32.mrb[0].mxu0
      %676 = vmatprep.mubr.bf16.mxu0 0
      %677 = vmatmul.mubr.bf16.gmra.mrb[0].mxu0 %v540
      %v678 = vpop.f32.mrb[0].mxu0
      %v679 = vadd.f32 0.0, %v678
      %v680 = vpop.f32.mrb[0].mxu0
      %v681 = vpop.f32.mrb[0].mxu0
      %v682 = vadd.f32 0.0, %v681
      %v683 = vpop.f32.mrb[0].mxu0
      %684 = vmatprep.mubr.bf16.mxu0 0
      %685 = vmatmul.mubr.bf16.gmra.mrb[0].mxu0 %v543
      %v686 = vpop.f32.mrb[0].mxu0
      %v687 = vadd.f32 0.0, %v686
      %v688 = vpop.f32.mrb[0].mxu0
      %v689 = vpop.f32.mrb[0].mxu0
      %v690 = vadd.f32 0.0, %v689
      %v691 = vpop.f32.mrb[0].mxu0
      %692 = vmatprep.mubr.bf16.mxu0 0
      %693 = vmatmul.mubr.bf16.gmra.mrb[0].mxu0 %v546
      %v694 = vpop.f32.mrb[0].mxu0
      %v695 = vadd.f32 0.0, %v694
      %v696 = vpop.f32.mrb[0].mxu0
      %v697 = vpop.f32.mrb[0].mxu0
      %v698 = vadd.f32 0.0, %v697
      %v699 = vpop.f32.mrb[0].mxu0
      %700 = vmatprep.mubr.bf16.mxu0 0
      %701 = vmatmul.mubr.bf16.gmra.mrb[0].mxu0 %v549
      %v702 = vpop.f32.mrb[0].mxu0
      %v703 = vadd.f32 0.0, %v702
      %v704 = vpop.f32.mrb[0].mxu0
      %v705 = vpop.f32.mrb[0].mxu0
      %v706 = vadd.f32 0.0, %v705
      %v707 = vpop.f32.mrb[0].mxu0
      %708 = vmatprep.mubr.bf16.mxu0 0
      %709 = vmatmul.mubr.bf16.gmra.mrb[0].mxu0 %v552
      %v710 = vpop.f32.mrb[0].mxu0
      %v711 = vadd.f32 0.0, %v710
      %v712 = vpop.f32.mrb[0].mxu0
      %v713 = vpop.f32.mrb[0].mxu0
      %v714 = vadd.f32 0.0, %v713
      %v715 = vpop.f32.mrb[0].mxu0
      %716 = vmatprep.mubr.bf16.mxu0 0
      %717 = vmatmul.mubr.bf16.gmra.mrb[0].mxu0 %v555
      %v718 = vpop.f32.mrb[0].mxu0
      %v719 = vadd.f32 0.0, %v718
      %v720 = vpop.f32.mrb[0].mxu0
      %v721 = vpop.f32.mrb[0].mxu0
      %v722 = vadd.f32 0.0, %v721
      %v723 = vpop.f32.mrb[0].mxu0
      %724 = vmatprep.mubr.bf16.mxu0 0
      %725 = vmatmul.mubr.bf16.gmra.mrb[0].mxu0 %v558
      %v726 = vpop.f32.mrb[0].mxu0
      %v727 = vadd.f32 0.0, %v726
      %v728 = vpop.f32.mrb[0].mxu0
      %v729 = vpop.f32.mrb[0].mxu0
      %v730 = vadd.f32 0.0, %v729
      %v731 = vpop.f32.mrb[0].mxu0
      %732 = vmatprep.mubr.bf16.mxu0 0
      %733 = vmatmul.mubr.bf16.gmra.mrb[0].mxu0 %v561
      %v734 = vpop.f32.mrb[0].mxu0
      %v735 = vadd.f32 0.0, %v734
      %v736 = vpop.f32.mrb[0].mxu0
      %v737 = vpop.f32.mrb[0].mxu0
      %v738 = vadd.f32 0.0, %v737
      %v739 = vpop.f32.mrb[0].mxu0
      %740 = vmatprep.mubr.bf16.mxu0 0
      %741 = vmatmul.mubr.bf16.gmra.mrb[0].mxu0 %v564
      %v742 = vpop.f32.mrb[0].mxu0
      %v743 = vadd.f32 0.0, %v742
      %v744 = vpop.f32.mrb[0].mxu0
      %v745 = vpop.f32.mrb[0].mxu0
      %v746 = vadd.f32 0.0, %v745
      %v747 = vpop.f32.mrb[0].mxu0
      %748 = vmatprep.mubr.bf16.mxu0 0
      %749 = vmatmul.mubr.bf16.gmra.mrb[0].mxu0 %v567
      %v750 = vpop.f32.mrb[0].mxu0
      %v751 = vadd.f32 0.0, %v750
      %v752 = vpop.f32.mrb[0].mxu0
      %v753 = vpop.f32.mrb[0].mxu0
      %v754 = vadd.f32 0.0, %v753
      %v755 = vpop.f32.mrb[0].mxu0
      %756 = vmatprep.mubr.bf16.mxu0 0
      %757 = vmatmul.mubr.bf16.gmra.mrb[0].mxu0 %v570
      %v758 = vpop.f32.mrb[0].mxu0
      %v759 = vadd.f32 0.0, %v758
      %v760 = vpop.f32.mrb[0].mxu0
      %v761 = vpop.f32.mrb[0].mxu0
      %v762 = vadd.f32 0.0, %v761
      %v763 = vpop.f32.mrb[0].mxu0
      %764 = vmatprep.mubr.bf16.mxu0 0
      %765 = vmatmul.mubr.bf16.gmra.mrb[0].mxu0 %v573
      %v766 = vpop.f32.mrb[0].mxu0
      %v767 = vadd.f32 0.0, %v766
      %v768 = vpop.f32.mrb[0].mxu0
      %v769 = vpop.f32.mrb[0].mxu0
      %v770 = vadd.f32 0.0, %v769
      %v771 = vpop.f32.mrb[0].mxu0
      %772 = vmatprep.mubr.bf16.mxu0 0
      %773 = vmatmul.mubr.bf16.gmra.mrb[0].mxu0 %v576
      %v774 = vpop.f32.mrb[0].mxu0
      %v775 = vadd.f32 0.0, %v774
      %v776 = vpop.f32.mrb[0].mxu0
      %v777 = vpop.f32.mrb[0].mxu0
      %v778 = vadd.f32 0.0, %v777
      %v779 = vpop.f32.mrb[0].mxu0
      %780 = vmatprep.mubr.bf16.mxu0 0
      %781 = vmatmul.mubr.bf16.gmra.mrb[0].mxu0 %v579
      %v782 = vpop.f32.mrb[0].mxu0
      %v783 = vadd.f32 0.0, %v782
      %v784 = vpop.f32.mrb[0].mxu0
      %v785 = vpop.f32.mrb[0].mxu0
      %v786 = vadd.f32 0.0, %v785
      %v787 = vpop.f32.mrb[0].mxu0
      %788 = vmatprep.mubr.bf16.mxu0 0
      %789 = vmatmul.mubr.bf16.gmra.mrb[0].mxu0 %v582
      %v790 = vpop.f32.mrb[0].mxu0
      %v791 = vadd.f32 0.0, %v790
      %v792 = vpop.f32.mrb[0].mxu0
      %v793 = vpop.f32.mrb[0].mxu0
      %v794 = vadd.f32 0.0, %v793
      %v795 = vpop.f32.mrb[0].mxu0
      %796 = vmatprep.mubr.bf16.mxu0 0
      %797 = vmatmul.mubr.bf16.gmra.mrb[0].mxu0 %v585
      %v798 = vpop.f32.mrb[0].mxu0
      %v799 = vadd.f32 0.0, %v798
      %v800 = vpop.f32.mrb[0].mxu0
      %v801 = vpop.f32.mrb[0].mxu0
      %v802 = vadd.f32 0.0, %v801
      %v803 = vpop.f32.mrb[0].mxu0
      %804 = vmatprep.mubr.bf16.mxu0 0
      %805 = vmatmul.mubr.bf16.gmra.mrb[0].mxu0 %v588
      %v806 = vpop.f32.mrb[0].mxu0
      %v807 = vadd.f32 0.0, %v806
      %v808 = vpop.f32.mrb[0].mxu0
      %v809 = vpop.f32.mrb[0].mxu0
      %v810 = vadd.f32 0.0, %v809
      %v811 = vpop.f32.mrb[0].mxu0
      %812 = vmatprep.mubr.bf16.mxu0 0
      %813 = vmatmul.mubr.bf16.gmra.mrb[0].mxu0 %v591
      %v814 = vpop.f32.mrb[0].mxu0
      %v815 = vadd.f32 0.0, %v814
      %v816 = vpop.f32.mrb[0].mxu0
      %v817 = vpop.f32.mrb[0].mxu0
      %v818 = vadd.f32 0.0, %v817
      %v819 = vpop.f32.mrb[0].mxu0
      %820 = vmatprep.mubr.bf16.mxu0 0
      %821 = vmatmul.mubr.bf16.gmra.mrb[0].mxu0 %v594
      %v822 = vpop.f32.mrb[0].mxu0
      %v823 = vadd.f32 0.0, %v822
      %v824 = vpop.f32.mrb[0].mxu0
      %v825 = vpop.f32.mrb[0].mxu0
      %v826 = vadd.f32 0.0, %v825
      %v827 = vpop.f32.mrb[0].mxu0
      %828 = vmatprep.mubr.bf16.mxu0 0
      %829 = vmatmul.mubr.bf16.gmra.mrb[0].mxu0 %v597
      %v830 = vpop.f32.mrb[0].mxu0
      %v831 = vadd.f32 0.0, %v830
      %v832 = vpop.f32.mrb[0].mxu0
      %v833 = vpop.f32.mrb[0].mxu0
      %v834 = vadd.f32 0.0, %v833
      %v835 = vpop.f32.mrb[0].mxu0
      %836 = vmatprep.mubr.bf16.mxu0 0
      %837 = vmatmul.mubr.bf16.gmra.mrb[0].mxu0 %v600
      %v838 = vpop.f32.mrb[0].mxu0
      %v839 = vadd.f32 0.0, %v838
      %v840 = vpop.f32.mrb[0].mxu0
      %v841 = vpop.f32.mrb[0].mxu0
      %v842 = vadd.f32 0.0, %v841
      %v843 = vpop.f32.mrb[0].mxu0
      %844 = vmatprep.mubr.bf16.mxu0 0
      %845 = vmatmul.mubr.bf16.gmra.mrb[0].mxu0 %v603
      %v846 = vpop.f32.mrb[0].mxu0
      %v847 = vadd.f32 0.0, %v846
      %v848 = vpop.f32.mrb[0].mxu0
      %v849 = vpop.f32.mrb[0].mxu0
      %v850 = vadd.f32 0.0, %v849
      %v851 = vpop.f32.mrb[0].mxu0
      %852 = vmatprep.mubr.bf16.mxu0 0
      %853 = vmatmul.mubr.bf16.gmra.mrb[0].mxu0 %v606
      %v854 = vpop.f32.mrb[0].mxu0
      %v855 = vadd.f32 0.0, %v854
      %v856 = vpop.f32.mrb[0].mxu0
      %v857 = vpop.f32.mrb[0].mxu0
      %v858 = vadd.f32 0.0, %v857
      %v859 = vpop.f32.mrb[0].mxu0
      %860 = vmatprep.mubr.bf16.mxu0 0
      %861 = vmatmul.mubr.bf16.gmra.mrb[0].mxu0 %v609
      %v862 = vpop.f32.mrb[0].mxu0
      %v863 = vadd.f32 0.0, %v862
      %v864 = vpop.f32.mrb[0].mxu0
      %v865 = vpop.f32.mrb[0].mxu0
      %v866 = vadd.f32 0.0, %v865
      %v867 = vpop.f32.mrb[0].mxu0
      %868 = vmatprep.mubr.bf16.mxu0 0
      %869 = vmatmul.mubr.bf16.gmra.mrb[0].mxu0 %v612
      %v870 = vpop.f32.mrb[0].mxu0
      %v871 = vadd.f32 0.0, %v870
      %v872 = vpop.f32.mrb[0].mxu0
      %v873 = vpop.f32.mrb[0].mxu0
      %v874 = vadd.f32 0.0, %v873
      %v875 = vpop.f32.mrb[0].mxu0
      %876 = vmatprep.mubr.bf16.mxu0 0
      %877 = vmatmul.mubr.bf16.gmra.mrb[0].mxu0 %v615
      %v878 = vpop.f32.mrb[0].mxu0
      %v879 = vadd.f32 0.0, %v878
      %v880 = vpop.f32.mrb[0].mxu0
      %v881 = vpop.f32.mrb[0].mxu0
      %v882 = vadd.f32 0.0, %v881
      %v883 = vpop.f32.mrb[0].mxu0
      %884 = vmatprep.mubr.bf16.mxu0 0
      %885 = vmatmul.mubr.bf16.gmra.mrb[0].mxu0 %v618
      %v886 = vpop.f32.mrb[0].mxu0
      %v887 = vadd.f32 0.0, %v886
      %v888 = vpop.f32.mrb[0].mxu0
      %v889 = vpop.f32.mrb[0].mxu0
      %v890 = vadd.f32 0.0, %v889
      %v891 = vpop.f32.mrb[0].mxu0
      %892 = vmatprep.mubr.bf16.mxu0 0
      %893 = vmatmul.mubr.bf16.gmra.mrb[0].mxu0 %v621
      %v894 = vpop.f32.mrb[0].mxu0
      %v895 = vadd.f32 0.0, %v894
      %v896 = vpop.f32.mrb[0].mxu0
      %v897 = vpop.f32.mrb[0].mxu0
      %v898 = vadd.f32 0.0, %v897
      %v899 = vpop.f32.mrb[0].mxu0
      %900 = vmatprep.mubr.bf16.mxu0 0
      %901 = vmatmul.mubr.bf16.gmra.mrb[0].mxu0 %v624
      %v902 = vpop.f32.mrb[0].mxu0
      %v903 = vadd.f32 0.0, %v902
      %v904 = vpop.f32.mrb[0].mxu0
      %v905 = vpop.f32.mrb[0].mxu0
      %v906 = vadd.f32 0.0, %v905
      %v907 = vpop.f32.mrb[0].mxu0
      %908 = vmatprep.mubr.bf16.mxu0 0
      %909 = vmatmul.mubr.bf16.gmra.mrb[0].mxu0 %v627
      %v910 = vpop.f32.mrb[0].mxu0
      %v911 = vadd.f32 0.0, %v910
      %v912 = vpop.f32.mrb[0].mxu0
      %v913 = vpop.f32.mrb[0].mxu0
      %v914 = vadd.f32 0.0, %v913
      %v915 = vpop.f32.mrb[0].mxu0
      %916 = vmatprep.mubr.bf16.mxu0 0
      %917 = vmatmul.mubr.bf16.gmra.mrb[0].mxu0 %v630
      %v918 = vpop.f32.mrb[0].mxu0
      %v919 = vadd.f32 0.0, %v918
      %v920 = vpop.f32.mrb[0].mxu0
      %v921 = vpop.f32.mrb[0].mxu0
      %v922 = vadd.f32 0.0, %v921
      %v923 = vpop.f32.mrb[0].mxu0
      %924 = vdwg.mxu0
      %v989 = vunpack.c.l.b16 %v231
      %v990 = vunpack.c.l.b16 %v232
      %v991 = vunpack.c.l.b16 %v233
      %v992 = vunpack.c.l.b16 %v234
      %v993 = vunpack.c.l.b16 %v235
      %v994 = vunpack.c.l.b16 %v236
      %v995 = vunpack.c.l.b16 %v237
      %v996 = vunpack.c.l.b16 %v238
      %v997 = vunpack.c.l.b16 %v239
      %v998 = vunpack.c.l.b16 %v240
      %v999 = vunpack.c.l.b16 %v241
      %v1000 = vunpack.c.l.b16 %v242
      %v1001 = vunpack.c.l.b16 %v243
      %v1002 = vunpack.c.l.b16 %v244
      %v1003 = vunpack.c.l.b16 %v245
      %v1004 = vunpack.c.l.b16 %v246
      %v1005 = vunpack.c.l.b16 %v247
      %v1006 = vunpack.c.l.b16 %v248
      %v1007 = vunpack.c.l.b16 %v249
      %v1008 = vunpack.c.l.b16 %v250
      %v1009 = vunpack.c.l.b16 %v251
      %v1010 = vunpack.c.l.b16 %v252
      %v1011 = vunpack.c.l.b16 %v253
      %v1012 = vunpack.c.l.b16 %v254
      %v1013 = vunpack.c.l.b16 %v255
      %v1014 = vunpack.c.l.b16 %v256
      %v1015 = vunpack.c.l.b16 %v257
      %v1016 = vunpack.c.l.b16 %v258
      %v1017 = vunpack.c.l.b16 %v259
      %v1018 = vunpack.c.l.b16 %v260
      %v1019 = vunpack.c.l.b16 %v261
      %v1020 = vunpack.c.l.b16 %v262
      %v1021 = vunpack.c.l.b16 %v263
      %v1022 = vunpack.c.l.b16 %v264
      %v1023 = vunpack.c.l.b16 %v265
      %v1024 = vunpack.c.l.b16 %v266
      %v1025 = vunpack.c.l.b16 %v267
      %v1026 = vunpack.c.l.b16 %v268
      %v1027 = vunpack.c.l.b16 %v269
      %v1028 = vunpack.c.l.b16 %v270
      %v1029 = vunpack.c.l.b16 %v271
      %v1030 = vunpack.c.l.b16 %v272
      %v1031 = vunpack.c.l.b16 %v273
      %v1032 = vunpack.c.l.b16 %v274
      %v1033 = vunpack.c.l.b16 %v275
      %v1034 = vunpack.c.l.b16 %v276
      %v1035 = vunpack.c.l.b16 %v277
      %v1036 = vunpack.c.l.b16 %v278
      %v1037 = vunpack.c.l.b16 %v279
      %v1038 = vunpack.c.l.b16 %v280
      %v1039 = vunpack.c.l.b16 %v281
      %v1040 = vunpack.c.l.b16 %v282
      %v1041 = vunpack.c.l.b16 %v283
      %v1042 = vunpack.c.l.b16 %v284
      %v1043 = vunpack.c.l.b16 %v285
      %v1044 = vunpack.c.l.b16 %v286
      %v1045 = vunpack.c.l.b16 %v287
      %v1046 = vunpack.c.l.b16 %v288
      %v1047 = vunpack.c.l.b16 %v289
      %v1048 = vunpack.c.l.b16 %v290
      %v1049 = vunpack.c.l.b16 %v291
      %v1050 = vunpack.c.l.b16 %v292
      %v1051 = vunpack.c.l.b16 %v293
      %v1052 = vunpack.c.l.b16 %v294
      %v1053 = vpack.c.b16 %v990, %v989
      %v1054 = vpack.c.b16 %v992, %v991
      %v1055 = vpack.c.b16 %v994, %v993
      %v1056 = vpack.c.b16 %v996, %v995
      %v1057 = vpack.c.b16 %v998, %v997
      %v1058 = vpack.c.b16 %v1000, %v999
      %v1059 = vpack.c.b16 %v1002, %v1001
      %v1060 = vpack.c.b16 %v1004, %v1003
      %v1061 = vpack.c.b16 %v1006, %v1005
      %v1062 = vpack.c.b16 %v1008, %v1007
      %v1063 = vpack.c.b16 %v1010, %v1009
      %v1064 = vpack.c.b16 %v1012, %v1011
      %v1065 = vpack.c.b16 %v1014, %v1013
      %v1066 = vpack.c.b16 %v1016, %v1015
      %v1067 = vpack.c.b16 %v1018, %v1017
      %v1068 = vpack.c.b16 %v1020, %v1019
      %v1069 = vpack.c.b16 %v1022, %v1021
      %v1070 = vpack.c.b16 %v1024, %v1023
      %v1071 = vpack.c.b16 %v1026, %v1025
      %v1072 = vpack.c.b16 %v1028, %v1027
      %v1073 = vpack.c.b16 %v1030, %v1029
      %v1074 = vpack.c.b16 %v1032, %v1031
      %v1075 = vpack.c.b16 %v1034, %v1033
      %v1076 = vpack.c.b16 %v1036, %v1035
      %v1077 = vpack.c.b16 %v1038, %v1037
      %v1078 = vpack.c.b16 %v1040, %v1039
      %v1079 = vpack.c.b16 %v1042, %v1041
      %v1080 = vpack.c.b16 %v1044, %v1043
      %v1081 = vpack.c.b16 %v1046, %v1045
      %v1082 = vpack.c.b16 %v1048, %v1047
      %v1083 = vpack.c.b16 %v1050, %v1049
      %v1084 = vpack.c.b16 %v1052, %v1051
      %v1090 = vunpack.c.l.b16 %v216
      %v1091 = vunpack.c.l.b16 %v217
      %v1092 = vunpack.c.l.b16 %v218
      %v1093 = vunpack.c.l.b16 %v219
      %v1094 = vunpack.c.l.b16 %v220
      %v1095 = vpack.c.b16 %v1091, %v1090
      %v1096 = vpack.c.b16 %v1093, %v1092
      %v1097 = vpack.c.b16 %v1094, %v1094
      %v1101 = vsel %vm535, %v1053, 0
      %v1104 = vsel %vm535, %v1054, 0
      %v1107 = vsel %vm535, %v1055, 0
      %v1110 = vsel %vm535, %v1056, 0
      %v1113 = vsel %vm535, %v1057, 0
      %v1116 = vsel %vm535, %v1058, 0
      %v1119 = vsel %vm535, %v1059, 0
      %v1122 = vsel %vm535, %v1060, 0
      %v1125 = vsel %vm535, %v1061, 0
      %v1128 = vsel %vm535, %v1062, 0
      %v1131 = vsel %vm535, %v1063, 0
      %v1134 = vsel %vm535, %v1064, 0
      %v1137 = vsel %vm535, %v1065, 0
      %v1140 = vsel %vm535, %v1066, 0
      %v1143 = vsel %vm535, %v1067, 0
      %v1146 = vsel %vm535, %v1068, 0
      %v1149 = vsel %vm535, %v1069, 0
      %v1152 = vsel %vm535, %v1070, 0
      %v1155 = vsel %vm535, %v1071, 0
      %v1158 = vsel %vm535, %v1072, 0
      %v1161 = vsel %vm535, %v1073, 0
      %v1164 = vsel %vm535, %v1074, 0
      %v1167 = vsel %vm535, %v1075, 0
      %v1170 = vsel %vm535, %v1076, 0
      %v1173 = vsel %vm535, %v1077, 0
      %v1176 = vsel %vm535, %v1078, 0
      %v1179 = vsel %vm535, %v1079, 0
      %v1182 = vsel %vm535, %v1080, 0
      %v1185 = vsel %vm535, %v1081, 0
      %v1188 = vsel %vm535, %v1082, 0
      %v1191 = vsel %vm535, %v1083, 0
      %v1194 = vsel %vm535, %v1084, 0
      %v1197 = vsel %vm632, %v1097, 0
      %1199 = vmatprep.subr.bf16.mxu0 0
      %1200 = vmatpush1.bf16.msra.mxu0 %v1095
      %1201 = vmatprep.subr.bf16.mxu0 0
      %1202 = vmatpush1.bf16.msra.mxu0 %v1096
      %1203 = vmatprep.subr.bf16.mxu0 0
      %1204 = vmatpush1.bf16.msra.mxu0 %v1197
      %1205 = vmatprep.subr.bf16.mxu0 0
      %1206 = vmatpush1.bf16.msra.mxu0 0
      %1207 = vmatprep.subr.bf16.mxu0 0
      %1208 = vmatpush1.bf16.msra.mxu0 0
      %1209 = vmatprep.subr.bf16.mxu0 0
      %1210 = vmatpush1.bf16.msra.mxu0 0
      %1211 = vmatprep.subr.bf16.mxu0 0
      %1212 = vmatpush1.bf16.msra.mxu0 0
      %1213 = vmatprep.subr.bf16.mxu0 0
      %1214 = vmatpush1.bf16.msra.mxu0 0
      %1215 = vmatprep.subr.bf16.mxu0 0
      %1216 = vmatpush1.bf16.msra.mxu0 0
      %1217 = vmatprep.subr.bf16.mxu0 0
      %1218 = vmatpush1.bf16.msra.mxu0 0
      %1219 = vmatprep.subr.bf16.mxu0 0
      %1220 = vmatpush1.bf16.msra.mxu0 0
      %1221 = vmatprep.subr.bf16.mxu0 0
      %1222 = vmatpush1.bf16.msra.mxu0 0
      %1223 = vmatprep.subr.bf16.mxu0 0
      %1224 = vmatpush1.bf16.msra.mxu0 0
      %1225 = vmatprep.subr.bf16.mxu0 0
      %1226 = vmatpush1.bf16.msra.mxu0 0
      %1227 = vmatprep.subr.bf16.mxu0 0
      %1228 = vmatpush1.bf16.msra.mxu0 0
      %1229 = vmatprep.subr.bf16.mxu0 0
      %1230 = vmatpush1.bf16.msra.mxu0 0
      %1231 = vmatprep.mubr.bf16.mxu0 0
      %1232 = vmatmul.mubr.bf16.gmra.mrb[0].mxu0 %v1101
      %v1233 = vpop.f32.mrb[0].mxu0
      %v1234 = vadd.f32 %v671, %v1233
      %v1235 = vpop.f32.mrb[0].mxu0
      %v1236 = vpop.f32.mrb[0].mxu0
      %v1237 = vadd.f32 %v674, %v1236
      %v1238 = vpop.f32.mrb[0].mxu0
      %1239 = vmatprep.mubr.bf16.mxu0 0
      %1240 = vmatmul.mubr.bf16.gmra.mrb[0].mxu0 %v1104
      %v1241 = vpop.f32.mrb[0].mxu0
      %v1242 = vadd.f32 %v679, %v1241
      %v1243 = vpop.f32.mrb[0].mxu0
      %v1244 = vpop.f32.mrb[0].mxu0
      %v1245 = vadd.f32 %v682, %v1244
      %v1246 = vpop.f32.mrb[0].mxu0
      %1247 = vmatprep.mubr.bf16.mxu0 0
      %1248 = vmatmul.mubr.bf16.gmra.mrb[0].mxu0 %v1107
      %v1249 = vpop.f32.mrb[0].mxu0
      %v1250 = vadd.f32 %v687, %v1249
      %v1251 = vpop.f32.mrb[0].mxu0
      %v1252 = vpop.f32.mrb[0].mxu0
      %v1253 = vadd.f32 %v690, %v1252
      %v1254 = vpop.f32.mrb[0].mxu0
      %1255 = vmatprep.mubr.bf16.mxu0 0
      %1256 = vmatmul.mubr.bf16.gmra.mrb[0].mxu0 %v1110
      %v1257 = vpop.f32.mrb[0].mxu0
      %v1258 = vadd.f32 %v695, %v1257
      %v1259 = vpop.f32.mrb[0].mxu0
      %v1260 = vpop.f32.mrb[0].mxu0
      %v1261 = vadd.f32 %v698, %v1260
      %v1262 = vpop.f32.mrb[0].mxu0
      %1263 = vmatprep.mubr.bf16.mxu0 0
      %1264 = vmatmul.mubr.bf16.gmra.mrb[0].mxu0 %v1113
      %v1265 = vpop.f32.mrb[0].mxu0
      %v1266 = vadd.f32 %v703, %v1265
      %v1267 = vpop.f32.mrb[0].mxu0
      %v1268 = vpop.f32.mrb[0].mxu0
      %v1269 = vadd.f32 %v706, %v1268
      %v1270 = vpop.f32.mrb[0].mxu0
      %1271 = vmatprep.mubr.bf16.mxu0 0
      %1272 = vmatmul.mubr.bf16.gmra.mrb[0].mxu0 %v1116
      %v1273 = vpop.f32.mrb[0].mxu0
      %v1274 = vadd.f32 %v711, %v1273
      %v1275 = vpop.f32.mrb[0].mxu0
      %v1276 = vpop.f32.mrb[0].mxu0
      %v1277 = vadd.f32 %v714, %v1276
      %v1278 = vpop.f32.mrb[0].mxu0
      %1279 = vmatprep.mubr.bf16.mxu0 0
      %1280 = vmatmul.mubr.bf16.gmra.mrb[0].mxu0 %v1119
      %v1281 = vpop.f32.mrb[0].mxu0
      %v1282 = vadd.f32 %v719, %v1281
      %v1283 = vpop.f32.mrb[0].mxu0
      %v1284 = vpop.f32.mrb[0].mxu0
      %v1285 = vadd.f32 %v722, %v1284
      %v1286 = vpop.f32.mrb[0].mxu0
      %1287 = vmatprep.mubr.bf16.mxu0 0
      %1288 = vmatmul.mubr.bf16.gmra.mrb[0].mxu0 %v1122
      %v1289 = vpop.f32.mrb[0].mxu0
      %v1290 = vadd.f32 %v727, %v1289
      %v1291 = vpop.f32.mrb[0].mxu0
      %v1292 = vpop.f32.mrb[0].mxu0
      %v1293 = vadd.f32 %v730, %v1292
      %v1294 = vpop.f32.mrb[0].mxu0
      %1295 = vmatprep.mubr.bf16.mxu0 0
      %1296 = vmatmul.mubr.bf16.gmra.mrb[0].mxu0 %v1125
      %v1297 = vpop.f32.mrb[0].mxu0
      %v1298 = vadd.f32 %v735, %v1297
      %v1299 = vpop.f32.mrb[0].mxu0
      %v1300 = vpop.f32.mrb[0].mxu0
      %v1301 = vadd.f32 %v738, %v1300
      %v1302 = vpop.f32.mrb[0].mxu0
      %1303 = vmatprep.mubr.bf16.mxu0 0
      %1304 = vmatmul.mubr.bf16.gmra.mrb[0].mxu0 %v1128
      %v1305 = vpop.f32.mrb[0].mxu0
      %v1306 = vadd.f32 %v743, %v1305
      %v1307 = vpop.f32.mrb[0].mxu0
      %v1308 = vpop.f32.mrb[0].mxu0
      %v1309 = vadd.f32 %v746, %v1308
      %v1310 = vpop.f32.mrb[0].mxu0
      %1311 = vmatprep.mubr.bf16.mxu0 0
      %1312 = vmatmul.mubr.bf16.gmra.mrb[0].mxu0 %v1131
      %v1313 = vpop.f32.mrb[0].mxu0
      %v1314 = vadd.f32 %v751, %v1313
      %v1315 = vpop.f32.mrb[0].mxu0
      %v1316 = vpop.f32.mrb[0].mxu0
      %v1317 = vadd.f32 %v754, %v1316
      %v1318 = vpop.f32.mrb[0].mxu0
      %1319 = vmatprep.mubr.bf16.mxu0 0
      %1320 = vmatmul.mubr.bf16.gmra.mrb[0].mxu0 %v1134
      %v1321 = vpop.f32.mrb[0].mxu0
      %v1322 = vadd.f32 %v759, %v1321
      %v1323 = vpop.f32.mrb[0].mxu0
      %v1324 = vpop.f32.mrb[0].mxu0
      %v1325 = vadd.f32 %v762, %v1324
      %v1326 = vpop.f32.mrb[0].mxu0
      %1327 = vmatprep.mubr.bf16.mxu0 0
      %1328 = vmatmul.mubr.bf16.gmra.mrb[0].mxu0 %v1137
      %v1329 = vpop.f32.mrb[0].mxu0
      %v1330 = vadd.f32 %v767, %v1329
      %v1331 = vpop.f32.mrb[0].mxu0
      %v1332 = vpop.f32.mrb[0].mxu0
      %v1333 = vadd.f32 %v770, %v1332
      %v1334 = vpop.f32.mrb[0].mxu0
      %1335 = vmatprep.mubr.bf16.mxu0 0
      %1336 = vmatmul.mubr.bf16.gmra.mrb[0].mxu0 %v1140
      %v1337 = vpop.f32.mrb[0].mxu0
      %v1338 = vadd.f32 %v775, %v1337
      %v1339 = vpop.f32.mrb[0].mxu0
      %v1340 = vpop.f32.mrb[0].mxu0
      %v1341 = vadd.f32 %v778, %v1340
      %v1342 = vpop.f32.mrb[0].mxu0
      %1343 = vmatprep.mubr.bf16.mxu0 0
      %1344 = vmatmul.mubr.bf16.gmra.mrb[0].mxu0 %v1143
      %v1345 = vpop.f32.mrb[0].mxu0
      %v1346 = vadd.f32 %v783, %v1345
      %v1347 = vpop.f32.mrb[0].mxu0
      %v1348 = vpop.f32.mrb[0].mxu0
      %v1349 = vadd.f32 %v786, %v1348
      %v1350 = vpop.f32.mrb[0].mxu0
      %1351 = vmatprep.mubr.bf16.mxu0 0
      %1352 = vmatmul.mubr.bf16.gmra.mrb[0].mxu0 %v1146
      %v1353 = vpop.f32.mrb[0].mxu0
      %v1354 = vadd.f32 %v791, %v1353
      %v1355 = vpop.f32.mrb[0].mxu0
      %v1356 = vpop.f32.mrb[0].mxu0
      %v1357 = vadd.f32 %v794, %v1356
      %v1358 = vpop.f32.mrb[0].mxu0
      %1359 = vmatprep.mubr.bf16.mxu0 0
      %1360 = vmatmul.mubr.bf16.gmra.mrb[0].mxu0 %v1149
      %v1361 = vpop.f32.mrb[0].mxu0
      %v1362 = vadd.f32 %v799, %v1361
      %v1363 = vpop.f32.mrb[0].mxu0
      %v1364 = vpop.f32.mrb[0].mxu0
      %v1365 = vadd.f32 %v802, %v1364
      %v1366 = vpop.f32.mrb[0].mxu0
      %1367 = vmatprep.mubr.bf16.mxu0 0
      %1368 = vmatmul.mubr.bf16.gmra.mrb[0].mxu0 %v1152
      %v1369 = vpop.f32.mrb[0].mxu0
      %v1370 = vadd.f32 %v807, %v1369
      %v1371 = vpop.f32.mrb[0].mxu0
      %v1372 = vpop.f32.mrb[0].mxu0
      %v1373 = vadd.f32 %v810, %v1372
      %v1374 = vpop.f32.mrb[0].mxu0
      %1375 = vmatprep.mubr.bf16.mxu0 0
      %1376 = vmatmul.mubr.bf16.gmra.mrb[0].mxu0 %v1155
      %v1377 = vpop.f32.mrb[0].mxu0
      %v1378 = vadd.f32 %v815, %v1377
      %v1379 = vpop.f32.mrb[0].mxu0
      %v1380 = vpop.f32.mrb[0].mxu0
      %v1381 = vadd.f32 %v818, %v1380
      %v1382 = vpop.f32.mrb[0].mxu0
      %1383 = vmatprep.mubr.bf16.mxu0 0
      %1384 = vmatmul.mubr.bf16.gmra.mrb[0].mxu0 %v1158
      %v1385 = vpop.f32.mrb[0].mxu0
      %v1386 = vadd.f32 %v823, %v1385
      %v1387 = vpop.f32.mrb[0].mxu0
      %v1388 = vpop.f32.mrb[0].mxu0
      %v1389 = vadd.f32 %v826, %v1388
      %v1390 = vpop.f32.mrb[0].mxu0
      %1391 = vmatprep.mubr.bf16.mxu0 0
      %1392 = vmatmul.mubr.bf16.gmra.mrb[0].mxu0 %v1161
      %v1393 = vpop.f32.mrb[0].mxu0
      %v1394 = vadd.f32 %v831, %v1393
      %v1395 = vpop.f32.mrb[0].mxu0
      %v1396 = vpop.f32.mrb[0].mxu0
      %v1397 = vadd.f32 %v834, %v1396
      %v1398 = vpop.f32.mrb[0].mxu0
      %1399 = vmatprep.mubr.bf16.mxu0 0
      %1400 = vmatmul.mubr.bf16.gmra.mrb[0].mxu0 %v1164
      %v1401 = vpop.f32.mrb[0].mxu0
      %v1402 = vadd.f32 %v839, %v1401
      %v1403 = vpop.f32.mrb[0].mxu0
      %v1404 = vpop.f32.mrb[0].mxu0
      %v1405 = vadd.f32 %v842, %v1404
      %v1406 = vpop.f32.mrb[0].mxu0
      %1407 = vmatprep.mubr.bf16.mxu0 0
      %1408 = vmatmul.mubr.bf16.gmra.mrb[0].mxu0 %v1167
      %v1409 = vpop.f32.mrb[0].mxu0
      %v1410 = vadd.f32 %v847, %v1409
      %v1411 = vpop.f32.mrb[0].mxu0
      %v1412 = vpop.f32.mrb[0].mxu0
      %v1413 = vadd.f32 %v850, %v1412
      %v1414 = vpop.f32.mrb[0].mxu0
      %1415 = vmatprep.mubr.bf16.mxu0 0
      %1416 = vmatmul.mubr.bf16.gmra.mrb[0].mxu0 %v1170
      %v1417 = vpop.f32.mrb[0].mxu0
      %v1418 = vadd.f32 %v855, %v1417
      %v1419 = vpop.f32.mrb[0].mxu0
      %v1420 = vpop.f32.mrb[0].mxu0
      %v1421 = vadd.f32 %v858, %v1420
      %v1422 = vpop.f32.mrb[0].mxu0
      %1423 = vmatprep.mubr.bf16.mxu0 0
      %1424 = vmatmul.mubr.bf16.gmra.mrb[0].mxu0 %v1173
      %v1425 = vpop.f32.mrb[0].mxu0
      %v1426 = vadd.f32 %v863, %v1425
      %v1427 = vpop.f32.mrb[0].mxu0
      %v1428 = vpop.f32.mrb[0].mxu0
      %v1429 = vadd.f32 %v866, %v1428
      %v1430 = vpop.f32.mrb[0].mxu0
      %1431 = vmatprep.mubr.bf16.mxu0 0
      %1432 = vmatmul.mubr.bf16.gmra.mrb[0].mxu0 %v1176
      %v1433 = vpop.f32.mrb[0].mxu0
      %v1434 = vadd.f32 %v871, %v1433
      %v1435 = vpop.f32.mrb[0].mxu0
      %v1436 = vpop.f32.mrb[0].mxu0
      %v1437 = vadd.f32 %v874, %v1436
      %v1438 = vpop.f32.mrb[0].mxu0
      %1439 = vmatprep.mubr.bf16.mxu0 0
      %1440 = vmatmul.mubr.bf16.gmra.mrb[0].mxu0 %v1179
      %v1441 = vpop.f32.mrb[0].mxu0
      %v1442 = vadd.f32 %v879, %v1441
      %v1443 = vpop.f32.mrb[0].mxu0
      %v1444 = vpop.f32.mrb[0].mxu0
      %v1445 = vadd.f32 %v882, %v1444
      %v1446 = vpop.f32.mrb[0].mxu0
      %1447 = vmatprep.mubr.bf16.mxu0 0
      %1448 = vmatmul.mubr.bf16.gmra.mrb[0].mxu0 %v1182
      %v1449 = vpop.f32.mrb[0].mxu0
      %v1450 = vadd.f32 %v887, %v1449
      %v1451 = vpop.f32.mrb[0].mxu0
      %v1452 = vpop.f32.mrb[0].mxu0
      %v1453 = vadd.f32 %v890, %v1452
      %v1454 = vpop.f32.mrb[0].mxu0
      %1455 = vmatprep.mubr.bf16.mxu0 0
      %1456 = vmatmul.mubr.bf16.gmra.mrb[0].mxu0 %v1185
      %v1457 = vpop.f32.mrb[0].mxu0
      %v1458 = vadd.f32 %v895, %v1457
      %v1459 = vpop.f32.mrb[0].mxu0
      %v1460 = vpop.f32.mrb[0].mxu0
      %v1461 = vadd.f32 %v898, %v1460
      %v1462 = vpop.f32.mrb[0].mxu0
      %1463 = vmatprep.mubr.bf16.mxu0 0
      %1464 = vmatmul.mubr.bf16.gmra.mrb[0].mxu0 %v1188
      %v1465 = vpop.f32.mrb[0].mxu0
      %v1466 = vadd.f32 %v903, %v1465
      %v1467 = vpop.f32.mrb[0].mxu0
      %v1468 = vpop.f32.mrb[0].mxu0
      %v1469 = vadd.f32 %v906, %v1468
      %v1470 = vpop.f32.mrb[0].mxu0
      %1471 = vmatprep.mubr.bf16.mxu0 0
      %1472 = vmatmul.mubr.bf16.gmra.mrb[0].mxu0 %v1191
      %v1473 = vpop.f32.mrb[0].mxu0
      %v1474 = vadd.f32 %v911, %v1473
      %v1475 = vpop.f32.mrb[0].mxu0
      %v1476 = vpop.f32.mrb[0].mxu0
      %v1477 = vadd.f32 %v914, %v1476
      %v1478 = vpop.f32.mrb[0].mxu0
      %1479 = vmatprep.mubr.bf16.mxu0 0
      %1480 = vmatmul.mubr.bf16.gmra.mrb[0].mxu0 %v1194
      %v1481 = vpop.f32.mrb[0].mxu0
      %v1482 = vadd.f32 %v919, %v1481
      %v1483 = vpop.f32.mrb[0].mxu0
      %v1484 = vpop.f32.mrb[0].mxu0
      %v1485 = vadd.f32 %v922, %v1484
      %v1486 = vpop.f32.mrb[0].mxu0
      %1487 = vdwg.mxu0
      %s1488 = scalar_lea.vmem %s203, 64
      %v1489 = vld [vmem:[%s1488] sm:$0xf]
      %v1490 = vld [vmem:[%s1488 + $0x4] sm:$0xf]
      %v1491 = vld [vmem:[%s1488 + $0x8] sm:$0xf]
      %v1492 = vld [vmem:[%s1488 + $0xc] sm:$0xf]
      %v1493 = vld [vmem:[%s1488 + $0x10] sm:$0xf]
      %v1494 = vld [vmem:[%s1488 + $0x14] sm:$0xf]
      %v1495 = vld [vmem:[%s1488 + $0x18] sm:$0xf]
      %v1496 = vld [vmem:[%s1488 + $0x1c] sm:$0xf]
      %v1497 = vld [vmem:[%s1488 + $0x20] sm:$0xf]
      %v1498 = vld [vmem:[%s1488 + $0x24] sm:$0xf]
      %v1499 = vld [vmem:[%s1488 + $0x28] sm:$0xf]
      %v1500 = vld [vmem:[%s1488 + $0x2c] sm:$0xf]
      %v1501 = vld [vmem:[%s1488 + $0x30] sm:$0xf]
      %v1502 = vld [vmem:[%s1488 + $0x34] sm:$0xf]
      %v1503 = vld [vmem:[%s1488 + $0x38] sm:$0xf]
      %v1504 = vld [vmem:[%s1488 + $0x3c] sm:$0xf]
      %v1505 = vld [vmem:[%s1488 + $0x40] sm:$0xf]
      %v1506 = vld [vmem:[%s1488 + $0x44] sm:$0xf]
      %v1507 = vld [vmem:[%s1488 + $0x48] sm:$0xf]
      %v1508 = vld [vmem:[%s1488 + $0x4c] sm:$0xf]
      %v1509 = vld [vmem:[%s1488 + $0x50] sm:$0xf]
      %v1510 = vld [vmem:[%s1488 + $0x54] sm:$0xf]
      %v1511 = vld [vmem:[%s1488 + $0x58] sm:$0xf]
      %v1512 = vld [vmem:[%s1488 + $0x5c] sm:$0xf]
      %v1513 = vld [vmem:[%s1488 + $0x60] sm:$0xf]
      %v1514 = vld [vmem:[%s1488 + $0x64] sm:$0xf]
      %v1515 = vld [vmem:[%s1488 + $0x68] sm:$0xf]
      %v1516 = vld [vmem:[%s1488 + $0x6c] sm:$0xf]
      %v1517 = vld [vmem:[%s1488 + $0x70] sm:$0xf]
      %v1518 = vld [vmem:[%s1488 + $0x74] sm:$0xf]
      %v1519 = vld [vmem:[%s1488 + $0x78] sm:$0xf]
      %v1520 = vld [vmem:[%s1488 + $0x7c] sm:$0xf]
      %v1521 = vld [vmem:[%s1488 + $0x80] sm:$0xf]
      %v1522 = vld [vmem:[%s1488 + $0x84] sm:$0xf]
      %v1523 = vld [vmem:[%s1488 + $0x88] sm:$0xf]
      %v1524 = vld [vmem:[%s1488 + $0x8c] sm:$0xf]
      %v1525 = vld [vmem:[%s1488 + $0x90] sm:$0xf]
      %v1526 = vld [vmem:[%s1488 + $0x94] sm:$0xf]
      %v1527 = vld [vmem:[%s1488 + $0x98] sm:$0xf]
      %v1528 = vld [vmem:[%s1488 + $0x9c] sm:$0xf]
      %v1529 = vld [vmem:[%s1488 + $0xa0] sm:$0xf]
      %v1530 = vld [vmem:[%s1488 + $0xa4] sm:$0xf]
      %v1531 = vld [vmem:[%s1488 + $0xa8] sm:$0xf]
      %v1532 = vld [vmem:[%s1488 + $0xac] sm:$0xf]
      %v1533 = vld [vmem:[%s1488 + $0xb0] sm:$0xf]
      %v1534 = vld [vmem:[%s1488 + $0xb4] sm:$0xf]
      %v1535 = vld [vmem:[%s1488 + $0xb8] sm:$0xf]
      %v1536 = vld [vmem:[%s1488 + $0xbc] sm:$0xf]
      %v1537 = vld [vmem:[%s1488 + $0xc0] sm:$0xf]
      %v1538 = vld [vmem:[%s1488 + $0xc4] sm:$0xf]
      %v1539 = vld [vmem:[%s1488 + $0xc8] sm:$0xf]
      %v1540 = vld [vmem:[%s1488 + $0xcc] sm:$0xf]
      %v1541 = vld [vmem:[%s1488 + $0xd0] sm:$0xf]
      %v1542 = vld [vmem:[%s1488 + $0xd4] sm:$0xf]
      %v1543 = vld [vmem:[%s1488 + $0xd8] sm:$0xf]
      %v1544 = vld [vmem:[%s1488 + $0xdc] sm:$0xf]
      %v1545 = vld [vmem:[%s1488 + $0xe0] sm:$0xf]
      %v1546 = vld [vmem:[%s1488 + $0xe4] sm:$0xf]
      %v1547 = vld [vmem:[%s1488 + $0xe8] sm:$0xf]
      %v1548 = vld [vmem:[%s1488 + $0xec] sm:$0xf]
      %v1549 = vld [vmem:[%s1488 + $0xf0] sm:$0xf]
      %v1550 = vld [vmem:[%s1488 + $0xf4] sm:$0xf]
      %v1551 = vld [vmem:[%s1488 + $0xf8] sm:$0xf]
      %v1552 = vld [vmem:[%s1488 + $0xfc] sm:$0xf]
      %v1617 = vunpack.c.l.b16 %v1489
      %v1618 = vunpack.c.l.b16 %v1490
      %v1619 = vunpack.c.l.b16 %v1491
      %v1620 = vunpack.c.l.b16 %v1492
      %v1621 = vunpack.c.l.b16 %v1493
      %v1622 = vunpack.c.l.b16 %v1494
      %v1623 = vunpack.c.l.b16 %v1495
      %v1624 = vunpack.c.l.b16 %v1496
      %v1625 = vunpack.c.l.b16 %v1497
      %v1626 = vunpack.c.l.b16 %v1498
      %v1627 = vunpack.c.l.b16 %v1499
      %v1628 = vunpack.c.l.b16 %v1500
      %v1629 = vunpack.c.l.b16 %v1501
      %v1630 = vunpack.c.l.b16 %v1502
      %v1631 = vunpack.c.l.b16 %v1503
      %v1632 = vunpack.c.l.b16 %v1504
      %v1633 = vunpack.c.l.b16 %v1505
      %v1634 = vunpack.c.l.b16 %v1506
      %v1635 = vunpack.c.l.b16 %v1507
      %v1636 = vunpack.c.l.b16 %v1508
      %v1637 = vunpack.c.l.b16 %v1509
      %v1638 = vunpack.c.l.b16 %v1510
      %v1639 = vunpack.c.l.b16 %v1511
      %v1640 = vunpack.c.l.b16 %v1512
      %v1641 = vunpack.c.l.b16 %v1513
      %v1642 = vunpack.c.l.b16 %v1514
      %v1643 = vunpack.c.l.b16 %v1515
      %v1644 = vunpack.c.l.b16 %v1516
      %v1645 = vunpack.c.l.b16 %v1517
      %v1646 = vunpack.c.l.b16 %v1518
      %v1647 = vunpack.c.l.b16 %v1519
      %v1648 = vunpack.c.l.b16 %v1520
      %v1649 = vunpack.c.l.b16 %v1521
      %v1650 = vunpack.c.l.b16 %v1522
      %v1651 = vunpack.c.l.b16 %v1523
      %v1652 = vunpack.c.l.b16 %v1524
      %v1653 = vunpack.c.l.b16 %v1525
      %v1654 = vunpack.c.l.b16 %v1526
      %v1655 = vunpack.c.l.b16 %v1527
      %v1656 = vunpack.c.l.b16 %v1528
      %v1657 = vunpack.c.l.b16 %v1529
      %v1658 = vunpack.c.l.b16 %v1530
      %v1659 = vunpack.c.l.b16 %v1531
      %v1660 = vunpack.c.l.b16 %v1532
      %v1661 = vunpack.c.l.b16 %v1533
      %v1662 = vunpack.c.l.b16 %v1534
      %v1663 = vunpack.c.l.b16 %v1535
      %v1664 = vunpack.c.l.b16 %v1536
      %v1665 = vunpack.c.l.b16 %v1537
      %v1666 = vunpack.c.l.b16 %v1538
      %v1667 = vunpack.c.l.b16 %v1539
      %v1668 = vunpack.c.l.b16 %v1540
      %v1669 = vunpack.c.l.b16 %v1541
      %v1670 = vunpack.c.l.b16 %v1542
      %v1671 = vunpack.c.l.b16 %v1543
      %v1672 = vunpack.c.l.b16 %v1544
      %v1673 = vunpack.c.l.b16 %v1545
      %v1674 = vunpack.c.l.b16 %v1546
      %v1675 = vunpack.c.l.b16 %v1547
      %v1676 = vunpack.c.l.b16 %v1548
      %v1677 = vunpack.c.l.b16 %v1549
      %v1678 = vunpack.c.l.b16 %v1550
      %v1679 = vunpack.c.l.b16 %v1551
      %v1680 = vunpack.c.l.b16 %v1552
      %v1681 = vpack.c.b16 %v1618, %v1617
      %v1682 = vpack.c.b16 %v1620, %v1619
      %v1683 = vpack.c.b16 %v1622, %v1621
      %v1684 = vpack.c.b16 %v1624, %v1623
      %v1685 = vpack.c.b16 %v1626, %v1625
      %v1686 = vpack.c.b16 %v1628, %v1627
      %v1687 = vpack.c.b16 %v1630, %v1629
      %v1688 = vpack.c.b16 %v1632, %v1631
      %v1689 = vpack.c.b16 %v1634, %v1633
      %v1690 = vpack.c.b16 %v1636, %v1635
      %v1691 = vpack.c.b16 %v1638, %v1637
      %v1692 = vpack.c.b16 %v1640, %v1639
      %v1693 = vpack.c.b16 %v1642, %v1641
      %v1694 = vpack.c.b16 %v1644, %v1643
      %v1695 = vpack.c.b16 %v1646, %v1645
      %v1696 = vpack.c.b16 %v1648, %v1647
      %v1697 = vpack.c.b16 %v1650, %v1649
      %v1698 = vpack.c.b16 %v1652, %v1651
      %v1699 = vpack.c.b16 %v1654, %v1653
      %v1700 = vpack.c.b16 %v1656, %v1655
      %v1701 = vpack.c.b16 %v1658, %v1657
      %v1702 = vpack.c.b16 %v1660, %v1659
      %v1703 = vpack.c.b16 %v1662, %v1661
      %v1704 = vpack.c.b16 %v1664, %v1663
      %v1705 = vpack.c.b16 %v1666, %v1665
      %v1706 = vpack.c.b16 %v1668, %v1667
      %v1707 = vpack.c.b16 %v1670, %v1669
      %v1708 = vpack.c.b16 %v1672, %v1671
      %v1709 = vpack.c.b16 %v1674, %v1673
      %v1710 = vpack.c.b16 %v1676, %v1675
      %v1711 = vpack.c.b16 %v1678, %v1677
      %v1712 = vpack.c.b16 %v1680, %v1679
      %v1718 = vunpack.c.l.b16 %v226
      %v1719 = vunpack.c.l.b16 %v227
      %v1720 = vunpack.c.l.b16 %v228
      %v1721 = vunpack.c.l.b16 %v229
      %v1722 = vunpack.c.l.b16 %v230
      %v1723 = vpack.c.b16 %v1719, %v1718
      %v1724 = vpack.c.b16 %v1721, %v1720
      %v1725 = vpack.c.b16 %v1722, %v1722
      %v1729 = vsel %vm535, %v1681, 0
      %v1732 = vsel %vm535, %v1682, 0
      %v1735 = vsel %vm535, %v1683, 0
      %v1738 = vsel %vm535, %v1684, 0
      %v1741 = vsel %vm535, %v1685, 0
      %v1744 = vsel %vm535, %v1686, 0
      %v1747 = vsel %vm535, %v1687, 0
      %v1750 = vsel %vm535, %v1688, 0
      %v1753 = vsel %vm535, %v1689, 0
      %v1756 = vsel %vm535, %v1690, 0
      %v1759 = vsel %vm535, %v1691, 0
      %v1762 = vsel %vm535, %v1692, 0
      %v1765 = vsel %vm535, %v1693, 0
      %v1768 = vsel %vm535, %v1694, 0
      %v1771 = vsel %vm535, %v1695, 0
      %v1774 = vsel %vm535, %v1696, 0
      %v1777 = vsel %vm535, %v1697, 0
      %v1780 = vsel %vm535, %v1698, 0
      %v1783 = vsel %vm535, %v1699, 0
      %v1786 = vsel %vm535, %v1700, 0
      %v1789 = vsel %vm535, %v1701, 0
      %v1792 = vsel %vm535, %v1702, 0
      %v1795 = vsel %vm535, %v1703, 0
      %v1798 = vsel %vm535, %v1704, 0
      %v1801 = vsel %vm535, %v1705, 0
      %v1804 = vsel %vm535, %v1706, 0
      %v1807 = vsel %vm535, %v1707, 0
      %v1810 = vsel %vm535, %v1708, 0
      %v1813 = vsel %vm535, %v1709, 0
      %v1816 = vsel %vm535, %v1710, 0
      %v1819 = vsel %vm535, %v1711, 0
      %v1822 = vsel %vm535, %v1712, 0
      %v1825 = vsel %vm632, %v1725, 0
      %1827 = vmatprep.subr.bf16.mxu0 0
      %1828 = vmatpush1.bf16.msra.mxu0 %v1723
      %1829 = vmatprep.subr.bf16.mxu0 0
      %1830 = vmatpush1.bf16.msra.mxu0 %v1724
      %1831 = vmatprep.subr.bf16.mxu0 0
      %1832 = vmatpush1.bf16.msra.mxu0 %v1825
      %1833 = vmatprep.subr.bf16.mxu0 0
      %1834 = vmatpush1.bf16.msra.mxu0 0
      %1835 = vmatprep.subr.bf16.mxu0 0
      %1836 = vmatpush1.bf16.msra.mxu0 0
      %1837 = vmatprep.subr.bf16.mxu0 0
      %1838 = vmatpush1.bf16.msra.mxu0 0
      %1839 = vmatprep.subr.bf16.mxu0 0
      %1840 = vmatpush1.bf16.msra.mxu0 0
      %1841 = vmatprep.subr.bf16.mxu0 0
      %1842 = vmatpush1.bf16.msra.mxu0 0
      %1843 = vmatprep.subr.bf16.mxu0 0
      %1844 = vmatpush1.bf16.msra.mxu0 0
      %1845 = vmatprep.subr.bf16.mxu0 0
      %1846 = vmatpush1.bf16.msra.mxu0 0
      %1847 = vmatprep.subr.bf16.mxu0 0
      %1848 = vmatpush1.bf16.msra.mxu0 0
      %1849 = vmatprep.subr.bf16.mxu0 0
      %1850 = vmatpush1.bf16.msra.mxu0 0
      %1851 = vmatprep.subr.bf16.mxu0 0
      %1852 = vmatpush1.bf16.msra.mxu0 0
      %1853 = vmatprep.subr.bf16.mxu0 0
      %1854 = vmatpush1.bf16.msra.mxu0 0
      %1855 = vmatprep.subr.bf16.mxu0 0
      %1856 = vmatpush1.bf16.msra.mxu0 0
      %1857 = vmatprep.subr.bf16.mxu0 0
      %1858 = vmatpush1.bf16.msra.mxu0 0
      %1859 = vmatprep.mubr.bf16.mxu0 0
      %1860 = vmatmul.mubr.bf16.gmra.mrb[0].mxu0 %v1729
      %v1861 = vpop.f32.mrb[0].mxu0
      %v1862 = vadd.f32 0.0, %v1861
      %v1863 = vpop.f32.mrb[0].mxu0
      %v1864 = vpop.f32.mrb[0].mxu0
      %v1865 = vadd.f32 0.0, %v1864
      %v1866 = vpop.f32.mrb[0].mxu0
      %1867 = vmatprep.mubr.bf16.mxu0 0
      %1868 = vmatmul.mubr.bf16.gmra.mrb[0].mxu0 %v1732
      %v1869 = vpop.f32.mrb[0].mxu0
      %v1870 = vadd.f32 0.0, %v1869
      %v1871 = vpop.f32.mrb[0].mxu0
      %v1872 = vpop.f32.mrb[0].mxu0
      %v1873 = vadd.f32 0.0, %v1872
      %v1874 = vpop.f32.mrb[0].mxu0
      %1875 = vmatprep.mubr.bf16.mxu0 0
      %1876 = vmatmul.mubr.bf16.gmra.mrb[0].mxu0 %v1735
      %v1877 = vpop.f32.mrb[0].mxu0
      %v1878 = vadd.f32 0.0, %v1877
      %v1879 = vpop.f32.mrb[0].mxu0
      %v1880 = vpop.f32.mrb[0].mxu0
      %v1881 = vadd.f32 0.0, %v1880
      %v1882 = vpop.f32.mrb[0].mxu0
      %1883 = vmatprep.mubr.bf16.mxu0 0
      %1884 = vmatmul.mubr.bf16.gmra.mrb[0].mxu0 %v1738
      %v1885 = vpop.f32.mrb[0].mxu0
      %v1886 = vadd.f32 0.0, %v1885
      %v1887 = vpop.f32.mrb[0].mxu0
      %v1888 = vpop.f32.mrb[0].mxu0
      %v1889 = vadd.f32 0.0, %v1888
      %v1890 = vpop.f32.mrb[0].mxu0
      %1891 = vmatprep.mubr.bf16.mxu0 0
      %1892 = vmatmul.mubr.bf16.gmra.mrb[0].mxu0 %v1741
      %v1893 = vpop.f32.mrb[0].mxu0
      %v1894 = vadd.f32 0.0, %v1893
      %v1895 = vpop.f32.mrb[0].mxu0
      %v1896 = vpop.f32.mrb[0].mxu0
      %v1897 = vadd.f32 0.0, %v1896
      %v1898 = vpop.f32.mrb[0].mxu0
      %1899 = vmatprep.mubr.bf16.mxu0 0
      %1900 = vmatmul.mubr.bf16.gmra.mrb[0].mxu0 %v1744
      %v1901 = vpop.f32.mrb[0].mxu0
      %v1902 = vadd.f32 0.0, %v1901
      %v1903 = vpop.f32.mrb[0].mxu0
      %v1904 = vpop.f32.mrb[0].mxu0
      %v1905 = vadd.f32 0.0, %v1904
      %v1906 = vpop.f32.mrb[0].mxu0
      %1907 = vmatprep.mubr.bf16.mxu0 0
      %1908 = vmatmul.mubr.bf16.gmra.mrb[0].mxu0 %v1747
      %v1909 = vpop.f32.mrb[0].mxu0
      %v1910 = vadd.f32 0.0, %v1909
      %v1911 = vpop.f32.mrb[0].mxu0
      %v1912 = vpop.f32.mrb[0].mxu0
      %v1913 = vadd.f32 0.0, %v1912
      %v1914 = vpop.f32.mrb[0].mxu0
      %1915 = vmatprep.mubr.bf16.mxu0 0
      %1916 = vmatmul.mubr.bf16.gmra.mrb[0].mxu0 %v1750
      %v1917 = vpop.f32.mrb[0].mxu0
      %v1918 = vadd.f32 0.0, %v1917
      %v1919 = vpop.f32.mrb[0].mxu0
      %v1920 = vpop.f32.mrb[0].mxu0
      %v1921 = vadd.f32 0.0, %v1920
      %v1922 = vpop.f32.mrb[0].mxu0
      %1923 = vmatprep.mubr.bf16.mxu0 0
      %1924 = vmatmul.mubr.bf16.gmra.mrb[0].mxu0 %v1753
      %v1925 = vpop.f32.mrb[0].mxu0
      %v1926 = vadd.f32 0.0, %v1925
      %v1927 = vpop.f32.mrb[0].mxu0
      %v1928 = vpop.f32.mrb[0].mxu0
      %v1929 = vadd.f32 0.0, %v1928
      %v1930 = vpop.f32.mrb[0].mxu0
      %1931 = vmatprep.mubr.bf16.mxu0 0
      %1932 = vmatmul.mubr.bf16.gmra.mrb[0].mxu0 %v1756
      %v1933 = vpop.f32.mrb[0].mxu0
      %v1934 = vadd.f32 0.0, %v1933
      %v1935 = vpop.f32.mrb[0].mxu0
      %v1936 = vpop.f32.mrb[0].mxu0
      %v1937 = vadd.f32 0.0, %v1936
      %v1938 = vpop.f32.mrb[0].mxu0
      %1939 = vmatprep.mubr.bf16.mxu0 0
      %1940 = vmatmul.mubr.bf16.gmra.mrb[0].mxu0 %v1759
      %v1941 = vpop.f32.mrb[0].mxu0
      %v1942 = vadd.f32 0.0, %v1941
      %v1943 = vpop.f32.mrb[0].mxu0
      %v1944 = vpop.f32.mrb[0].mxu0
      %v1945 = vadd.f32 0.0, %v1944
      %v1946 = vpop.f32.mrb[0].mxu0
      %1947 = vmatprep.mubr.bf16.mxu0 0
      %1948 = vmatmul.mubr.bf16.gmra.mrb[0].mxu0 %v1762
      %v1949 = vpop.f32.mrb[0].mxu0
      %v1950 = vadd.f32 0.0, %v1949
      %v1951 = vpop.f32.mrb[0].mxu0
      %v1952 = vpop.f32.mrb[0].mxu0
      %v1953 = vadd.f32 0.0, %v1952
      %v1954 = vpop.f32.mrb[0].mxu0
      %1955 = vmatprep.mubr.bf16.mxu0 0
      %1956 = vmatmul.mubr.bf16.gmra.mrb[0].mxu0 %v1765
      %v1957 = vpop.f32.mrb[0].mxu0
      %v1958 = vadd.f32 0.0, %v1957
      %v1959 = vpop.f32.mrb[0].mxu0
      %v1960 = vpop.f32.mrb[0].mxu0
      %v1961 = vadd.f32 0.0, %v1960
      %v1962 = vpop.f32.mrb[0].mxu0
      %1963 = vmatprep.mubr.bf16.mxu0 0
      %1964 = vmatmul.mubr.bf16.gmra.mrb[0].mxu0 %v1768
      %v1965 = vpop.f32.mrb[0].mxu0
      %v1966 = vadd.f32 0.0, %v1965
      %v1967 = vpop.f32.mrb[0].mxu0
      %v1968 = vpop.f32.mrb[0].mxu0
      %v1969 = vadd.f32 0.0, %v1968
      %v1970 = vpop.f32.mrb[0].mxu0
      %1971 = vmatprep.mubr.bf16.mxu0 0
      %1972 = vmatmul.mubr.bf16.gmra.mrb[0].mxu0 %v1771
      %v1973 = vpop.f32.mrb[0].mxu0
      %v1974 = vadd.f32 0.0, %v1973
      %v1975 = vpop.f32.mrb[0].mxu0
      %v1976 = vpop.f32.mrb[0].mxu0
      %v1977 = vadd.f32 0.0, %v1976
      %v1978 = vpop.f32.mrb[0].mxu0
      %1979 = vmatprep.mubr.bf16.mxu0 0
      %1980 = vmatmul.mubr.bf16.gmra.mrb[0].mxu0 %v1774
      %v1981 = vpop.f32.mrb[0].mxu0
      %v1982 = vadd.f32 0.0, %v1981
      %v1983 = vpop.f32.mrb[0].mxu0
      %v1984 = vpop.f32.mrb[0].mxu0
      %v1985 = vadd.f32 0.0, %v1984
      %v1986 = vpop.f32.mrb[0].mxu0
      %1987 = vmatprep.mubr.bf16.mxu0 0
      %1988 = vmatmul.mubr.bf16.gmra.mrb[0].mxu0 %v1777
      %v1989 = vpop.f32.mrb[0].mxu0
      %v1990 = vadd.f32 0.0, %v1989
      %v1991 = vpop.f32.mrb[0].mxu0
      %v1992 = vpop.f32.mrb[0].mxu0
      %v1993 = vadd.f32 0.0, %v1992
      %v1994 = vpop.f32.mrb[0].mxu0
      %1995 = vmatprep.mubr.bf16.mxu0 0
      %1996 = vmatmul.mubr.bf16.gmra.mrb[0].mxu0 %v1780
      %v1997 = vpop.f32.mrb[0].mxu0
      %v1998 = vadd.f32 0.0, %v1997
      %v1999 = vpop.f32.mrb[0].mxu0
      %v2000 = vpop.f32.mrb[0].mxu0
      %v2001 = vadd.f32 0.0, %v2000
      %v2002 = vpop.f32.mrb[0].mxu0
      %2003 = vmatprep.mubr.bf16.mxu0 0
      %2004 = vmatmul.mubr.bf16.gmra.mrb[0].mxu0 %v1783
      %v2005 = vpop.f32.mrb[0].mxu0
      %v2006 = vadd.f32 0.0, %v2005
      %v2007 = vpop.f32.mrb[0].mxu0
      %v2008 = vpop.f32.mrb[0].mxu0
      %v2009 = vadd.f32 0.0, %v2008
      %v2010 = vpop.f32.mrb[0].mxu0
      %2011 = vmatprep.mubr.bf16.mxu0 0
      %2012 = vmatmul.mubr.bf16.gmra.mrb[0].mxu0 %v1786
      %v2013 = vpop.f32.mrb[0].mxu0
      %v2014 = vadd.f32 0.0, %v2013
      %v2015 = vpop.f32.mrb[0].mxu0
      %v2016 = vpop.f32.mrb[0].mxu0
      %v2017 = vadd.f32 0.0, %v2016
      %v2018 = vpop.f32.mrb[0].mxu0
      %2019 = vmatprep.mubr.bf16.mxu0 0
      %2020 = vmatmul.mubr.bf16.gmra.mrb[0].mxu0 %v1789
      %v2021 = vpop.f32.mrb[0].mxu0
      %v2022 = vadd.f32 0.0, %v2021
      %v2023 = vpop.f32.mrb[0].mxu0
      %v2024 = vpop.f32.mrb[0].mxu0
      %v2025 = vadd.f32 0.0, %v2024
      %v2026 = vpop.f32.mrb[0].mxu0
      %2027 = vmatprep.mubr.bf16.mxu0 0
      %2028 = vmatmul.mubr.bf16.gmra.mrb[0].mxu0 %v1792
      %v2029 = vpop.f32.mrb[0].mxu0
      %v2030 = vadd.f32 0.0, %v2029
      %v2031 = vpop.f32.mrb[0].mxu0
      %v2032 = vpop.f32.mrb[0].mxu0
      %v2033 = vadd.f32 0.0, %v2032
      %v2034 = vpop.f32.mrb[0].mxu0
      %2035 = vmatprep.mubr.bf16.mxu0 0
      %2036 = vmatmul.mubr.bf16.gmra.mrb[0].mxu0 %v1795
      %v2037 = vpop.f32.mrb[0].mxu0
      %v2038 = vadd.f32 0.0, %v2037
      %v2039 = vpop.f32.mrb[0].mxu0
      %v2040 = vpop.f32.mrb[0].mxu0
      %v2041 = vadd.f32 0.0, %v2040
      %v2042 = vpop.f32.mrb[0].mxu0
      %2043 = vmatprep.mubr.bf16.mxu0 0
      %2044 = vmatmul.mubr.bf16.gmra.mrb[0].mxu0 %v1798
      %v2045 = vpop.f32.mrb[0].mxu0
      %v2046 = vadd.f32 0.0, %v2045
      %v2047 = vpop.f32.mrb[0].mxu0
      %v2048 = vpop.f32.mrb[0].mxu0
      %v2049 = vadd.f32 0.0, %v2048
      %v2050 = vpop.f32.mrb[0].mxu0
      %2051 = vmatprep.mubr.bf16.mxu0 0
      %2052 = vmatmul.mubr.bf16.gmra.mrb[0].mxu0 %v1801
      %v2053 = vpop.f32.mrb[0].mxu0
      %v2054 = vadd.f32 0.0, %v2053
      %v2055 = vpop.f32.mrb[0].mxu0
      %v2056 = vpop.f32.mrb[0].mxu0
      %v2057 = vadd.f32 0.0, %v2056
      %v2058 = vpop.f32.mrb[0].mxu0
      %2059 = vmatprep.mubr.bf16.mxu0 0
      %2060 = vmatmul.mubr.bf16.gmra.mrb[0].mxu0 %v1804
      %v2061 = vpop.f32.mrb[0].mxu0
      %v2062 = vadd.f32 0.0, %v2061
      %v2063 = vpop.f32.mrb[0].mxu0
      %v2064 = vpop.f32.mrb[0].mxu0
      %v2065 = vadd.f32 0.0, %v2064
      %v2066 = vpop.f32.mrb[0].mxu0
      %2067 = vmatprep.mubr.bf16.mxu0 0
      %2068 = vmatmul.mubr.bf16.gmra.mrb[0].mxu0 %v1807
      %v2069 = vpop.f32.mrb[0].mxu0
      %v2070 = vadd.f32 0.0, %v2069
      %v2071 = vpop.f32.mrb[0].mxu0
      %v2072 = vpop.f32.mrb[0].mxu0
      %v2073 = vadd.f32 0.0, %v2072
      %v2074 = vpop.f32.mrb[0].mxu0
      %2075 = vmatprep.mubr.bf16.mxu0 0
      %2076 = vmatmul.mubr.bf16.gmra.mrb[0].mxu0 %v1810
      %v2077 = vpop.f32.mrb[0].mxu0
      %v2078 = vadd.f32 0.0, %v2077
      %v2079 = vpop.f32.mrb[0].mxu0
      %v2080 = vpop.f32.mrb[0].mxu0
      %v2081 = vadd.f32 0.0, %v2080
      %v2082 = vpop.f32.mrb[0].mxu0
      %2083 = vmatprep.mubr.bf16.mxu0 0
      %2084 = vmatmul.mubr.bf16.gmra.mrb[0].mxu0 %v1813
      %v2085 = vpop.f32.mrb[0].mxu0
      %v2086 = vadd.f32 0.0, %v2085
      %v2087 = vpop.f32.mrb[0].mxu0
      %v2088 = vpop.f32.mrb[0].mxu0
      %v2089 = vadd.f32 0.0, %v2088
      %v2090 = vpop.f32.mrb[0].mxu0
      %2091 = vmatprep.mubr.bf16.mxu0 0
      %2092 = vmatmul.mubr.bf16.gmra.mrb[0].mxu0 %v1816
      %v2093 = vpop.f32.mrb[0].mxu0
      %v2094 = vadd.f32 0.0, %v2093
      %v2095 = vpop.f32.mrb[0].mxu0
      %v2096 = vpop.f32.mrb[0].mxu0
      %v2097 = vadd.f32 0.0, %v2096
      %v2098 = vpop.f32.mrb[0].mxu0
      %2099 = vmatprep.mubr.bf16.mxu0 0
      %2100 = vmatmul.mubr.bf16.gmra.mrb[0].mxu0 %v1819
      %v2101 = vpop.f32.mrb[0].mxu0
      %v2102 = vadd.f32 0.0, %v2101
      %v2103 = vpop.f32.mrb[0].mxu0
      %v2104 = vpop.f32.mrb[0].mxu0
      %v2105 = vadd.f32 0.0, %v2104
      %v2106 = vpop.f32.mrb[0].mxu0
      %2107 = vmatprep.mubr.bf16.mxu0 0
      %2108 = vmatmul.mubr.bf16.gmra.mrb[0].mxu0 %v1822
      %v2109 = vpop.f32.mrb[0].mxu0
      %v2110 = vadd.f32 0.0, %v2109
      %v2111 = vpop.f32.mrb[0].mxu0
      %v2112 = vpop.f32.mrb[0].mxu0
      %v2113 = vadd.f32 0.0, %v2112
      %v2114 = vpop.f32.mrb[0].mxu0
      %2115 = vdwg.mxu0
      %v2116 = vadd.f32 %v1234, %v1862
      %v2117 = vadd.f32 %v1237, %v1865
      %v2118 = vadd.f32 %v1242, %v1870
      %v2119 = vadd.f32 %v1245, %v1873
      %v2120 = vadd.f32 %v1250, %v1878
      %v2121 = vadd.f32 %v1253, %v1881
      %v2122 = vadd.f32 %v1258, %v1886
      %v2123 = vadd.f32 %v1261, %v1889
      %v2124 = vadd.f32 %v1266, %v1894
      %v2125 = vadd.f32 %v1269, %v1897
      %v2126 = vadd.f32 %v1274, %v1902
      %v2127 = vadd.f32 %v1277, %v1905
      %v2128 = vadd.f32 %v1282, %v1910
      %v2129 = vadd.f32 %v1285, %v1913
      %v2130 = vadd.f32 %v1290, %v1918
      %v2131 = vadd.f32 %v1293, %v1921
      %v2132 = vadd.f32 %v1298, %v1926
      %v2133 = vadd.f32 %v1301, %v1929
      %v2134 = vadd.f32 %v1306, %v1934
      %v2135 = vadd.f32 %v1309, %v1937
      %v2136 = vadd.f32 %v1314, %v1942
      %v2137 = vadd.f32 %v1317, %v1945
      %v2138 = vadd.f32 %v1322, %v1950
      %v2139 = vadd.f32 %v1325, %v1953
      %v2140 = vadd.f32 %v1330, %v1958
      %v2141 = vadd.f32 %v1333, %v1961
      %v2142 = vadd.f32 %v1338, %v1966
      %v2143 = vadd.f32 %v1341, %v1969
      %v2144 = vadd.f32 %v1346, %v1974
      %v2145 = vadd.f32 %v1349, %v1977
      %v2146 = vadd.f32 %v1354, %v1982
      %v2147 = vadd.f32 %v1357, %v1985
      %v2148 = vadd.f32 %v1362, %v1990
      %v2149 = vadd.f32 %v1365, %v1993
      %v2150 = vadd.f32 %v1370, %v1998
      %v2151 = vadd.f32 %v1373, %v2001
      %v2152 = vadd.f32 %v1378, %v2006
      %v2153 = vadd.f32 %v1381, %v2009
      %v2154 = vadd.f32 %v1386, %v2014
      %v2155 = vadd.f32 %v1389, %v2017
      %v2156 = vadd.f32 %v1394, %v2022
      %v2157 = vadd.f32 %v1397, %v2025
      %v2158 = vadd.f32 %v1402, %v2030
      %v2159 = vadd.f32 %v1405, %v2033
      %v2160 = vadd.f32 %v1410, %v2038
      %v2161 = vadd.f32 %v1413, %v2041
      %v2162 = vadd.f32 %v1418, %v2046
      %v2163 = vadd.f32 %v1421, %v2049
      %v2164 = vadd.f32 %v1426, %v2054
      %v2165 = vadd.f32 %v1429, %v2057
      %v2166 = vadd.f32 %v1434, %v2062
      %v2167 = vadd.f32 %v1437, %v2065
      %v2168 = vadd.f32 %v1442, %v2070
      %v2169 = vadd.f32 %v1445, %v2073
      %v2170 = vadd.f32 %v1450, %v2078
      %v2171 = vadd.f32 %v1453, %v2081
      %v2172 = vadd.f32 %v1458, %v2086
      %v2173 = vadd.f32 %v1461, %v2089
      %v2174 = vadd.f32 %v1466, %v2094
      %v2175 = vadd.f32 %v1469, %v2097
      %v2176 = vadd.f32 %v1474, %v2102
      %v2177 = vadd.f32 %v1477, %v2105
      %v2178 = vadd.f32 %v1482, %v2110
      %v2179 = vadd.f32 %v1485, %v2113
      %v2180 = vpack.c.bf16 %v2117, %v2116
      %v2181 = vpack.c.bf16 %v2119, %v2118
      %v2182 = vpack.c.bf16 %v2121, %v2120
      %v2183 = vpack.c.bf16 %v2123, %v2122
      %v2184 = vpack.c.bf16 %v2125, %v2124
      %v2185 = vpack.c.bf16 %v2127, %v2126
      %v2186 = vpack.c.bf16 %v2129, %v2128
      %v2187 = vpack.c.bf16 %v2131, %v2130
      %v2188 = vpack.c.bf16 %v2133, %v2132
      %v2189 = vpack.c.bf16 %v2135, %v2134
      %v2190 = vpack.c.bf16 %v2137, %v2136
      %v2191 = vpack.c.bf16 %v2139, %v2138
      %v2192 = vpack.c.bf16 %v2141, %v2140
      %v2193 = vpack.c.bf16 %v2143, %v2142
      %v2194 = vpack.c.bf16 %v2145, %v2144
      %v2195 = vpack.c.bf16 %v2147, %v2146
      %v2196 = vpack.c.bf16 %v2149, %v2148
      %v2197 = vpack.c.bf16 %v2151, %v2150
      %v2198 = vpack.c.bf16 %v2153, %v2152
      %v2199 = vpack.c.bf16 %v2155, %v2154
      %v2200 = vpack.c.bf16 %v2157, %v2156
      %v2201 = vpack.c.bf16 %v2159, %v2158
      %v2202 = vpack.c.bf16 %v2161, %v2160
      %v2203 = vpack.c.bf16 %v2163, %v2162
      %v2204 = vpack.c.bf16 %v2165, %v2164
      %v2205 = vpack.c.bf16 %v2167, %v2166
      %v2206 = vpack.c.bf16 %v2169, %v2168
      %v2207 = vpack.c.bf16 %v2171, %v2170
      %v2208 = vpack.c.bf16 %v2173, %v2172
      %v2209 = vpack.c.bf16 %v2175, %v2174
      %v2210 = vpack.c.bf16 %v2177, %v2176
      %v2211 = vpack.c.bf16 %v2179, %v2178
      %v2244 = vunpack.c.l.b16 %v2180
      %v2245 = vunpack.c.h.b16 %v2180
      %v2246 = vunpack.c.l.b16 %v2181
      %v2247 = vunpack.c.h.b16 %v2181
      %v2248 = vunpack.c.l.b16 %v2182
      %v2249 = vunpack.c.h.b16 %v2182
      %v2250 = vunpack.c.l.b16 %v2183
      %v2251 = vunpack.c.h.b16 %v2183
      %v2252 = vunpack.c.l.b16 %v2184
      %v2253 = vunpack.c.h.b16 %v2184
      %v2254 = vunpack.c.l.b16 %v2185
      %v2255 = vunpack.c.h.b16 %v2185
      %v2256 = vunpack.c.l.b16 %v2186
      %v2257 = vunpack.c.h.b16 %v2186
      %v2258 = vunpack.c.l.b16 %v2187
      %v2259 = vunpack.c.h.b16 %v2187
      %v2260 = vunpack.c.l.b16 %v2188
      %v2261 = vunpack.c.h.b16 %v2188
      %v2262 = vunpack.c.l.b16 %v2189
      %v2263 = vunpack.c.h.b16 %v2189
      %v2264 = vunpack.c.l.b16 %v2190
      %v2265 = vunpack.c.h.b16 %v2190
      %v2266 = vunpack.c.l.b16 %v2191
      %v2267 = vunpack.c.h.b16 %v2191
      %v2268 = vunpack.c.l.b16 %v2192
      %v2269 = vunpack.c.h.b16 %v2192
      %v2270 = vunpack.c.l.b16 %v2193
      %v2271 = vunpack.c.h.b16 %v2193
      %v2272 = vunpack.c.l.b16 %v2194
      %v2273 = vunpack.c.h.b16 %v2194
      %v2274 = vunpack.c.l.b16 %v2195
      %v2275 = vunpack.c.h.b16 %v2195
      %v2276 = vunpack.c.l.b16 %v2196
      %v2277 = vunpack.c.h.b16 %v2196
      %v2278 = vunpack.c.l.b16 %v2197
      %v2279 = vunpack.c.h.b16 %v2197
      %v2280 = vunpack.c.l.b16 %v2198
      %v2281 = vunpack.c.h.b16 %v2198
      %v2282 = vunpack.c.l.b16 %v2199
      %v2283 = vunpack.c.h.b16 %v2199
      %v2284 = vunpack.c.l.b16 %v2200
      %v2285 = vunpack.c.h.b16 %v2200
      %v2286 = vunpack.c.l.b16 %v2201
      %v2287 = vunpack.c.h.b16 %v2201
      %v2288 = vunpack.c.l.b16 %v2202
      %v2289 = vunpack.c.h.b16 %v2202
      %v2290 = vunpack.c.l.b16 %v2203
      %v2291 = vunpack.c.h.b16 %v2203
      %v2292 = vunpack.c.l.b16 %v2204
      %v2293 = vunpack.c.h.b16 %v2204
      %v2294 = vunpack.c.l.b16 %v2205
      %v2295 = vunpack.c.h.b16 %v2205
      %v2296 = vunpack.c.l.b16 %v2206
      %v2297 = vunpack.c.h.b16 %v2206
      %v2298 = vunpack.c.l.b16 %v2207
      %v2299 = vunpack.c.h.b16 %v2207
      %v2300 = vunpack.c.l.b16 %v2208
      %v2301 = vunpack.c.h.b16 %v2208
      %v2302 = vunpack.c.l.b16 %v2209
      %v2303 = vunpack.c.h.b16 %v2209
      %v2304 = vunpack.c.l.b16 %v2210
      %v2305 = vunpack.c.h.b16 %v2210
      %v2306 = vunpack.c.l.b16 %v2211
      %v2307 = vunpack.c.h.b16 %v2211
      %v2308 = vpack.c.b16 %v2244, %v2244
      %v2309 = vpack.c.b16 %v2245, %v2245
      %v2310 = vpack.c.b16 %v2246, %v2246
      %v2311 = vpack.c.b16 %v2247, %v2247
      %v2312 = vpack.c.b16 %v2248, %v2248
      %v2313 = vpack.c.b16 %v2249, %v2249
      %v2314 = vpack.c.b16 %v2250, %v2250
      %v2315 = vpack.c.b16 %v2251, %v2251
      %v2316 = vpack.c.b16 %v2252, %v2252
      %v2317 = vpack.c.b16 %v2253, %v2253
      %v2318 = vpack.c.b16 %v2254, %v2254
      %v2319 = vpack.c.b16 %v2255, %v2255
      %v2320 = vpack.c.b16 %v2256, %v2256
      %v2321 = vpack.c.b16 %v2257, %v2257
      %v2322 = vpack.c.b16 %v2258, %v2258
      %v2323 = vpack.c.b16 %v2259, %v2259
      %v2324 = vpack.c.b16 %v2260, %v2260
      %v2325 = vpack.c.b16 %v2261, %v2261
      %v2326 = vpack.c.b16 %v2262, %v2262
      %v2327 = vpack.c.b16 %v2263, %v2263
      %v2328 = vpack.c.b16 %v2264, %v2264
      %v2329 = vpack.c.b16 %v2265, %v2265
      %v2330 = vpack.c.b16 %v2266, %v2266
      %v2331 = vpack.c.b16 %v2267, %v2267
      %v2332 = vpack.c.b16 %v2268, %v2268
      %v2333 = vpack.c.b16 %v2269, %v2269
      %v2334 = vpack.c.b16 %v2270, %v2270
      %v2335 = vpack.c.b16 %v2271, %v2271
      %v2336 = vpack.c.b16 %v2272, %v2272
      %v2337 = vpack.c.b16 %v2273, %v2273
      %v2338 = vpack.c.b16 %v2274, %v2274
      %v2339 = vpack.c.b16 %v2275, %v2275
      %v2340 = vpack.c.b16 %v2276, %v2276
      %v2341 = vpack.c.b16 %v2277, %v2277
      %v2342 = vpack.c.b16 %v2278, %v2278
      %v2343 = vpack.c.b16 %v2279, %v2279
      %v2344 = vpack.c.b16 %v2280, %v2280
      %v2345 = vpack.c.b16 %v2281, %v2281
      %v2346 = vpack.c.b16 %v2282, %v2282
      %v2347 = vpack.c.b16 %v2283, %v2283
      %v2348 = vpack.c.b16 %v2284, %v2284
      %v2349 = vpack.c.b16 %v2285, %v2285
      %v2350 = vpack.c.b16 %v2286, %v2286
      %v2351 = vpack.c.b16 %v2287, %v2287
      %v2352 = vpack.c.b16 %v2288, %v2288
      %v2353 = vpack.c.b16 %v2289, %v2289
      %v2354 = vpack.c.b16 %v2290, %v2290
      %v2355 = vpack.c.b16 %v2291, %v2291
      %v2356 = vpack.c.b16 %v2292, %v2292
      %v2357 = vpack.c.b16 %v2293, %v2293
      %v2358 = vpack.c.b16 %v2294, %v2294
      %v2359 = vpack.c.b16 %v2295, %v2295
      %v2360 = vpack.c.b16 %v2296, %v2296
      %v2361 = vpack.c.b16 %v2297, %v2297
      %v2362 = vpack.c.b16 %v2298, %v2298
      %v2363 = vpack.c.b16 %v2299, %v2299
      %v2364 = vpack.c.b16 %v2300, %v2300
      %v2365 = vpack.c.b16 %v2301, %v2301
      %v2366 = vpack.c.b16 %v2302, %v2302
      %v2367 = vpack.c.b16 %v2303, %v2303
      %v2368 = vpack.c.b16 %v2304, %v2304
      %v2369 = vpack.c.b16 %v2305, %v2305
      %v2370 = vpack.c.b16 %v2306, %v2306
      %v2371 = vpack.c.b16 %v2307, %v2307
      %vm2436 = vcmask 60416
      %2437 = vst.msk [vmem:[%s208] sm:$0xf] %vm2436, %v2308
      %2438 = vst.msk [vmem:[%s208 + $0x4] sm:$0xf] %vm2436, %v2309
      %2439 = vst.msk [vmem:[%s208 + $0x8] sm:$0xf] %vm2436, %v2310
      %2440 = vst.msk [vmem:[%s208 + $0xc] sm:$0xf] %vm2436, %v2311
      %2441 = vst.msk [vmem:[%s208 + $0x10] sm:$0xf] %vm2436, %v2312
      %2442 = vst.msk [vmem:[%s208 + $0x14] sm:$0xf] %vm2436, %v2313
      %2443 = vst.msk [vmem:[%s208 + $0x18] sm:$0xf] %vm2436, %v2314
      %2444 = vst.msk [vmem:[%s208 + $0x1c] sm:$0xf] %vm2436, %v2315
      %2445 = vst.msk [vmem:[%s208 + $0x20] sm:$0xf] %vm2436, %v2316
      %2446 = vst.msk [vmem:[%s208 + $0x24] sm:$0xf] %vm2436, %v2317
      %2447 = vst.msk [vmem:[%s208 + $0x28] sm:$0xf] %vm2436, %v2318
      %2448 = vst.msk [vmem:[%s208 + $0x2c] sm:$0xf] %vm2436, %v2319
      %2449 = vst.msk [vmem:[%s208 + $0x30] sm:$0xf] %vm2436, %v2320
      %2450 = vst.msk [vmem:[%s208 + $0x34] sm:$0xf] %vm2436, %v2321
      %2451 = vst.msk [vmem:[%s208 + $0x38] sm:$0xf] %vm2436, %v2322
      %2452 = vst.msk [vmem:[%s208 + $0x3c] sm:$0xf] %vm2436, %v2323
      %2453 = vst.msk [vmem:[%s208 + $0x40] sm:$0xf] %vm2436, %v2324
      %2454 = vst.msk [vmem:[%s208 + $0x44] sm:$0xf] %vm2436, %v2325
      %2455 = vst.msk [vmem:[%s208 + $0x48] sm:$0xf] %vm2436, %v2326
      %2456 = vst.msk [vmem:[%s208 + $0x4c] sm:$0xf] %vm2436, %v2327
      %2457 = vst.msk [vmem:[%s208 + $0x50] sm:$0xf] %vm2436, %v2328
      %2458 = vst.msk [vmem:[%s208 + $0x54] sm:$0xf] %vm2436, %v2329
      %2459 = vst.msk [vmem:[%s208 + $0x58] sm:$0xf] %vm2436, %v2330
      %2460 = vst.msk [vmem:[%s208 + $0x5c] sm:$0xf] %vm2436, %v2331
      %2461 = vst.msk [vmem:[%s208 + $0x60] sm:$0xf] %vm2436, %v2332
      %2462 = vst.msk [vmem:[%s208 + $0x64] sm:$0xf] %vm2436, %v2333
      %2463 = vst.msk [vmem:[%s208 + $0x68] sm:$0xf] %vm2436, %v2334
      %2464 = vst.msk [vmem:[%s208 + $0x6c] sm:$0xf] %vm2436, %v2335
      %2465 = vst.msk [vmem:[%s208 + $0x70] sm:$0xf] %vm2436, %v2336
      %2466 = vst.msk [vmem:[%s208 + $0x74] sm:$0xf] %vm2436, %v2337
      %2467 = vst.msk [vmem:[%s208 + $0x78] sm:$0xf] %vm2436, %v2338
      %2468 = vst.msk [vmem:[%s208 + $0x7c] sm:$0xf] %vm2436, %v2339
      %2469 = vst.msk [vmem:[%s208 + $0x80] sm:$0xf] %vm2436, %v2340
      %2470 = vst.msk [vmem:[%s208 + $0x84] sm:$0xf] %vm2436, %v2341
      %2471 = vst.msk [vmem:[%s208 + $0x88] sm:$0xf] %vm2436, %v2342
      %2472 = vst.msk [vmem:[%s208 + $0x8c] sm:$0xf] %vm2436, %v2343
      %2473 = vst.msk [vmem:[%s208 + $0x90] sm:$0xf] %vm2436, %v2344
      %2474 = vst.msk [vmem:[%s208 + $0x94] sm:$0xf] %vm2436, %v2345
      %2475 = vst.msk [vmem:[%s208 + $0x98] sm:$0xf] %vm2436, %v2346
      %2476 = vst.msk [vmem:[%s208 + $0x9c] sm:$0xf] %vm2436, %v2347
      %2477 = vst.msk [vmem:[%s208 + $0xa0] sm:$0xf] %vm2436, %v2348
      %2478 = vst.msk [vmem:[%s208 + $0xa4] sm:$0xf] %vm2436, %v2349
      %2479 = vst.msk [vmem:[%s208 + $0xa8] sm:$0xf] %vm2436, %v2350
      %2480 = vst.msk [vmem:[%s208 + $0xac] sm:$0xf] %vm2436, %v2351
      %2481 = vst.msk [vmem:[%s208 + $0xb0] sm:$0xf] %vm2436, %v2352
      %2482 = vst.msk [vmem:[%s208 + $0xb4] sm:$0xf] %vm2436, %v2353
      %2483 = vst.msk [vmem:[%s208 + $0xb8] sm:$0xf] %vm2436, %v2354
      %2484 = vst.msk [vmem:[%s208 + $0xbc] sm:$0xf] %vm2436, %v2355
      %2485 = vst.msk [vmem:[%s208 + $0xc0] sm:$0xf] %vm2436, %v2356
      %2486 = vst.msk [vmem:[%s208 + $0xc4] sm:$0xf] %vm2436, %v2357
      %2487 = vst.msk [vmem:[%s208 + $0xc8] sm:$0xf] %vm2436, %v2358
      %2488 = vst.msk [vmem:[%s208 + $0xcc] sm:$0xf] %vm2436, %v2359
      %2489 = vst.msk [vmem:[%s208 + $0xd0] sm:$0xf] %vm2436, %v2360
      %2490 = vst.msk [vmem:[%s208 + $0xd4] sm:$0xf] %vm2436, %v2361
      %2491 = vst.msk [vmem:[%s208 + $0xd8] sm:$0xf] %vm2436, %v2362
      %2492 = vst.msk [vmem:[%s208 + $0xdc] sm:$0xf] %vm2436, %v2363
      %2493 = vst.msk [vmem:[%s208 + $0xe0] sm:$0xf] %vm2436, %v2364
      %2494 = vst.msk [vmem:[%s208 + $0xe4] sm:$0xf] %vm2436, %v2365
      %2495 = vst.msk [vmem:[%s208 + $0xe8] sm:$0xf] %vm2436, %v2366
      %2496 = vst.msk [vmem:[%s208 + $0xec] sm:$0xf] %vm2436, %v2367
      %2497 = vst.msk [vmem:[%s208 + $0xf0] sm:$0xf] %vm2436, %v2368
      %2498 = vst.msk [vmem:[%s208 + $0xf4] sm:$0xf] %vm2436, %v2369
      %2499 = vst.msk [vmem:[%s208 + $0xf8] sm:$0xf] %vm2436, %v2370
      %2500 = vst.msk [vmem:[%s208 + $0xfc] sm:$0xf] %vm2436, %v2371
      %vm2501 = vcmask 64512
      %v2502 = vsel %vm2501, %v2116, 0.0
      %v2503 = vsel %vm2501, %v2117, 0.0
      %v2504 = vadd.f32 %v2502, %v2503
      %v2505 = vsel %vm2501, %v2118, 0.0
      %v2506 = vadd.f32 %v2504, %v2505
      %v2507 = vsel %vm2501, %v2119, 0.0
      %v2508 = vadd.f32 %v2506, %v2507
      %v2509 = vsel %vm2501, %v2120, 0.0
      %v2510 = vadd.f32 %v2508, %v2509
      %v2511 = vsel %vm2501, %v2121, 0.0
      %v2512 = vadd.f32 %v2510, %v2511
      %v2513 = vsel %vm2501, %v2122, 0.0
      %v2514 = vadd.f32 %v2512, %v2513
      %v2515 = vsel %vm2501, %v2123, 0.0
      %v2516 = vadd.f32 %v2514, %v2515
      %v2517 = vsel %vm2501, %v2124, 0.0
      %v2518 = vadd.f32 %v2516, %v2517
      %v2519 = vsel %vm2501, %v2125, 0.0
      %v2520 = vadd.f32 %v2518, %v2519
      %v2521 = vsel %vm2501, %v2126, 0.0
      %v2522 = vadd.f32 %v2520, %v2521
      %v2523 = vsel %vm2501, %v2127, 0.0
      %v2524 = vadd.f32 %v2522, %v2523
      %v2525 = vsel %vm2501, %v2128, 0.0
      %v2526 = vadd.f32 %v2524, %v2525
      %v2527 = vsel %vm2501, %v2129, 0.0
      %v2528 = vadd.f32 %v2526, %v2527
      %v2529 = vsel %vm2501, %v2130, 0.0
      %v2530 = vadd.f32 %v2528, %v2529
      %v2531 = vsel %vm2501, %v2131, 0.0
      %v2532 = vadd.f32 %v2530, %v2531
      %v2533 = vsel %vm2501, %v2132, 0.0
      %v2534 = vadd.f32 %v2532, %v2533
      %v2535 = vsel %vm2501, %v2133, 0.0
      %v2536 = vadd.f32 %v2534, %v2535
      %v2537 = vsel %vm2501, %v2134, 0.0
      %v2538 = vadd.f32 %v2536, %v2537
      %v2539 = vsel %vm2501, %v2135, 0.0
      %v2540 = vadd.f32 %v2538, %v2539
      %v2541 = vsel %vm2501, %v2136, 0.0
      %v2542 = vadd.f32 %v2540, %v2541
      %v2543 = vsel %vm2501, %v2137, 0.0
      %v2544 = vadd.f32 %v2542, %v2543
      %v2545 = vsel %vm2501, %v2138, 0.0
      %v2546 = vadd.f32 %v2544, %v2545
      %v2547 = vsel %vm2501, %v2139, 0.0
      %v2548 = vadd.f32 %v2546, %v2547
      %v2549 = vsel %vm2501, %v2140, 0.0
      %v2550 = vadd.f32 %v2548, %v2549
      %v2551 = vsel %vm2501, %v2141, 0.0
      %v2552 = vadd.f32 %v2550, %v2551
      %v2553 = vsel %vm2501, %v2142, 0.0
      %v2554 = vadd.f32 %v2552, %v2553
      %v2555 = vsel %vm2501, %v2143, 0.0
      %v2556 = vadd.f32 %v2554, %v2555
      %v2557 = vsel %vm2501, %v2144, 0.0
      %v2558 = vadd.f32 %v2556, %v2557
      %v2559 = vsel %vm2501, %v2145, 0.0
      %v2560 = vadd.f32 %v2558, %v2559
      %v2561 = vsel %vm2501, %v2146, 0.0
      %v2562 = vadd.f32 %v2560, %v2561
      %v2563 = vsel %vm2501, %v2147, 0.0
      %v2564 = vadd.f32 %v2562, %v2563
      %v2565 = vsel %vm2501, %v2148, 0.0
      %v2566 = vadd.f32 %v2564, %v2565
      %v2567 = vsel %vm2501, %v2149, 0.0
      %v2568 = vadd.f32 %v2566, %v2567
      %v2569 = vsel %vm2501, %v2150, 0.0
      %v2570 = vadd.f32 %v2568, %v2569
      %v2571 = vsel %vm2501, %v2151, 0.0
      %v2572 = vadd.f32 %v2570, %v2571
      %v2573 = vsel %vm2501, %v2152, 0.0
      %v2574 = vadd.f32 %v2572, %v2573
      %v2575 = vsel %vm2501, %v2153, 0.0
      %v2576 = vadd.f32 %v2574, %v2575
      %v2577 = vsel %vm2501, %v2154, 0.0
      %v2578 = vadd.f32 %v2576, %v2577
      %v2579 = vsel %vm2501, %v2155, 0.0
      %v2580 = vadd.f32 %v2578, %v2579
      %v2581 = vsel %vm2501, %v2156, 0.0
      %v2582 = vadd.f32 %v2580, %v2581
      %v2583 = vsel %vm2501, %v2157, 0.0
      %v2584 = vadd.f32 %v2582, %v2583
      %v2585 = vsel %vm2501, %v2158, 0.0
      %v2586 = vadd.f32 %v2584, %v2585
      %v2587 = vsel %vm2501, %v2159, 0.0
      %v2588 = vadd.f32 %v2586, %v2587
      %v2589 = vsel %vm2501, %v2160, 0.0
      %v2590 = vadd.f32 %v2588, %v2589
      %v2591 = vsel %vm2501, %v2161, 0.0
      %v2592 = vadd.f32 %v2590, %v2591
      %v2593 = vsel %vm2501, %v2162, 0.0
      %v2594 = vadd.f32 %v2592, %v2593
      %v2595 = vsel %vm2501, %v2163, 0.0
      %v2596 = vadd.f32 %v2594, %v2595
      %v2597 = vsel %vm2501, %v2164, 0.0
      %v2598 = vadd.f32 %v2596, %v2597
      %v2599 = vsel %vm2501, %v2165, 0.0
      %v2600 = vadd.f32 %v2598, %v2599
      %v2601 = vsel %vm2501, %v2166, 0.0
      %v2602 = vadd.f32 %v2600, %v2601
      %v2603 = vsel %vm2501, %v2167, 0.0
      %v2604 = vadd.f32 %v2602, %v2603
      %v2605 = vsel %vm2501, %v2168, 0.0
      %v2606 = vadd.f32 %v2604, %v2605
      %v2607 = vsel %vm2501, %v2169, 0.0
      %v2608 = vadd.f32 %v2606, %v2607
      %v2609 = vsel %vm2501, %v2170, 0.0
      %v2610 = vadd.f32 %v2608, %v2609
      %v2611 = vsel %vm2501, %v2171, 0.0
      %v2612 = vadd.f32 %v2610, %v2611
      %v2613 = vsel %vm2501, %v2172, 0.0
      %v2614 = vadd.f32 %v2612, %v2613
      %v2615 = vsel %vm2501, %v2173, 0.0
      %v2616 = vadd.f32 %v2614, %v2615
      %v2617 = vsel %vm2501, %v2174, 0.0
      %v2618 = vadd.f32 %v2616, %v2617
      %v2619 = vsel %vm2501, %v2175, 0.0
      %v2620 = vadd.f32 %v2618, %v2619
      %v2621 = vsel %vm2501, %v2176, 0.0
      %v2622 = vadd.f32 %v2620, %v2621
      %v2623 = vsel %vm2501, %v2177, 0.0
      %v2624 = vadd.f32 %v2622, %v2623
      %v2625 = vsel %vm2501, %v2178, 0.0
      %v2626 = vadd.f32 %v2624, %v2625
      %v2627 = vsel %vm2501, %v2179, 0.0
      %v2628 = vadd.f32 %v2626, %v2627
      %v2629 = vrot.slane %v2628, 4
      %v2630 = vadd.f32 %v2628, %v2629
      %v2631 = vrot.slane %v2630, 2
      %v2632 = vadd.f32 %v2630, %v2631
      %v2633 = vrot.slane %v2632, 1
      %v2634 = vadd.f32 %v2632, %v2633
      %vm2635 = vcmask 57344
      %2636 = vst.msk [vmem:[%s211] sm:$0x1] %vm2635, %v2634
      %v2637 = vmul.f32 %v2116, %v2116
      %v2638 = vmul.f32 %v2117, %v2117
      %v2639 = vmul.f32 %v2118, %v2118
      %v2640 = vmul.f32 %v2119, %v2119
      %v2641 = vmul.f32 %v2120, %v2120
      %v2642 = vmul.f32 %v2121, %v2121
      %v2643 = vmul.f32 %v2122, %v2122
      %v2644 = vmul.f32 %v2123, %v2123
      %v2645 = vmul.f32 %v2124, %v2124
      %v2646 = vmul.f32 %v2125, %v2125
      %v2647 = vmul.f32 %v2126, %v2126
      %v2648 = vmul.f32 %v2127, %v2127
      %v2649 = vmul.f32 %v2128, %v2128
      %v2650 = vmul.f32 %v2129, %v2129
      %v2651 = vmul.f32 %v2130, %v2130
      %v2652 = vmul.f32 %v2131, %v2131
      %v2653 = vmul.f32 %v2132, %v2132
      %v2654 = vmul.f32 %v2133, %v2133
      %v2655 = vmul.f32 %v2134, %v2134
      %v2656 = vmul.f32 %v2135, %v2135
      %v2657 = vmul.f32 %v2136, %v2136
      %v2658 = vmul.f32 %v2137, %v2137
      %v2659 = vmul.f32 %v2138, %v2138
      %v2660 = vmul.f32 %v2139, %v2139
      %v2661 = vmul.f32 %v2140, %v2140
      %v2662 = vmul.f32 %v2141, %v2141
      %v2663 = vmul.f32 %v2142, %v2142
      %v2664 = vmul.f32 %v2143, %v2143
      %v2665 = vmul.f32 %v2144, %v2144
      %v2666 = vmul.f32 %v2145, %v2145
      %v2667 = vmul.f32 %v2146, %v2146
      %v2668 = vmul.f32 %v2147, %v2147
      %v2669 = vmul.f32 %v2148, %v2148
      %v2670 = vmul.f32 %v2149, %v2149
      %v2671 = vmul.f32 %v2150, %v2150
      %v2672 = vmul.f32 %v2151, %v2151
      %v2673 = vmul.f32 %v2152, %v2152
      %v2674 = vmul.f32 %v2153, %v2153
      %v2675 = vmul.f32 %v2154, %v2154
      %v2676 = vmul.f32 %v2155, %v2155
      %v2677 = vmul.f32 %v2156, %v2156
      %v2678 = vmul.f32 %v2157, %v2157
      %v2679 = vmul.f32 %v2158, %v2158
      %v2680 = vmul.f32 %v2159, %v2159
      %v2681 = vmul.f32 %v2160, %v2160
      %v2682 = vmul.f32 %v2161, %v2161
      %v2683 = vmul.f32 %v2162, %v2162
      %v2684 = vmul.f32 %v2163, %v2163
      %v2685 = vmul.f32 %v2164, %v2164
      %v2686 = vmul.f32 %v2165, %v2165
      %v2687 = vmul.f32 %v2166, %v2166
      %v2688 = vmul.f32 %v2167, %v2167
      %v2689 = vmul.f32 %v2168, %v2168
      %v2690 = vmul.f32 %v2169, %v2169
      %v2691 = vmul.f32 %v2170, %v2170
      %v2692 = vmul.f32 %v2171, %v2171
      %v2693 = vmul.f32 %v2172, %v2172
      %v2694 = vmul.f32 %v2173, %v2173
      %v2695 = vmul.f32 %v2174, %v2174
      %v2696 = vmul.f32 %v2175, %v2175
      %v2697 = vmul.f32 %v2176, %v2176
      %v2698 = vmul.f32 %v2177, %v2177
      %v2699 = vmul.f32 %v2178, %v2178
      %v2700 = vmul.f32 %v2179, %v2179
      %v2701 = vsel %vm2501, %v2637, 0.0
      %v2702 = vsel %vm2501, %v2638, 0.0
      %v2703 = vadd.f32 %v2701, %v2702
      %v2704 = vsel %vm2501, %v2639, 0.0
      %v2705 = vadd.f32 %v2703, %v2704
      %v2706 = vsel %vm2501, %v2640, 0.0
      %v2707 = vadd.f32 %v2705, %v2706
      %v2708 = vsel %vm2501, %v2641, 0.0
      %v2709 = vadd.f32 %v2707, %v2708
      %v2710 = vsel %vm2501, %v2642, 0.0
      %v2711 = vadd.f32 %v2709, %v2710
      %v2712 = vsel %vm2501, %v2643, 0.0
      %v2713 = vadd.f32 %v2711, %v2712
      %v2714 = vsel %vm2501, %v2644, 0.0
      %v2715 = vadd.f32 %v2713, %v2714
      %v2716 = vsel %vm2501, %v2645, 0.0
      %v2717 = vadd.f32 %v2715, %v2716
      %v2718 = vsel %vm2501, %v2646, 0.0
      %v2719 = vadd.f32 %v2717, %v2718
      %v2720 = vsel %vm2501, %v2647, 0.0
      %v2721 = vadd.f32 %v2719, %v2720
      %v2722 = vsel %vm2501, %v2648, 0.0
      %v2723 = vadd.f32 %v2721, %v2722
      %v2724 = vsel %vm2501, %v2649, 0.0
      %v2725 = vadd.f32 %v2723, %v2724
      %v2726 = vsel %vm2501, %v2650, 0.0
      %v2727 = vadd.f32 %v2725, %v2726
      %v2728 = vsel %vm2501, %v2651, 0.0
      %v2729 = vadd.f32 %v2727, %v2728
      %v2730 = vsel %vm2501, %v2652, 0.0
      %v2731 = vadd.f32 %v2729, %v2730
      %v2732 = vsel %vm2501, %v2653, 0.0
      %v2733 = vadd.f32 %v2731, %v2732
      %v2734 = vsel %vm2501, %v2654, 0.0
      %v2735 = vadd.f32 %v2733, %v2734
      %v2736 = vsel %vm2501, %v2655, 0.0
      %v2737 = vadd.f32 %v2735, %v2736
      %v2738 = vsel %vm2501, %v2656, 0.0
      %v2739 = vadd.f32 %v2737, %v2738
      %v2740 = vsel %vm2501, %v2657, 0.0
      %v2741 = vadd.f32 %v2739, %v2740
      %v2742 = vsel %vm2501, %v2658, 0.0
      %v2743 = vadd.f32 %v2741, %v2742
      %v2744 = vsel %vm2501, %v2659, 0.0
      %v2745 = vadd.f32 %v2743, %v2744
      %v2746 = vsel %vm2501, %v2660, 0.0
      %v2747 = vadd.f32 %v2745, %v2746
      %v2748 = vsel %vm2501, %v2661, 0.0
      %v2749 = vadd.f32 %v2747, %v2748
      %v2750 = vsel %vm2501, %v2662, 0.0
      %v2751 = vadd.f32 %v2749, %v2750
      %v2752 = vsel %vm2501, %v2663, 0.0
      %v2753 = vadd.f32 %v2751, %v2752
      %v2754 = vsel %vm2501, %v2664, 0.0
      %v2755 = vadd.f32 %v2753, %v2754
      %v2756 = vsel %vm2501, %v2665, 0.0
      %v2757 = vadd.f32 %v2755, %v2756
      %v2758 = vsel %vm2501, %v2666, 0.0
      %v2759 = vadd.f32 %v2757, %v2758
      %v2760 = vsel %vm2501, %v2667, 0.0
      %v2761 = vadd.f32 %v2759, %v2760
      %v2762 = vsel %vm2501, %v2668, 0.0
      %v2763 = vadd.f32 %v2761, %v2762
      %v2764 = vsel %vm2501, %v2669, 0.0
      %v2765 = vadd.f32 %v2763, %v2764
      %v2766 = vsel %vm2501, %v2670, 0.0
      %v2767 = vadd.f32 %v2765, %v2766
      %v2768 = vsel %vm2501, %v2671, 0.0
      %v2769 = vadd.f32 %v2767, %v2768
      %v2770 = vsel %vm2501, %v2672, 0.0
      %v2771 = vadd.f32 %v2769, %v2770
      %v2772 = vsel %vm2501, %v2673, 0.0
      %v2773 = vadd.f32 %v2771, %v2772
      %v2774 = vsel %vm2501, %v2674, 0.0
      %v2775 = vadd.f32 %v2773, %v2774
      %v2776 = vsel %vm2501, %v2675, 0.0
      %v2777 = vadd.f32 %v2775, %v2776
      %v2778 = vsel %vm2501, %v2676, 0.0
      %v2779 = vadd.f32 %v2777, %v2778
      %v2780 = vsel %vm2501, %v2677, 0.0
      %v2781 = vadd.f32 %v2779, %v2780
      %v2782 = vsel %vm2501, %v2678, 0.0
      %v2783 = vadd.f32 %v2781, %v2782
      %v2784 = vsel %vm2501, %v2679, 0.0
      %v2785 = vadd.f32 %v2783, %v2784
      %v2786 = vsel %vm2501, %v2680, 0.0
      %v2787 = vadd.f32 %v2785, %v2786
      %v2788 = vsel %vm2501, %v2681, 0.0
      %v2789 = vadd.f32 %v2787, %v2788
      %v2790 = vsel %vm2501, %v2682, 0.0
      %v2791 = vadd.f32 %v2789, %v2790
      %v2792 = vsel %vm2501, %v2683, 0.0
      %v2793 = vadd.f32 %v2791, %v2792
      %v2794 = vsel %vm2501, %v2684, 0.0
      %v2795 = vadd.f32 %v2793, %v2794
      %v2796 = vsel %vm2501, %v2685, 0.0
      %v2797 = vadd.f32 %v2795, %v2796
      %v2798 = vsel %vm2501, %v2686, 0.0
      %v2799 = vadd.f32 %v2797, %v2798
      %v2800 = vsel %vm2501, %v2687, 0.0
      %v2801 = vadd.f32 %v2799, %v2800
      %v2802 = vsel %vm2501, %v2688, 0.0
      %v2803 = vadd.f32 %v2801, %v2802
      %v2804 = vsel %vm2501, %v2689, 0.0
      %v2805 = vadd.f32 %v2803, %v2804
      %v2806 = vsel %vm2501, %v2690, 0.0
      %v2807 = vadd.f32 %v2805, %v2806
      %v2808 = vsel %vm2501, %v2691, 0.0
      %v2809 = vadd.f32 %v2807, %v2808
      %v2810 = vsel %vm2501, %v2692, 0.0
      %v2811 = vadd.f32 %v2809, %v2810
      %v2812 = vsel %vm2501, %v2693, 0.0
      %v2813 = vadd.f32 %v2811, %v2812
      %v2814 = vsel %vm2501, %v2694, 0.0
      %v2815 = vadd.f32 %v2813, %v2814
      %v2816 = vsel %vm2501, %v2695, 0.0
      %v2817 = vadd.f32 %v2815, %v2816
      %v2818 = vsel %vm2501, %v2696, 0.0
      %v2819 = vadd.f32 %v2817, %v2818
      %v2820 = vsel %vm2501, %v2697, 0.0
      %v2821 = vadd.f32 %v2819, %v2820
      %v2822 = vsel %vm2501, %v2698, 0.0
      %v2823 = vadd.f32 %v2821, %v2822
      %v2824 = vsel %vm2501, %v2699, 0.0
      %v2825 = vadd.f32 %v2823, %v2824
      %v2826 = vsel %vm2501, %v2700, 0.0
      %v2827 = vadd.f32 %v2825, %v2826
      %v2828 = vrot.slane %v2827, 4
      %v2829 = vadd.f32 %v2827, %v2828
      %v2830 = vrot.slane %v2829, 2
      %v2831 = vadd.f32 %v2829, %v2830
      %v2832 = vrot.slane %v2831, 1
      %v2833 = vadd.f32 %v2831, %v2832
      %2834 = vst.msk [vmem:[%s214] sm:$0x1] %vm2635, %v2833
      %p2835 = scmp.lt.s32.totalorder %s16, 1
      %s2836 = scalar_select %p2835, %s16, 1
      %s2837 = smul.addr %s2836, 64
      %s2838 = smul.addr %s2837, 4
      %s2839 = scalar_lea.vmem %s2, %s2838
      %p2840 = scmp.lt.s32.totalorder %s16, 1
      %s2841 = scalar_select %p2840, %s16, 1
      %s2842 = scalar_lea.vmem %s3, %s2841
      %p2843 = scmp.lt.s32.totalorder %s16, 1
      %s2844 = scalar_select %p2843, %s16, 1
      %s2845 = scalar_lea.vmem %s4, %s2844
      // Predicated region
      $region29: #{down_forward.4} parent=27 // pred_check
        %p2846 = pneg %p81
      $region30: #{down_forward.4} parent=27 // pred_check_branch
        %2848 = sbr.rel (%p2846) target = $region32
      $region31: #{down_forward.4} parent=27 // pred_region
        _
      $region32: #{down_forward.4} parent=27 // pred_fallthru
        _
      // Predicated region
      $region33: #{down_forward.4} parent=27 // pred_check
        %p2849 = pneg %p107
      $region34: #{down_forward.4} parent=27 // pred_check_branch
        %2851 = sbr.rel (%p2849) target = $region36
      $region35: #{down_forward.4} parent=27 // pred_region
        _
      $region36: #{down_forward.4} parent=27 // pred_fallthru
        _
      // Predicated region
      $region37: #{down_forward.4} parent=27 // pred_check
        %p2852 = pneg %p133
      $region38: #{down_forward.4} parent=27 // pred_check_branch
        %2854 = sbr.rel (%p2852) target = $region40
      $region39: #{down_forward.4} parent=27 // pred_region
        _
      $region40: #{down_forward.4} parent=27 // pred_fallthru
        _
    $region28: #{down_forward.4} parent=5 // pred_fallthru
      _
    %p2855 = scmp.le.s32.totalorder 2, %s11
    // Predicated region
    $region41: #{down_forward.4} parent=5 // pred_check
      %p2856 = pneg %p2855
    $region42: #{down_forward.4} parent=5 // pred_check_branch
      %2858 = sbr.rel (%p2856) target = $region44
    $region43: #{down_forward.4} parent=5 // pred_region
      %s2859 = ssub.s32 %s11, 2
      // Predicated region
      $region45: #{down_forward.4} parent=43 // pred_check
        %p2860 = pneg %p87
      $region46: #{down_forward.4} parent=43 // pred_check_branch
        %2862 = sbr.rel (%p2860) target = $region48
      $region47: #{down_forward.4} parent=43 // pred_region
        %p2863 = scmp.lt.s32.totalorder %s17, 1
        %s2864 = scalar_select %p2863, %s17, 1
        %s2865 = smul.addr %s2864, 64
        %s2866 = smul.addr %s2865, 4
        %s2867 = scalar_lea.vmem %s2, %s2866
      $region48: #{down_forward.4} parent=43 // pred_fallthru
        _
      // Predicated region
      $region49: #{down_forward.4} parent=43 // pred_check
        %p2868 = pneg %p113
      $region50: #{down_forward.4} parent=43 // pred_check_branch
        %2870 = sbr.rel (%p2868) target = $region52
      $region51: #{down_forward.4} parent=43 // pred_region
        %p2871 = scmp.lt.s32.totalorder %s17, 1
        %s2872 = scalar_select %p2871, %s17, 1
        %s2873 = scalar_lea.vmem %s3, %s2872
      $region52: #{down_forward.4} parent=43 // pred_fallthru
        _
      // Predicated region
      $region53: #{down_forward.4} parent=43 // pred_check
        %p2874 = pneg %p139
      $region54: #{down_forward.4} parent=43 // pred_check_branch
        %2876 = sbr.rel (%p2874) target = $region56
      $region55: #{down_forward.4} parent=43 // pred_region
        %p2877 = scmp.lt.s32.totalorder %s17, 1
        %s2878 = scalar_select %p2877, %s17, 1
        %s2879 = scalar_lea.vmem %s4, %s2878
      $region56: #{down_forward.4} parent=43 // pred_fallthru
        _
    $region44: #{down_forward.4} parent=5 // pred_fallthru
      _
  $region6: #{down_forward.4} parent=0 // loop_footer
    %s15 = sadd.s32 1, %s11
  $region7: #{down_forward.4} parent=0 // loop_footer_branch
    %10 = sbr.rel target = $region3
  $region8: #{down_forward.4} parent=0 // loop_exit
    _

// kernel: tile.23
$region0: #{tile.23}
  #allocation0 [shape = 's32[1]{0}', space=sflag, size = 0x4, scoped, tag = 'scoped memory for tile.23']
  %s0 = inlined_call_operand.vmem [shape: f32[8], index: 0, kind: input, shape index: {}]
  %s1 = inlined_call_operand.vmem [shape: f32[16,8], index: 1, kind: output, shape index: {}]
  // Predicated region
  $region2: #{tile.23} parent=0 // pred_check
    _
  $region3: #{tile.23} parent=0 // pred_check_branch
    %3 = sbr.rel (0) target = $region5
  $region4: #{tile.23} parent=0 // pred_region
    _
  $region5: #{tile.23} parent=0 // pred_fallthru
    _
  %v4 = vld [vmem:[%s0] ss:$0 sm:$0xff]
  %5 = vst [vmem:[%s1] sm:$0xff] %v4
  %s6 = scalar_lea.vmem %s1, 8
  %7 = vst [vmem:[%s6] sm:$0xff] %v4

// kernel: tile.24
$region0: #{tile.24}
  %s0 = inlined_call_operand.vmem [shape: f32[16,8], index: 0, kind: input, shape index: {}]
  %s1 = inlined_call_operand.vmem [shape: f32[1,128], index: 1, kind: output, shape index: {}]
  $region1: #{tile.24} parent=0
    #allocation0 [shape = 'u8[4096]{0}', space=vmem, size = 0x1000, scoped, tag = 'scoped mem for output reshape']
    %v2 = vld [vmem:[%s0] sm:$0x1]
    %vm3 = vcmask 64512
    %4 = vst.msk [vmem:[#allocation0] sm:$0x1] %vm3, %v2
    %s5 = scalar_lea.vmem %s0, 15
    %v6 = vld [vmem:[%s5] sm:$0x1]
    %7 = vrot.lane.b32.xlu0 %v6, 120
    %v8 = vpop.permute.xlu0 %7
    %vm9 = vcmask 1048512
    %10 = vst.msk [vmem:[#allocation0] sm:$0x1] %vm9, %v8
    %s11 = scalar_lea.vmem %s0, 14
    %v12 = vld [vmem:[%s11] sm:$0x1]
    %13 = vrot.lane.b32.xlu0 %v12, 112
    %v14 = vpop.permute.xlu0 %13
    %vm15 = vcmask 982912
    %16 = vst.msk [vmem:[#allocation0] sm:$0x1] %vm15, %v14
    %s17 = scalar_lea.vmem %s0, 13
    %v18 = vld [vmem:[%s17] sm:$0x1]
    %19 = vrot.lane.b32.xlu0 %v18, 104
    %v20 = vpop.permute.xlu0 %19
    %vm21 = vcmask 917312
    %22 = vst.msk [vmem:[#allocation0] sm:$0x1] %vm21, %v20
    %s23 = scalar_lea.vmem %s0, 12
    %v24 = vld [vmem:[%s23] sm:$0x1]
    %25 = vrot.lane.b32.xlu0 %v24, 96
    %v26 = vpop.permute.xlu0 %25
    %vm27 = vcmask 851712
    %28 = vst.msk [vmem:[#allocation0] sm:$0x1] %vm27, %v26
    %s29 = scalar_lea.vmem %s0, 11
    %v30 = vld [vmem:[%s29] sm:$0x1]
    %31 = vrot.lane.b32.xlu0 %v30, 88
    %v32 = vpop.permute.xlu0 %31
    %vm33 = vcmask 786112
    %34 = vst.msk [vmem:[#allocation0] sm:$0x1] %vm33, %v32
    %s35 = scalar_lea.vmem %s0, 10
    %v36 = vld [vmem:[%s35] sm:$0x1]
    %37 = vrot.lane.b32.xlu0 %v36, 80
    %v38 = vpop.permute.xlu0 %37
    %vm39 = vcmask 720512
    %40 = vst.msk [vmem:[#allocation0] sm:$0x1] %vm39, %v38
    %s41 = scalar_lea.vmem %s0, 9
    %v42 = vld [vmem:[%s41] sm:$0x1]
    %43 = vrot.lane.b32.xlu0 %v42, 72
    %v44 = vpop.permute.xlu0 %43
    %vm45 = vcmask 654912
    %46 = vst.msk [vmem:[#allocation0] sm:$0x1] %vm45, %v44
    %s47 = scalar_lea.vmem %s0, 8
    %v48 = vld [vmem:[%s47] sm:$0x1]
    %49 = vrot.lane.b32.xlu0 %v48, 64
    %v50 = vpop.permute.xlu0 %49
    %vm51 = vcmask 589312
    %52 = vst.msk [vmem:[#allocation0] sm:$0x1] %vm51, %v50
    %s53 = scalar_lea.vmem %s0, 7
    %v54 = vld [vmem:[%s53] sm:$0x1]
    %55 = vrot.lane.b32.xlu0 %v54, 56
    %v56 = vpop.permute.xlu0 %55
    %vm57 = vcmask 523712
    %58 = vst.msk [vmem:[#allocation0] sm:$0x1] %vm57, %v56
    %s59 = scalar_lea.vmem %s0, 6
    %v60 = vld [vmem:[%s59] sm:$0x1]
    %61 = vrot.lane.b32.xlu0 %v60, 48
    %v62 = vpop.permute.xlu0 %61
    %vm63 = vcmask 458112
    %64 = vst.msk [vmem:[#allocation0] sm:$0x1] %vm63, %v62
    %s65 = scalar_lea.vmem %s0, 5
    %v66 = vld [vmem:[%s65] sm:$0x1]
    %67 = vrot.lane.b32.xlu0 %v66, 40
    %v68 = vpop.permute.xlu0 %67
    %vm69 = vcmask 392512
    %70 = vst.msk [vmem:[#allocation0] sm:$0x1] %vm69, %v68
    %s71 = scalar_lea.vmem %s0, 4
    %v72 = vld [vmem:[%s71] sm:$0x1]
    %73 = vrot.lane.b32.xlu0 %v72, 32
    %v74 = vpop.permute.xlu0 %73
    %vm75 = vcmask 326912
    %76 = vst.msk [vmem:[#allocation0] sm:$0x1] %vm75, %v74
    %s77 = scalar_lea.vmem %s0, 3
    %v78 = vld [vmem:[%s77] sm:$0x1]
    %79 = vrot.lane.b32.xlu0 %v78, 24
    %v80 = vpop.permute.xlu0 %79
    %vm81 = vcmask 261312
    %82 = vst.msk [vmem:[#allocation0] sm:$0x1] %vm81, %v80
    %s83 = scalar_lea.vmem %s0, 2
    %v84 = vld [vmem:[%s83] sm:$0x1]
    %85 = vrot.lane.b32.xlu0 %v84, 16
    %v86 = vpop.permute.xlu0 %85
    %vm87 = vcmask 195712
    %88 = vst.msk [vmem:[#allocation0] sm:$0x1] %vm87, %v86
    %s89 = scalar_lea.vmem %s0, 1
    %v90 = vld [vmem:[%s89] sm:$0x1]
    %91 = vrot.lane.b32.xlu0 %v90, 8
    %v92 = vpop.permute.xlu0 %91
    %vm93 = vcmask 130112
    %94 = vst.msk [vmem:[#allocation0] sm:$0x1] %vm93, %v92
    %s96 = sshllo.u32 0, 1
    %v98 = vld [vmem:[#allocation0] sm:%s96]
    %s99 = sshllo.u32 0, 1
    %100 = vst [vmem:[%s1] sm:%s99] %v98

// kernel: down_forward.5
$region0: #{down_forward.5}
  #allocation0 [shape = 'u32[]', space=smem, size = 0x4, offset = 0x4, fixed_abs, tag = 'smem constant byte address 0x4 - core index']
  #allocation1 [shape = 'u32[144,128]{1,0:T(1,128)}', space=vmem, size = 0x12000, scoped, tag = 'internal scratch']
  %s0 = inlined_call_operand.vmem [shape: bf16[64,128], index: 0, kind: input, shape index: {}]
  %s1 = inlined_call_operand.vmem [shape: f32[1,128], index: 1, kind: input, shape index: {}]
  %s2 = inlined_call_operand.vmem [shape: f32[1,128], index: 2, kind: input, shape index: {}]
  %s3 = inlined_call_operand.vmem [shape: bf16[64,128], index: 3, kind: output, shape index: {}]
  %s4 = sld [smem:[#allocation0]]
  $region45: #{down_forward.5} parent=0
    _
  %s6 = ssub.s32 1, %s4
  %s7 = scalar_select 0, %s6, %s4
  loop: start=0, step=1, limit=4
  $region2: #{down_forward.5} parent=0 // loop_pre_header
    _
  $region3: #{down_forward.5} parent=0 // loop_header
    %s9 = sphi 0, %s13
    %p10 = scmp.ge.s32.totalorder %s9, 4
    %s19 = sphi 0, %s21
    %s22 = sphi 0, %s19
    %s23 = sphi 0, %s22
    %s39 = sphi 0, %s23
    %s43 = sphi 0, %s43
    %s45 = sphi 0, %s43
    %s46 = sphi 0, %s45
    %s60 = sphi 0, %s46
    %s64 = sphi 0, %s64
    %s66 = sphi 0, %s64
    %s67 = sphi 0, %s66
    %s81 = sphi 0, %s67
    %s87 = sphi 0, %s89
    %s90 = sphi 0, %s87
    %s91 = sphi 0, %s90
    %s107 = sphi 0, %s91
  $region4: #{down_forward.5} parent=0 // loop_header_branch
    %12 = sbr.rel (%p10) target = $region8
  $region5: #{down_forward.5} parent=0 // loop_body
    %s14 = ssub.s32 %s9, 1
    %s15 = ssub.s32 %s9, 2
    %s16 = sadd.s32 %s9, 1
    %s17 = ssub.s32 %s9, %s16
    %p18 = scmp.eq.s32.totalorder %s17, 0
    %s20 = sadd.s32 %s19, 1
    %s21 = scalar_select %p18, %s19, %s20
    %p24 = pneg %p18
    %p25 = scmp.eq.s32.totalorder %s9, 1
    %p26 = por %p24, %p25
    %p27 = scmp.ne.s32.totalorder %s19, %s22
    %p28 = scmp.eq.s32.totalorder %s9, 0
    %p29 = por %p27, %p28
    %p30 = scmp.ne.s32.totalorder %s19, %s22
    %p31 = scmp.eq.s32.totalorder %s14, 1
    %p32 = por %p30, %p31
    %p33 = scmp.ne.s32.totalorder %s22, %s23
    %p34 = scmp.eq.s32.totalorder %s14, 0
    %p35 = por %p33, %p34
    %p36 = scmp.ne.s32.totalorder %s22, %s23
    %p37 = scmp.eq.s32.totalorder %s15, 1
    %p38 = por %p36, %p37
    %p40 = scmp.ne.s32.totalorder %s23, %s39
    %p41 = scmp.eq.s32.totalorder %s15, 0
    %p42 = por %p40, %p41
    %s44 = sadd.s32 %s43, 1
    %p47 = scmp.eq.s32.totalorder %s9, 1
    %p48 = scmp.ne.s32.totalorder %s43, %s45
    %p49 = scmp.eq.s32.totalorder %s9, 0
    %p50 = por %p48, %p49
    %p51 = scmp.ne.s32.totalorder %s43, %s45
    %p52 = scmp.eq.s32.totalorder %s14, 1
    %p53 = por %p51, %p52
    %p54 = scmp.ne.s32.totalorder %s45, %s46
    %p55 = scmp.eq.s32.totalorder %s14, 0
    %p56 = por %p54, %p55
    %p57 = scmp.ne.s32.totalorder %s45, %s46
    %p58 = scmp.eq.s32.totalorder %s15, 1
    %p59 = por %p57, %p58
    %p61 = scmp.ne.s32.totalorder %s46, %s60
    %p62 = scmp.eq.s32.totalorder %s15, 0
    %p63 = por %p61, %p62
    %s65 = sadd.s32 %s64, 1
    %p68 = scmp.eq.s32.totalorder %s9, 1
    %p69 = scmp.ne.s32.totalorder %s64, %s66
    %p70 = scmp.eq.s32.totalorder %s9, 0
    %p71 = por %p69, %p70
    %p72 = scmp.ne.s32.totalorder %s64, %s66
    %p73 = scmp.eq.s32.totalorder %s14, 1
    %p74 = por %p72, %p73
    %p75 = scmp.ne.s32.totalorder %s66, %s67
    %p76 = scmp.eq.s32.totalorder %s14, 0
    %p77 = por %p75, %p76
    %p78 = scmp.ne.s32.totalorder %s66, %s67
    %p79 = scmp.eq.s32.totalorder %s15, 1
    %p80 = por %p78, %p79
    %p82 = scmp.ne.s32.totalorder %s67, %s81
    %p83 = scmp.eq.s32.totalorder %s15, 0
    %p84 = por %p82, %p83
    %s85 = ssub.s32 %s9, %s16
    %p86 = scmp.eq.s32.totalorder %s85, 0
    %s88 = sadd.s32 %s87, 1
    %s89 = scalar_select %p86, %s87, %s88
    %p92 = pneg %p86
    %p93 = scmp.eq.s32.totalorder %s9, 1
    %p94 = por %p92, %p93
    %p95 = scmp.ne.s32.totalorder %s87, %s90
    %p96 = scmp.eq.s32.totalorder %s9, 0
    %p97 = por %p95, %p96
    %p98 = scmp.ne.s32.totalorder %s87, %s90
    %p99 = scmp.eq.s32.totalorder %s14, 1
    %p100 = por %p98, %p99
    %p101 = scmp.ne.s32.totalorder %s90, %s91
    %p102 = scmp.eq.s32.totalorder %s14, 0
    %p103 = por %p101, %p102
    %p104 = scmp.ne.s32.totalorder %s90, %s91
    %p105 = scmp.eq.s32.totalorder %s15, 1
    %p106 = por %p104, %p105
    %p108 = scmp.ne.s32.totalorder %s91, %s107
    %p109 = scmp.eq.s32.totalorder %s15, 0
    %p110 = por %p108, %p109
    %p111 = scmp.le.s32.totalorder 1, %s9
    %p112 = scmp.lt.s32.totalorder %s9, 3
    %p113 = pnand %p111, %p112
    %p114 = pneg %p113
    // Predicated region
    $region9: #{down_forward.5} parent=5 // pred_check
      _
    $region10: #{down_forward.5} parent=5 // pred_check_branch
      %116 = sbr.rel (%p113) target = $region12
    $region11: #{down_forward.5} parent=5 // pred_region
      %s117 = ssub.s32 %s9, 1
      // Predicated region
      $region13: #{down_forward.5} parent=11 // pred_check
        %p118 = pneg %p56
      $region14: #{down_forward.5} parent=11 // pred_check_branch
        %120 = sbr.rel (%p118) target = $region16
      $region15: #{down_forward.5} parent=11 // pred_region
        _
      $region16: #{down_forward.5} parent=11 // pred_fallthru
        _
      // Predicated region
      $region17: #{down_forward.5} parent=11 // pred_check
        %p121 = pneg %p77
      $region18: #{down_forward.5} parent=11 // pred_check_branch
        %123 = sbr.rel (%p121) target = $region20
      $region19: #{down_forward.5} parent=11 // pred_region
        _
      $region20: #{down_forward.5} parent=11 // pred_fallthru
        _
    $region12: #{down_forward.5} parent=5 // pred_fallthru
      _
    %p124 = scmp.lt.s32.totalorder %s9, 2
    // Predicated region
    $region21: #{down_forward.5} parent=5 // pred_check
      %p125 = pneg %p124
    $region22: #{down_forward.5} parent=5 // pred_check_branch
      %127 = sbr.rel (%p125) target = $region24
    $region23: #{down_forward.5} parent=5 // pred_region
      // Predicated region
      $region25: #{down_forward.5} parent=23 // pred_check
        %p128 = pneg %p29
      $region26: #{down_forward.5} parent=23 // pred_check_branch
        %130 = sbr.rel (%p128) target = $region28
      $region27: #{down_forward.5} parent=23 // pred_region
        %s131 = smul.u32 4, %s9
        %p132 = scmp.lt.s32.totalorder %s131, 7
        %s133 = scalar_select %p132, %s131, 7
        %s134 = smul.addr %s133, 4
        %s135 = scalar_lea.vmem %s0, %s134
        %s136 = smul.u32 4, %s9
      $region28: #{down_forward.5} parent=23 // pred_fallthru
        _
    $region24: #{down_forward.5} parent=5 // pred_fallthru
      _
    %p137 = scmp.le.s32.totalorder 1, %s9
    %p138 = scmp.lt.s32.totalorder %s9, 3
    %p139 = pnand %p137, %p138
    %p140 = pneg %p139
    // Predicated region
    $region29: #{down_forward.5} parent=5 // pred_check
      _
    $region30: #{down_forward.5} parent=5 // pred_check_branch
      %142 = sbr.rel (%p139) target = $region32
    $region31: #{down_forward.5} parent=5 // pred_region
      %s143 = ssub.s32 %s9, 1
      %s144 = smul.u32 4, %s14
      %p145 = scmp.lt.s32.totalorder %s144, 7
      %s146 = scalar_select %p145, %s144, 7
      %s147 = smul.addr %s146, 4
      %s148 = scalar_lea.vmem %s0, %s147
      %p149 = pneg %p35
      %p150 = pneg %p32
      %p151 = pneg %p56
      %p152 = pneg %p53
      %p153 = pneg %p77
      %p154 = pneg %p74
      %p155 = pneg %p103
      %p156 = pneg %p100
      %s157 = smul.u32 4, %s14
      %p158 = scmp.lt.s32.totalorder %s157, 7
      %s159 = scalar_select %p158, %s157, 7
      %s160 = smul.addr %s159, 4
      %s161 = scalar_lea.vmem %s3, %s160
      %s162 = smul.u32 4, %s14
      %p163 = scmp.lt.s32.totalorder %s162, 7
      %s164 = scalar_select %p163, %s162, 7
      %s165 = smul.addr %s164, 4
      %s166 = scalar_lea.vmem %s0, %s165
      %s167 = smul.u32 4, %s14
      %s168 = smul.u32 4, %s14
      %p169 = scmp.lt.s32.totalorder %s168, 7
      %s170 = scalar_select %p169, %s168, 7
      %s171 = smul.addr %s170, 4
      %s172 = scalar_lea.vmem %s3, %s171
      %s173 = smul.u32 4, %s14
      %v174 = vld [vmem:[%s166] sm:$0xf]
      %v175 = vld [vmem:[%s166 + $0x4] sm:$0xf]
      %v176 = vld [vmem:[%s166 + $0x8] sm:$0xf]
      %v177 = vld [vmem:[%s166 + $0xc] sm:$0xf]
      %v178 = vunpack.c.l.bf16 %v174
      %v179 = vunpack.c.l.bf16 %v175
      %v180 = vunpack.c.l.bf16 %v176
      %v181 = vunpack.c.l.bf16 %v177
      %v182 = vld [vmem:[%s1] sm:$0x1]
      %v184 = vlaneseq
      %v185 = vshrl.u32 %v184, 7
      %v186 = vsub.s32 0, %v185
      %v187 = vrot.slane %v182, %v186
      %v189 = vmul.f32 %v178, %v187
      %v190 = vmul.f32 %v179, %v187
      %v191 = vmul.f32 %v180, %v187
      %v192 = vmul.f32 %v181, %v187
      %v193 = vld [vmem:[%s2] sm:$0x1]
      %v195 = vlaneseq
      %v196 = vshrl.u32 %v195, 7
      %v197 = vsub.s32 0, %v196
      %v198 = vrot.slane %v193, %v197
      %v200 = vadd.f32 %v189, %v198
      %v201 = vadd.f32 %v190, %v198
      %v202 = vadd.f32 %v191, %v198
      %v203 = vadd.f32 %v192, %v198
      %v204 = vmax.f32 %v200, 0.0
      %v205 = vmax.f32 %v201, 0.0
      %v206 = vmax.f32 %v202, 0.0
      %v207 = vmax.f32 %v203, 0.0
      %v208 = vpack.c.bf16 %v205, %v204
      %v209 = vpack.c.bf16 %v207, %v206
      %v212 = vunpack.c.l.b16 %v208
      %v213 = vunpack.c.h.b16 %v208
      %v214 = vunpack.c.l.b16 %v209
      %v215 = vunpack.c.h.b16 %v209
      %v216 = vpack.c.b16 %v212, %v212
      %v217 = vpack.c.b16 %v213, %v213
      %v218 = vpack.c.b16 %v214, %v214
      %v219 = vpack.c.b16 %v215, %v215
      %224 = vst [vmem:[%s172] sm:$0xf] %v216
      %225 = vst [vmem:[%s172 + $0x4] sm:$0xf] %v217
      %226 = vst [vmem:[%s172 + $0x8] sm:$0xf] %v218
      %227 = vst [vmem:[%s172 + $0xc] sm:$0xf] %v219
      %s228 = smul.u32 4, %s14
      %p229 = scmp.lt.s32.totalorder %s228, 7
      %s230 = scalar_select %p229, %s228, 7
      %s231 = smul.addr %s230, 4
      %s232 = scalar_lea.vmem %s3, %s231
      // Predicated region
      $region33: #{down_forward.5} parent=31 // pred_check
        %p233 = pneg %p100
      $region34: #{down_forward.5} parent=31 // pred_check_branch
        %235 = sbr.rel (%p233) target = $region36
      $region35: #{down_forward.5} parent=31 // pred_region
        %s236 = smul.u32 4, %s14
      $region36: #{down_forward.5} parent=31 // pred_fallthru
        _
    $region32: #{down_forward.5} parent=5 // pred_fallthru
      _
    %p237 = scmp.le.s32.totalorder 2, %s9
    // Predicated region
    $region37: #{down_forward.5} parent=5 // pred_check
      %p238 = pneg %p237
    $region38: #{down_forward.5} parent=5 // pred_check_branch
      %240 = sbr.rel (%p238) target = $region40
    $region39: #{down_forward.5} parent=5 // pred_region
      %s241 = ssub.s32 %s9, 2
      // Predicated region
      $region41: #{down_forward.5} parent=39 // pred_check
        %p242 = pneg %p106
      $region42: #{down_forward.5} parent=39 // pred_check_branch
        %244 = sbr.rel (%p242) target = $region44
      $region43: #{down_forward.5} parent=39 // pred_region
        %s245 = smul.u32 4, %s15
        %p246 = scmp.lt.s32.totalorder %s245, 7
        %s247 = scalar_select %p246, %s245, 7
        %s248 = smul.addr %s247, 4
        %s249 = scalar_lea.vmem %s3, %s248
      $region44: #{down_forward.5} parent=39 // pred_fallthru
        _
    $region40: #{down_forward.5} parent=5 // pred_fallthru
      _
  $region6: #{down_forward.5} parent=0 // loop_footer
    %s13 = sadd.s32 1, %s9
  $region7: #{down_forward.5} parent=0 // loop_footer_branch
    %8 = sbr.rel target = $region3
  $region8: #{down_forward.5} parent=0 // loop_exit
    _

// kernel: down_forward.7
$region0: #{down_forward.7}
  #allocation0 [shape = 'u32[]', space=smem, size = 0x4, offset = 0x4, fixed_abs, tag = 'smem constant byte address 0x4 - core index']
  #allocation1 [shape = 'u32[144,128]{1,0:T(1,128)}', space=vmem, size = 0x12000, scoped, tag = 'internal scratch']
  %s0 = inlined_call_operand.vmem [shape: bf16[64,128], index: 0, kind: input, shape index: {}]
  %s1 = inlined_call_operand.vmem [shape: f32[1,128], index: 1, kind: input, shape index: {}]
  %s2 = inlined_call_operand.vmem [shape: f32[1,128], index: 2, kind: input, shape index: {}]
  %s3 = inlined_call_operand.vmem [shape: f32[64,128], index: 3, kind: output, shape index: {}]
  %s4 = sld [smem:[#allocation0]]
  $region45: #{down_forward.7} parent=0
    _
  %s6 = ssub.s32 1, %s4
  %s7 = scalar_select 0, %s6, %s4
  loop: start=0, step=1, limit=4
  $region2: #{down_forward.7} parent=0 // loop_pre_header
    _
  $region3: #{down_forward.7} parent=0 // loop_header
    %s9 = sphi 0, %s13
    %p10 = scmp.ge.s32.totalorder %s9, 4
    %s19 = sphi 0, %s21
    %s22 = sphi 0, %s19
    %s23 = sphi 0, %s22
    %s39 = sphi 0, %s23
    %s43 = sphi 0, %s43
    %s45 = sphi 0, %s43
    %s46 = sphi 0, %s45
    %s60 = sphi 0, %s46
    %s64 = sphi 0, %s64
    %s66 = sphi 0, %s64
    %s67 = sphi 0, %s66
    %s81 = sphi 0, %s67
    %s87 = sphi 0, %s89
    %s90 = sphi 0, %s87
    %s91 = sphi 0, %s90
    %s107 = sphi 0, %s91
  $region4: #{down_forward.7} parent=0 // loop_header_branch
    %12 = sbr.rel (%p10) target = $region8
  $region5: #{down_forward.7} parent=0 // loop_body
    %s14 = ssub.s32 %s9, 1
    %s15 = ssub.s32 %s9, 2
    %s16 = sadd.s32 %s9, 1
    %s17 = ssub.s32 %s9, %s16
    %p18 = scmp.eq.s32.totalorder %s17, 0
    %s20 = sadd.s32 %s19, 1
    %s21 = scalar_select %p18, %s19, %s20
    %p24 = pneg %p18
    %p25 = scmp.eq.s32.totalorder %s9, 1
    %p26 = por %p24, %p25
    %p27 = scmp.ne.s32.totalorder %s19, %s22
    %p28 = scmp.eq.s32.totalorder %s9, 0
    %p29 = por %p27, %p28
    %p30 = scmp.ne.s32.totalorder %s19, %s22
    %p31 = scmp.eq.s32.totalorder %s14, 1
    %p32 = por %p30, %p31
    %p33 = scmp.ne.s32.totalorder %s22, %s23
    %p34 = scmp.eq.s32.totalorder %s14, 0
    %p35 = por %p33, %p34
    %p36 = scmp.ne.s32.totalorder %s22, %s23
    %p37 = scmp.eq.s32.totalorder %s15, 1
    %p38 = por %p36, %p37
    %p40 = scmp.ne.s32.totalorder %s23, %s39
    %p41 = scmp.eq.s32.totalorder %s15, 0
    %p42 = por %p40, %p41
    %s44 = sadd.s32 %s43, 1
    %p47 = scmp.eq.s32.totalorder %s9, 1
    %p48 = scmp.ne.s32.totalorder %s43, %s45
    %p49 = scmp.eq.s32.totalorder %s9, 0
    %p50 = por %p48, %p49
    %p51 = scmp.ne.s32.totalorder %s43, %s45
    %p52 = scmp.eq.s32.totalorder %s14, 1
    %p53 = por %p51, %p52
    %p54 = scmp.ne.s32.totalorder %s45, %s46
    %p55 = scmp.eq.s32.totalorder %s14, 0
    %p56 = por %p54, %p55
    %p57 = scmp.ne.s32.totalorder %s45, %s46
    %p58 = scmp.eq.s32.totalorder %s15, 1
    %p59 = por %p57, %p58
    %p61 = scmp.ne.s32.totalorder %s46, %s60
    %p62 = scmp.eq.s32.totalorder %s15, 0
    %p63 = por %p61, %p62
    %s65 = sadd.s32 %s64, 1
    %p68 = scmp.eq.s32.totalorder %s9, 1
    %p69 = scmp.ne.s32.totalorder %s64, %s66
    %p70 = scmp.eq.s32.totalorder %s9, 0
    %p71 = por %p69, %p70
    %p72 = scmp.ne.s32.totalorder %s64, %s66
    %p73 = scmp.eq.s32.totalorder %s14, 1
    %p74 = por %p72, %p73
    %p75 = scmp.ne.s32.totalorder %s66, %s67
    %p76 = scmp.eq.s32.totalorder %s14, 0
    %p77 = por %p75, %p76
    %p78 = scmp.ne.s32.totalorder %s66, %s67
    %p79 = scmp.eq.s32.totalorder %s15, 1
    %p80 = por %p78, %p79
    %p82 = scmp.ne.s32.totalorder %s67, %s81
    %p83 = scmp.eq.s32.totalorder %s15, 0
    %p84 = por %p82, %p83
    %s85 = ssub.s32 %s9, %s16
    %p86 = scmp.eq.s32.totalorder %s85, 0
    %s88 = sadd.s32 %s87, 1
    %s89 = scalar_select %p86, %s87, %s88
    %p92 = pneg %p86
    %p93 = scmp.eq.s32.totalorder %s9, 1
    %p94 = por %p92, %p93
    %p95 = scmp.ne.s32.totalorder %s87, %s90
    %p96 = scmp.eq.s32.totalorder %s9, 0
    %p97 = por %p95, %p96
    %p98 = scmp.ne.s32.totalorder %s87, %s90
    %p99 = scmp.eq.s32.totalorder %s14, 1
    %p100 = por %p98, %p99
    %p101 = scmp.ne.s32.totalorder %s90, %s91
    %p102 = scmp.eq.s32.totalorder %s14, 0
    %p103 = por %p101, %p102
    %p104 = scmp.ne.s32.totalorder %s90, %s91
    %p105 = scmp.eq.s32.totalorder %s15, 1
    %p106 = por %p104, %p105
    %p108 = scmp.ne.s32.totalorder %s91, %s107
    %p109 = scmp.eq.s32.totalorder %s15, 0
    %p110 = por %p108, %p109
    %p111 = scmp.le.s32.totalorder 1, %s9
    %p112 = scmp.lt.s32.totalorder %s9, 3
    %p113 = pnand %p111, %p112
    %p114 = pneg %p113
    // Predicated region
    $region9: #{down_forward.7} parent=5 // pred_check
      _
    $region10: #{down_forward.7} parent=5 // pred_check_branch
      %116 = sbr.rel (%p113) target = $region12
    $region11: #{down_forward.7} parent=5 // pred_region
      %s117 = ssub.s32 %s9, 1
      // Predicated region
      $region13: #{down_forward.7} parent=11 // pred_check
        %p118 = pneg %p56
      $region14: #{down_forward.7} parent=11 // pred_check_branch
        %120 = sbr.rel (%p118) target = $region16
      $region15: #{down_forward.7} parent=11 // pred_region
        _
      $region16: #{down_forward.7} parent=11 // pred_fallthru
        _
      // Predicated region
      $region17: #{down_forward.7} parent=11 // pred_check
        %p121 = pneg %p77
      $region18: #{down_forward.7} parent=11 // pred_check_branch
        %123 = sbr.rel (%p121) target = $region20
      $region19: #{down_forward.7} parent=11 // pred_region
        _
      $region20: #{down_forward.7} parent=11 // pred_fallthru
        _
    $region12: #{down_forward.7} parent=5 // pred_fallthru
      _
    %p124 = scmp.lt.s32.totalorder %s9, 2
    // Predicated region
    $region21: #{down_forward.7} parent=5 // pred_check
      %p125 = pneg %p124
    $region22: #{down_forward.7} parent=5 // pred_check_branch
      %127 = sbr.rel (%p125) target = $region24
    $region23: #{down_forward.7} parent=5 // pred_region
      // Predicated region
      $region25: #{down_forward.7} parent=23 // pred_check
        %p128 = pneg %p29
      $region26: #{down_forward.7} parent=23 // pred_check_branch
        %130 = sbr.rel (%p128) target = $region28
      $region27: #{down_forward.7} parent=23 // pred_region
        %s131 = smul.u32 4, %s9
        %p132 = scmp.lt.s32.totalorder %s131, 7
        %s133 = scalar_select %p132, %s131, 7
        %s134 = smul.addr %s133, 4
        %s135 = scalar_lea.vmem %s0, %s134
        %s136 = smul.u32 4, %s9
      $region28: #{down_forward.7} parent=23 // pred_fallthru
        _
    $region24: #{down_forward.7} parent=5 // pred_fallthru
      _
    %p137 = scmp.le.s32.totalorder 1, %s9
    %p138 = scmp.lt.s32.totalorder %s9, 3
    %p139 = pnand %p137, %p138
    %p140 = pneg %p139
    // Predicated region
    $region29: #{down_forward.7} parent=5 // pred_check
      _
    $region30: #{down_forward.7} parent=5 // pred_check_branch
      %142 = sbr.rel (%p139) target = $region32
    $region31: #{down_forward.7} parent=5 // pred_region
      %s143 = ssub.s32 %s9, 1
      %s144 = smul.u32 4, %s14
      %p145 = scmp.lt.s32.totalorder %s144, 7
      %s146 = scalar_select %p145, %s144, 7
      %s147 = smul.addr %s146, 4
      %s148 = scalar_lea.vmem %s0, %s147
      %p149 = pneg %p35
      %p150 = pneg %p32
      %p151 = pneg %p56
      %p152 = pneg %p53
      %p153 = pneg %p77
      %p154 = pneg %p74
      %p155 = pneg %p103
      %p156 = pneg %p100
      %s157 = smul.u32 4, %s14
      %p158 = scmp.lt.s32.totalorder %s157, 7
      %s159 = scalar_select %p158, %s157, 7
      %s160 = smul.addr %s159, 8
      %s161 = scalar_lea.vmem %s3, %s160
      %s162 = smul.u32 4, %s14
      %p163 = scmp.lt.s32.totalorder %s162, 7
      %s164 = scalar_select %p163, %s162, 7
      %s165 = smul.addr %s164, 4
      %s166 = scalar_lea.vmem %s0, %s165
      %s167 = smul.u32 4, %s14
      %s168 = smul.u32 4, %s14
      %p169 = scmp.lt.s32.totalorder %s168, 7
      %s170 = scalar_select %p169, %s168, 7
      %s171 = smul.addr %s170, 8
      %s172 = scalar_lea.vmem %s3, %s171
      %s173 = smul.u32 4, %s14
      %v174 = vld [vmem:[%s166] sm:$0xf]
      %v175 = vld [vmem:[%s166 + $0x4] sm:$0xf]
      %v176 = vld [vmem:[%s166 + $0x8] sm:$0xf]
      %v177 = vld [vmem:[%s166 + $0xc] sm:$0xf]
      %v178 = vunpack.c.l.bf16 %v174
      %v179 = vunpack.c.l.bf16 %v175
      %v180 = vunpack.c.l.bf16 %v176
      %v181 = vunpack.c.l.bf16 %v177
      %v182 = vld [vmem:[%s1] sm:$0x1]
      %v184 = vlaneseq
      %v185 = vshrl.u32 %v184, 7
      %v186 = vsub.s32 0, %v185
      %v187 = vrot.slane %v182, %v186
      %v189 = vmul.f32 %v178, %v187
      %v190 = vmul.f32 %v179, %v187
      %v191 = vmul.f32 %v180, %v187
      %v192 = vmul.f32 %v181, %v187
      %v193 = vld [vmem:[%s2] sm:$0x1]
      %v195 = vlaneseq
      %v196 = vshrl.u32 %v195, 7
      %v197 = vsub.s32 0, %v196
      %v198 = vrot.slane %v193, %v197
      %v200 = vadd.f32 %v189, %v198
      %v201 = vadd.f32 %v190, %v198
      %v202 = vadd.f32 %v191, %v198
      %v203 = vadd.f32 %v192, %v198
      %v204 = vmax.f32 %v200, 0.0
      %v205 = vmax.f32 %v201, 0.0
      %v206 = vmax.f32 %v202, 0.0
      %v207 = vmax.f32 %v203, 0.0
      %208 = vst [vmem:[%s172] sm:$0xff] %v204
      %209 = vst [vmem:[%s172 + $0x8] sm:$0xff] %v205
      %210 = vst [vmem:[%s172 + $0x10] sm:$0xff] %v206
      %211 = vst [vmem:[%s172 + $0x18] sm:$0xff] %v207
      %s212 = smul.u32 4, %s14
      %p213 = scmp.lt.s32.totalorder %s212, 7
      %s214 = scalar_select %p213, %s212, 7
      %s215 = smul.addr %s214, 8
      %s216 = scalar_lea.vmem %s3, %s215
      // Predicated region
      $region33: #{down_forward.7} parent=31 // pred_check
        %p217 = pneg %p100
      $region34: #{down_forward.7} parent=31 // pred_check_branch
        %219 = sbr.rel (%p217) target = $region36
      $region35: #{down_forward.7} parent=31 // pred_region
        %s220 = smul.u32 4, %s14
      $region36: #{down_forward.7} parent=31 // pred_fallthru
        _
    $region32: #{down_forward.7} parent=5 // pred_fallthru
      _
    %p221 = scmp.le.s32.totalorder 2, %s9
    // Predicated region
    $region37: #{down_forward.7} parent=5 // pred_check
      %p222 = pneg %p221
    $region38: #{down_forward.7} parent=5 // pred_check_branch
      %224 = sbr.rel (%p222) target = $region40
    $region39: #{down_forward.7} parent=5 // pred_region
      %s225 = ssub.s32 %s9, 2
      // Predicated region
      $region41: #{down_forward.7} parent=39 // pred_check
        %p226 = pneg %p106
      $region42: #{down_forward.7} parent=39 // pred_check_branch
        %228 = sbr.rel (%p226) target = $region44
      $region43: #{down_forward.7} parent=39 // pred_region
        %s229 = smul.u32 4, %s15
        %p230 = scmp.lt.s32.totalorder %s229, 7
        %s231 = scalar_select %p230, %s229, 7
        %s232 = smul.addr %s231, 8
        %s233 = scalar_lea.vmem %s3, %s232
      $region44: #{down_forward.7} parent=39 // pred_fallthru
        _
    $region40: #{down_forward.7} parent=5 // pred_fallthru
      _
  $region6: #{down_forward.7} parent=0 // loop_footer
    %s13 = sadd.s32 1, %s9
  $region7: #{down_forward.7} parent=0 // loop_footer_branch
    %8 = sbr.rel target = $region3
  $region8: #{down_forward.7} parent=0 // loop_exit
    _

// kernel: down_forward.6
$region0: #{down_forward.6}
  #allocation0 [shape = 'u32[]', space=smem, size = 0x4, offset = 0x4, fixed_abs, tag = 'smem constant byte address 0x4 - core index']
  #allocation1 [shape = 'u32[144,128]{1,0:T(1,128)}', space=vmem, size = 0x12000, scoped, tag = 'internal scratch']
  %s0 = inlined_call_operand.vmem [shape: bf16[2,10,64,72], index: 0, kind: input, shape index: {}]
  %s1 = inlined_call_operand.vmem [shape: bf16[3,72,8], index: 1, kind: input, shape index: {}]
  %s2 = inlined_call_operand.vmem [shape: bf16[2,512,8], index: 2, kind: output, shape index: {0}]
  %s3 = inlined_call_operand.vmem [shape: f32[2,1,8], index: 3, kind: output, shape index: {1}]
  %s4 = inlined_call_operand.vmem [shape: f32[2,1,8], index: 4, kind: output, shape index: {2}]
  %5 = xla_tuple %s2, %s3, %s4
  %s6 = sld [smem:[#allocation0]]
  $region57: #{down_forward.6} parent=0
    _
  %s8 = ssub.s32 1, %s6
  %s9 = scalar_select 0, %s8, %s6
  loop: start=0, step=1, limit=4
  $region2: #{down_forward.6} parent=0 // loop_pre_header
    _
  $region3: #{down_forward.6} parent=0 // loop_header
    %s11 = sphi 0, %s15
    %p12 = scmp.ge.s32.totalorder %s11, 4
    %s21 = sphi 0, %s23
    %s24 = sphi 0, %s21
    %s25 = sphi 0, %s24
    %s41 = sphi 0, %s25
    %s45 = sphi 0, %s45
    %s47 = sphi 0, %s45
    %s48 = sphi 0, %s47
    %s62 = sphi 0, %s48
    %s68 = sphi 0, %s70
    %s71 = sphi 0, %s68
    %s72 = sphi 0, %s71
    %s88 = sphi 0, %s72
    %s94 = sphi 0, %s96
    %s97 = sphi 0, %s94
    %s98 = sphi 0, %s97
    %s114 = sphi 0, %s98
    %s120 = sphi 0, %s122
    %s123 = sphi 0, %s120
    %s124 = sphi 0, %s123
    %s140 = sphi 0, %s124
  $region4: #{down_forward.6} parent=0 // loop_header_branch
    %14 = sbr.rel (%p12) target = $region8
  $region5: #{down_forward.6} parent=0 // loop_body
    %s16 = ssub.s32 %s11, 1
    %s17 = ssub.s32 %s11, 2
    %s18 = sadd.s32 %s11, 1
    %s19 = ssub.s32 %s11, %s18
    %p20 = scmp.eq.s32.totalorder %s19, 0
    %s22 = sadd.s32 %s21, 1
    %s23 = scalar_select %p20, %s21, %s22
    %p26 = pneg %p20
    %p27 = scmp.eq.s32.totalorder %s11, 1
    %p28 = por %p26, %p27
    %p29 = scmp.ne.s32.totalorder %s21, %s24
    %p30 = scmp.eq.s32.totalorder %s11, 0
    %p31 = por %p29, %p30
    %p32 = scmp.ne.s32.totalorder %s21, %s24
    %p33 = scmp.eq.s32.totalorder %s16, 1
    %p34 = por %p32, %p33
    %p35 = scmp.ne.s32.totalorder %s24, %s25
    %p36 = scmp.eq.s32.totalorder %s16, 0
    %p37 = por %p35, %p36
    %p38 = scmp.ne.s32.totalorder %s24, %s25
    %p39 = scmp.eq.s32.totalorder %s17, 1
    %p40 = por %p38, %p39
    %p42 = scmp.ne.s32.totalorder %s25, %s41
    %p43 = scmp.eq.s32.totalorder %s17, 0
    %p44 = por %p42, %p43
    %s46 = sadd.s32 %s45, 1
    %p49 = scmp.eq.s32.totalorder %s11, 1
    %p50 = scmp.ne.s32.totalorder %s45, %s47
    %p51 = scmp.eq.s32.totalorder %s11, 0
    %p52 = por %p50, %p51
    %p53 = scmp.ne.s32.totalorder %s45, %s47
    %p54 = scmp.eq.s32.totalorder %s16, 1
    %p55 = por %p53, %p54
    %p56 = scmp.ne.s32.totalorder %s47, %s48
    %p57 = scmp.eq.s32.totalorder %s16, 0
    %p58 = por %p56, %p57
    %p59 = scmp.ne.s32.totalorder %s47, %s48
    %p60 = scmp.eq.s32.totalorder %s17, 1
    %p61 = por %p59, %p60
    %p63 = scmp.ne.s32.totalorder %s48, %s62
    %p64 = scmp.eq.s32.totalorder %s17, 0
    %p65 = por %p63, %p64
    %s66 = ssub.s32 %s11, %s18
    %p67 = scmp.eq.s32.totalorder %s66, 0
    %s69 = sadd.s32 %s68, 1
    %s70 = scalar_select %p67, %s68, %s69
    %p73 = pneg %p67
    %p74 = scmp.eq.s32.totalorder %s11, 1
    %p75 = por %p73, %p74
    %p76 = scmp.ne.s32.totalorder %s68, %s71
    %p77 = scmp.eq.s32.totalorder %s11, 0
    %p78 = por %p76, %p77
    %p79 = scmp.ne.s32.totalorder %s68, %s71
    %p80 = scmp.eq.s32.totalorder %s16, 1
    %p81 = por %p79, %p80
    %p82 = scmp.ne.s32.totalorder %s71, %s72
    %p83 = scmp.eq.s32.totalorder %s16, 0
    %p84 = por %p82, %p83
    %p85 = scmp.ne.s32.totalorder %s71, %s72
    %p86 = scmp.eq.s32.totalorder %s17, 1
    %p87 = por %p85, %p86
    %p89 = scmp.ne.s32.totalorder %s72, %s88
    %p90 = scmp.eq.s32.totalorder %s17, 0
    %p91 = por %p89, %p90
    %s92 = ssub.s32 %s11, %s18
    %p93 = scmp.eq.s32.totalorder %s92, 0
    %s95 = sadd.s32 %s94, 1
    %s96 = scalar_select %p93, %s94, %s95
    %p99 = pneg %p93
    %p100 = scmp.eq.s32.totalorder %s11, 1
    %p101 = por %p99, %p100
    %p102 = scmp.ne.s32.totalorder %s94, %s97
    %p103 = scmp.eq.s32.totalorder %s11, 0
    %p104 = por %p102, %p103
    %p105 = scmp.ne.s32.totalorder %s94, %s97
    %p106 = scmp.eq.s32.totalorder %s16, 1
    %p107 = por %p105, %p106
    %p108 = scmp.ne.s32.totalorder %s97, %s98
    %p109 = scmp.eq.s32.totalorder %s16, 0
    %p110 = por %p108, %p109
    %p111 = scmp.ne.s32.totalorder %s97, %s98
    %p112 = scmp.eq.s32.totalorder %s17, 1
    %p113 = por %p111, %p112
    %p115 = scmp.ne.s32.totalorder %s98, %s114
    %p116 = scmp.eq.s32.totalorder %s17, 0
    %p117 = por %p115, %p116
    %s118 = ssub.s32 %s11, %s18
    %p119 = scmp.eq.s32.totalorder %s118, 0
    %s121 = sadd.s32 %s120, 1
    %s122 = scalar_select %p119, %s120, %s121
    %p125 = pneg %p119
    %p126 = scmp.eq.s32.totalorder %s11, 1
    %p127 = por %p125, %p126
    %p128 = scmp.ne.s32.totalorder %s120, %s123
    %p129 = scmp.eq.s32.totalorder %s11, 0
    %p130 = por %p128, %p129
    %p131 = scmp.ne.s32.totalorder %s120, %s123
    %p132 = scmp.eq.s32.totalorder %s16, 1
    %p133 = por %p131, %p132
    %p134 = scmp.ne.s32.totalorder %s123, %s124
    %p135 = scmp.eq.s32.totalorder %s16, 0
    %p136 = por %p134, %p135
    %p137 = scmp.ne.s32.totalorder %s123, %s124
    %p138 = scmp.eq.s32.totalorder %s17, 1
    %p139 = por %p137, %p138
    %p141 = scmp.ne.s32.totalorder %s124, %s140
    %p142 = scmp.eq.s32.totalorder %s17, 0
    %p143 = por %p141, %p142
    %p144 = scmp.le.s32.totalorder 1, %s11
    %p145 = scmp.lt.s32.totalorder %s11, 3
    %p146 = pnand %p144, %p145
    %p147 = pneg %p146
    // Predicated region
    $region9: #{down_forward.6} parent=5 // pred_check
      _
    $region10: #{down_forward.6} parent=5 // pred_check_branch
      %149 = sbr.rel (%p146) target = $region12
    $region11: #{down_forward.6} parent=5 // pred_region
      %s150 = ssub.s32 %s11, 1
      // Predicated region
      $region13: #{down_forward.6} parent=11 // pred_check
        %p151 = pneg %p58
      $region14: #{down_forward.6} parent=11 // pred_check_branch
        %153 = sbr.rel (%p151) target = $region16
      $region15: #{down_forward.6} parent=11 // pred_region
        _
      $region16: #{down_forward.6} parent=11 // pred_fallthru
        _
    $region12: #{down_forward.6} parent=5 // pred_fallthru
      _
    %p154 = scmp.lt.s32.totalorder %s11, 2
    // Predicated region
    $region17: #{down_forward.6} parent=5 // pred_check
      %p155 = pneg %p154
    $region18: #{down_forward.6} parent=5 // pred_check_branch
      %157 = sbr.rel (%p155) target = $region20
    $region19: #{down_forward.6} parent=5 // pred_region
      // Predicated region
      $region21: #{down_forward.6} parent=19 // pred_check
        %p158 = pneg %p31
      $region22: #{down_forward.6} parent=19 // pred_check_branch
        %160 = sbr.rel (%p158) target = $region24
      $region23: #{down_forward.6} parent=19 // pred_region
        %p161 = scmp.lt.s32.totalorder %s11, 1
        %s162 = scalar_select %p161, %s11, 1
        %s163 = smul.addr %s162, 80
        %s164 = smul.addr %s163, 4
        %s165 = scalar_lea.vmem %s0, %s164
      $region24: #{down_forward.6} parent=19 // pred_fallthru
        _
    $region20: #{down_forward.6} parent=5 // pred_fallthru
      _
    %p166 = scmp.le.s32.totalorder 1, %s11
    %p167 = scmp.lt.s32.totalorder %s11, 3
    %p168 = pnand %p166, %p167
    %p169 = pneg %p168
    // Predicated region
    $region25: #{down_forward.6} parent=5 // pred_check
      _
    $region26: #{down_forward.6} parent=5 // pred_check_branch
      %171 = sbr.rel (%p168) target = $region28
    $region27: #{down_forward.6} parent=5 // pred_region
      %s172 = ssub.s32 %s11, 1
      %p173 = scmp.lt.s32.totalorder %s16, 1
      %s174 = scalar_select %p173, %s16, 1
      %s175 = smul.addr %s174, 80
      %s176 = smul.addr %s175, 4
      %s177 = scalar_lea.vmem %s0, %s176
      %p178 = pneg %p37
      %p179 = pneg %p34
      %p180 = pneg %p58
      %p181 = pneg %p55
      %p182 = pneg %p84
      %p183 = pneg %p81
      %p184 = scmp.lt.s32.totalorder %s16, 1
      %s185 = scalar_select %p184, %s16, 1
      %s186 = smul.addr %s185, 64
      %s187 = smul.addr %s186, 4
      %s188 = scalar_lea.vmem %s2, %s187
      %p189 = pneg %p110
      %p190 = pneg %p107
      %p191 = scmp.lt.s32.totalorder %s16, 1
      %s192 = scalar_select %p191, %s16, 1
      %s193 = scalar_lea.vmem %s3, %s192
      %p194 = pneg %p136
      %p195 = pneg %p133
      %p196 = scmp.lt.s32.totalorder %s16, 1
      %s197 = scalar_select %p196, %s16, 1
      %s198 = scalar_lea.vmem %s4, %s197
      %p199 = scmp.lt.s32.totalorder %s16, 1
      %s200 = scalar_select %p199, %s16, 1
      %s201 = smul.addr %s200, 80
      %s202 = smul.addr %s201, 4
      %s203 = scalar_lea.vmem %s0, %s202
      %p204 = scmp.lt.s32.totalorder %s16, 1
      %s205 = scalar_select %p204, %s16, 1
      %s206 = smul.addr %s205, 64
      %s207 = smul.addr %s206, 4
      %s208 = scalar_lea.vmem %s2, %s207
      %p209 = scmp.lt.s32.totalorder %s16, 1
      %s210 = scalar_select %p209, %s16, 1
      %s211 = scalar_lea.vmem %s3, %s210
      %p212 = scmp.lt.s32.totalorder %s16, 1
      %s213 = scalar_select %p212, %s16, 1
      %s214 = scalar_lea.vmem %s4, %s213
      %v216 = vld [vmem:[%s1] sm:$0xf]
      %v217 = vld [vmem:[%s1 + $0x4] sm:$0xf]
      %v218 = vld [vmem:[%s1 + $0x8] sm:$0xf]
      %v219 = vld [vmem:[%s1 + $0xc] sm:$0xf]
      %v220 = vld [vmem:[%s1 + $0x10] sm:$0xf]
      %v221 = vld [vmem:[%s1 + $0x14] sm:$0xf]
      %v222 = vld [vmem:[%s1 + $0x18] sm:$0xf]
      %v223 = vld [vmem:[%s1 + $0x1c] sm:$0xf]
      %v224 = vld [vmem:[%s1 + $0x20] sm:$0xf]
      %v225 = vld [vmem:[%s1 + $0x24] sm:$0xf]
      %v226 = vld [vmem:[%s1 + $0x28] sm:$0xf]
      %v227 = vld [vmem:[%s1 + $0x2c] sm:$0xf]
      %v228 = vld [vmem:[%s1 + $0x30] sm:$0xf]
      %v229 = vld [vmem:[%s1 + $0x34] sm:$0xf]
      %v230 = vld [vmem:[%s1 + $0x38] sm:$0xf]
      %v231 = vld [vmem:[%s1 + $0x3c] sm:$0xf]
      %v232 = vld [vmem:[%s1 + $0x40] sm:$0xf]
      %v233 = vld [vmem:[%s1 + $0x44] sm:$0xf]
      %v234 = vld [vmem:[%s1 + $0x48] sm:$0xf]
      %v235 = vld [vmem:[%s1 + $0x4c] sm:$0xf]
      %v236 = vld [vmem:[%s1 + $0x50] sm:$0xf]
      %v237 = vld [vmem:[%s1 + $0x54] sm:$0xf]
      %v238 = vld [vmem:[%s1 + $0x58] sm:$0xf]
      %v239 = vld [vmem:[%s1 + $0x5c] sm:$0xf]
      %v240 = vld [vmem:[%s1 + $0x60] sm:$0xf]
      %v241 = vld [vmem:[%s1 + $0x64] sm:$0xf]
      %v242 = vld [vmem:[%s1 + $0x68] sm:$0xf]
      %v243 = vld [vmem:[%s203] sm:$0xf]
      %v244 = vld [vmem:[%s203 + $0x4] sm:$0xf]
      %v245 = vld [vmem:[%s203 + $0x8] sm:$0xf]
      %v246 = vld [vmem:[%s203 + $0xc] sm:$0xf]
      %v247 = vld [vmem:[%s203 + $0x10] sm:$0xf]
      %v248 = vld [vmem:[%s203 + $0x14] sm:$0xf]
      %v249 = vld [vmem:[%s203 + $0x18] sm:$0xf]
      %v250 = vld [vmem:[%s203 + $0x1c] sm:$0xf]
      %v251 = vld [vmem:[%s203 + $0x20] sm:$0xf]
      %v252 = vld [vmem:[%s203 + $0x24] sm:$0xf]
      %v253 = vld [vmem:[%s203 + $0x28] sm:$0xf]
      %v254 = vld [vmem:[%s203 + $0x2c] sm:$0xf]
      %v255 = vld [vmem:[%s203 + $0x30] sm:$0xf]
      %v256 = vld [vmem:[%s203 + $0x34] sm:$0xf]
      %v257 = vld [vmem:[%s203 + $0x38] sm:$0xf]
      %v258 = vld [vmem:[%s203 + $0x3c] sm:$0xf]
      %v259 = vld [vmem:[%s203 + $0x40] sm:$0xf]
      %v260 = vld [vmem:[%s203 + $0x44] sm:$0xf]
      %v261 = vld [vmem:[%s203 + $0x48] sm:$0xf]
      %v262 = vld [vmem:[%s203 + $0x4c] sm:$0xf]
      %v263 = vld [vmem:[%s203 + $0x50] sm:$0xf]
      %v264 = vld [vmem:[%s203 + $0x54] sm:$0xf]
      %v265 = vld [vmem:[%s203 + $0x58] sm:$0xf]
      %v266 = vld [vmem:[%s203 + $0x5c] sm:$0xf]
      %v267 = vld [vmem:[%s203 + $0x60] sm:$0xf]
      %v268 = vld [vmem:[%s203 + $0x64] sm:$0xf]
      %v269 = vld [vmem:[%s203 + $0x68] sm:$0xf]
      %v270 = vld [vmem:[%s203 + $0x6c] sm:$0xf]
      %v271 = vld [vmem:[%s203 + $0x70] sm:$0xf]
      %v272 = vld [vmem:[%s203 + $0x74] sm:$0xf]
      %v273 = vld [vmem:[%s203 + $0x78] sm:$0xf]
      %v274 = vld [vmem:[%s203 + $0x7c] sm:$0xf]
      %v275 = vld [vmem:[%s203 + $0x80] sm:$0xf]
      %v276 = vld [vmem:[%s203 + $0x84] sm:$0xf]
      %v277 = vld [vmem:[%s203 + $0x88] sm:$0xf]
      %v278 = vld [vmem:[%s203 + $0x8c] sm:$0xf]
      %v279 = vld [vmem:[%s203 + $0x90] sm:$0xf]
      %v280 = vld [vmem:[%s203 + $0x94] sm:$0xf]
      %v281 = vld [vmem:[%s203 + $0x98] sm:$0xf]
      %v282 = vld [vmem:[%s203 + $0x9c] sm:$0xf]
      %v283 = vld [vmem:[%s203 + $0xa0] sm:$0xf]
      %v284 = vld [vmem:[%s203 + $0xa4] sm:$0xf]
      %v285 = vld [vmem:[%s203 + $0xa8] sm:$0xf]
      %v286 = vld [vmem:[%s203 + $0xac] sm:$0xf]
      %v287 = vld [vmem:[%s203 + $0xb0] sm:$0xf]
      %v288 = vld [vmem:[%s203 + $0xb4] sm:$0xf]
      %v289 = vld [vmem:[%s203 + $0xb8] sm:$0xf]
      %v290 = vld [vmem:[%s203 + $0xbc] sm:$0xf]
      %v291 = vld [vmem:[%s203 + $0xc0] sm:$0xf]
      %v292 = vld [vmem:[%s203 + $0xc4] sm:$0xf]
      %v293 = vld [vmem:[%s203 + $0xc8] sm:$0xf]
      %v294 = vld [vmem:[%s203 + $0xcc] sm:$0xf]
      %v295 = vld [vmem:[%s203 + $0xd0] sm:$0xf]
      %v296 = vld [vmem:[%s203 + $0xd4] sm:$0xf]
      %v297 = vld [vmem:[%s203 + $0xd8] sm:$0xf]
      %v298 = vld [vmem:[%s203 + $0xdc] sm:$0xf]
      %v299 = vld [vmem:[%s203 + $0xe0] sm:$0xf]
      %v300 = vld [vmem:[%s203 + $0xe4] sm:$0xf]
      %v301 = vld [vmem:[%s203 + $0xe8] sm:$0xf]
      %v302 = vld [vmem:[%s203 + $0xec] sm:$0xf]
      %v303 = vld [vmem:[%s203 + $0xf0] sm:$0xf]
      %v304 = vld [vmem:[%s203 + $0xf4] sm:$0xf]
      %v305 = vld [vmem:[%s203 + $0xf8] sm:$0xf]
      %v306 = vld [vmem:[%s203 + $0xfc] sm:$0xf]
      %s307 = scalar_lea.vmem %s203, 32
      %v308 = vld [vmem:[%s307] sm:$0xf]
      %v309 = vld [vmem:[%s307 + $0x4] sm:$0xf]
      %v310 = vld [vmem:[%s307 + $0x8] sm:$0xf]
      %v311 = vld [vmem:[%s307 + $0xc] sm:$0xf]
      %v312 = vld [vmem:[%s307 + $0x10] sm:$0xf]
      %v313 = vld [vmem:[%s307 + $0x14] sm:$0xf]
      %v314 = vld [vmem:[%s307 + $0x18] sm:$0xf]
      %v315 = vld [vmem:[%s307 + $0x1c] sm:$0xf]
      %v316 = vld [vmem:[%s307 + $0x20] sm:$0xf]
      %v317 = vld [vmem:[%s307 + $0x24] sm:$0xf]
      %v318 = vld [vmem:[%s307 + $0x28] sm:$0xf]
      %v319 = vld [vmem:[%s307 + $0x2c] sm:$0xf]
      %v320 = vld [vmem:[%s307 + $0x30] sm:$0xf]
      %v321 = vld [vmem:[%s307 + $0x34] sm:$0xf]
      %v322 = vld [vmem:[%s307 + $0x38] sm:$0xf]
      %v323 = vld [vmem:[%s307 + $0x3c] sm:$0xf]
      %v324 = vld [vmem:[%s307 + $0x40] sm:$0xf]
      %v325 = vld [vmem:[%s307 + $0x44] sm:$0xf]
      %v326 = vld [vmem:[%s307 + $0x48] sm:$0xf]
      %v327 = vld [vmem:[%s307 + $0x4c] sm:$0xf]
      %v328 = vld [vmem:[%s307 + $0x50] sm:$0xf]
      %v329 = vld [vmem:[%s307 + $0x54] sm:$0xf]
      %v330 = vld [vmem:[%s307 + $0x58] sm:$0xf]
      %v331 = vld [vmem:[%s307 + $0x5c] sm:$0xf]
      %v332 = vld [vmem:[%s307 + $0x60] sm:$0xf]
      %v333 = vld [vmem:[%s307 + $0x64] sm:$0xf]
      %v334 = vld [vmem:[%s307 + $0x68] sm:$0xf]
      %v335 = vld [vmem:[%s307 + $0x6c] sm:$0xf]
      %v336 = vld [vmem:[%s307 + $0x70] sm:$0xf]
      %v337 = vld [vmem:[%s307 + $0x74] sm:$0xf]
      %v338 = vld [vmem:[%s307 + $0x78] sm:$0xf]
      %v339 = vld [vmem:[%s307 + $0x7c] sm:$0xf]
      %v340 = vld [vmem:[%s307 + $0x80] sm:$0xf]
      %v341 = vld [vmem:[%s307 + $0x84] sm:$0xf]
      %v342 = vld [vmem:[%s307 + $0x88] sm:$0xf]
      %v343 = vld [vmem:[%s307 + $0x8c] sm:$0xf]
      %v344 = vld [vmem:[%s307 + $0x90] sm:$0xf]
      %v345 = vld [vmem:[%s307 + $0x94] sm:$0xf]
      %v346 = vld [vmem:[%s307 + $0x98] sm:$0xf]
      %v347 = vld [vmem:[%s307 + $0x9c] sm:$0xf]
      %v348 = vld [vmem:[%s307 + $0xa0] sm:$0xf]
      %v349 = vld [vmem:[%s307 + $0xa4] sm:$0xf]
      %v350 = vld [vmem:[%s307 + $0xa8] sm:$0xf]
      %v351 = vld [vmem:[%s307 + $0xac] sm:$0xf]
      %v352 = vld [vmem:[%s307 + $0xb0] sm:$0xf]
      %v353 = vld [vmem:[%s307 + $0xb4] sm:$0xf]
      %v354 = vld [vmem:[%s307 + $0xb8] sm:$0xf]
      %v355 = vld [vmem:[%s307 + $0xbc] sm:$0xf]
      %v356 = vld [vmem:[%s307 + $0xc0] sm:$0xf]
      %v357 = vld [vmem:[%s307 + $0xc4] sm:$0xf]
      %v358 = vld [vmem:[%s307 + $0xc8] sm:$0xf]
      %v359 = vld [vmem:[%s307 + $0xcc] sm:$0xf]
      %v360 = vld [vmem:[%s307 + $0xd0] sm:$0xf]
      %v361 = vld [vmem:[%s307 + $0xd4] sm:$0xf]
      %v362 = vld [vmem:[%s307 + $0xd8] sm:$0xf]
      %v363 = vld [vmem:[%s307 + $0xdc] sm:$0xf]
      %v364 = vld [vmem:[%s307 + $0xe0] sm:$0xf]
      %v365 = vld [vmem:[%s307 + $0xe4] sm:$0xf]
      %v366 = vld [vmem:[%s307 + $0xe8] sm:$0xf]
      %v367 = vld [vmem:[%s307 + $0xec] sm:$0xf]
      %v368 = vld [vmem:[%s307 + $0xf0] sm:$0xf]
      %v369 = vld [vmem:[%s307 + $0xf4] sm:$0xf]
      %v370 = vld [vmem:[%s307 + $0xf8] sm:$0xf]
      %v371 = vld [vmem:[%s307 + $0xfc] sm:$0xf]
      %v436 = vunpack.c.l.b16 %v308
      %v437 = vunpack.c.l.b16 %v309
      %v438 = vunpack.c.l.b16 %v310
      %v439 = vunpack.c.l.b16 %v311
      %v440 = vunpack.c.l.b16 %v312
      %v441 = vunpack.c.l.b16 %v313
      %v442 = vunpack.c.l.b16 %v314
      %v443 = vunpack.c.l.b16 %v315
      %v444 = vunpack.c.l.b16 %v316
      %v445 = vunpack.c.l.b16 %v317
      %v446 = vunpack.c.l.b16 %v318
      %v447 = vunpack.c.l.b16 %v319
      %v448 = vunpack.c.l.b16 %v320
      %v449 = vunpack.c.l.b16 %v321
      %v450 = vunpack.c.l.b16 %v322
      %v451 = vunpack.c.l.b16 %v323
      %v452 = vunpack.c.l.b16 %v324
      %v453 = vunpack.c.l.b16 %v325
      %v454 = vunpack.c.l.b16 %v326
      %v455 = vunpack.c.l.b16 %v327
      %v456 = vunpack.c.l.b16 %v328
      %v457 = vunpack.c.l.b16 %v329
      %v458 = vunpack.c.l.b16 %v330
      %v459 = vunpack.c.l.b16 %v331
      %v460 = vunpack.c.l.b16 %v332
      %v461 = vunpack.c.l.b16 %v333
      %v462 = vunpack.c.l.b16 %v334
      %v463 = vunpack.c.l.b16 %v335
      %v464 = vunpack.c.l.b16 %v336
      %v465 = vunpack.c.l.b16 %v337
      %v466 = vunpack.c.l.b16 %v338
      %v467 = vunpack.c.l.b16 %v339
      %v468 = vunpack.c.l.b16 %v340
      %v469 = vunpack.c.l.b16 %v341
      %v470 = vunpack.c.l.b16 %v342
      %v471 = vunpack.c.l.b16 %v343
      %v472 = vunpack.c.l.b16 %v344
      %v473 = vunpack.c.l.b16 %v345
      %v474 = vunpack.c.l.b16 %v346
      %v475 = vunpack.c.l.b16 %v347
      %v476 = vunpack.c.l.b16 %v348
      %v477 = vunpack.c.l.b16 %v349
      %v478 = vunpack.c.l.b16 %v350
      %v479 = vunpack.c.l.b16 %v351
      %v480 = vunpack.c.l.b16 %v352
      %v481 = vunpack.c.l.b16 %v353
      %v482 = vunpack.c.l.b16 %v354
      %v483 = vunpack.c.l.b16 %v355
      %v484 = vunpack.c.l.b16 %v356
      %v485 = vunpack.c.l.b16 %v357
      %v486 = vunpack.c.l.b16 %v358
      %v487 = vunpack.c.l.b16 %v359
      %v488 = vunpack.c.l.b16 %v360
      %v489 = vunpack.c.l.b16 %v361
      %v490 = vunpack.c.l.b16 %v362
      %v491 = vunpack.c.l.b16 %v363
      %v492 = vunpack.c.l.b16 %v364
      %v493 = vunpack.c.l.b16 %v365
      %v494 = vunpack.c.l.b16 %v366
      %v495 = vunpack.c.l.b16 %v367
      %v496 = vunpack.c.l.b16 %v368
      %v497 = vunpack.c.l.b16 %v369
      %v498 = vunpack.c.l.b16 %v370
      %v499 = vunpack.c.l.b16 %v371
      %v500 = vpack.c.b16 %v437, %v436
      %v501 = vpack.c.b16 %v439, %v438
      %v502 = vpack.c.b16 %v441, %v440
      %v503 = vpack.c.b16 %v443, %v442
      %v504 = vpack.c.b16 %v445, %v444
      %v505 = vpack.c.b16 %v447, %v446
      %v506 = vpack.c.b16 %v449, %v448
      %v507 = vpack.c.b16 %v451, %v450
      %v508 = vpack.c.b16 %v453, %v452
      %v509 = vpack.c.b16 %v455, %v454
      %v510 = vpack.c.b16 %v457, %v456
      %v511 = vpack.c.b16 %v459, %v458
      %v512 = vpack.c.b16 %v461, %v460
      %v513 = vpack.c.b16 %v463, %v462
      %v514 = vpack.c.b16 %v465, %v464
      %v515 = vpack.c.b16 %v467, %v466
      %v516 = vpack.c.b16 %v469, %v468
      %v517 = vpack.c.b16 %v471, %v470
      %v518 = vpack.c.b16 %v473, %v472
      %v519 = vpack.c.b16 %v475, %v474
      %v520 = vpack.c.b16 %v477, %v476
      %v521 = vpack.c.b16 %v479, %v478
      %v522 = vpack.c.b16 %v481, %v480
      %v523 = vpack.c.b16 %v483, %v482
      %v524 = vpack.c.b16 %v485, %v484
      %v525 = vpack.c.b16 %v487, %v486
      %v526 = vpack.c.b16 %v489, %v488
      %v527 = vpack.c.b16 %v491, %v490
      %v528 = vpack.c.b16 %v493, %v492
      %v529 = vpack.c.b16 %v495, %v494
      %v530 = vpack.c.b16 %v497, %v496
      %v531 = vpack.c.b16 %v499, %v498
      %v541 = vunpack.c.l.b16 %v225
      %v542 = vunpack.c.l.b16 %v226
      %v543 = vunpack.c.l.b16 %v227
      %v544 = vunpack.c.l.b16 %v228
      %v545 = vunpack.c.l.b16 %v229
      %v546 = vunpack.c.l.b16 %v230
      %v547 = vunpack.c.l.b16 %v231
      %v548 = vunpack.c.l.b16 %v232
      %v549 = vunpack.c.l.b16 %v233
      %v550 = vpack.c.b16 %v542, %v541
      %v551 = vpack.c.b16 %v544, %v543
      %v552 = vpack.c.b16 %v546, %v545
      %v553 = vpack.c.b16 %v548, %v547
      %v554 = vpack.c.b16 %v549, %v549
      %vm559 = vcmask 588800
      %v561 = vsel %vm559, %v500, 0
      %v564 = vsel %vm559, %v501, 0
      %v567 = vsel %vm559, %v502, 0
      %v570 = vsel %vm559, %v503, 0
      %v573 = vsel %vm559, %v504, 0
      %v576 = vsel %vm559, %v505, 0
      %v579 = vsel %vm559, %v506, 0
      %v582 = vsel %vm559, %v507, 0
      %v585 = vsel %vm559, %v508, 0
      %v588 = vsel %vm559, %v509, 0
      %v591 = vsel %vm559, %v510, 0
      %v594 = vsel %vm559, %v511, 0
      %v597 = vsel %vm559, %v512, 0
      %v600 = vsel %vm559, %v513, 0
      %v603 = vsel %vm559, %v514, 0
      %v606 = vsel %vm559, %v515, 0
      %v609 = vsel %vm559, %v516, 0
      %v612 = vsel %vm559, %v517, 0
      %v615 = vsel %vm559, %v518, 0
      %v618 = vsel %vm559, %v519, 0
      %v621 = vsel %vm559, %v520, 0
      %v624 = vsel %vm559, %v521, 0
      %v627 = vsel %vm559, %v522, 0
      %v630 = vsel %vm559, %v523, 0
      %v633 = vsel %vm559, %v524, 0
      %v636 = vsel %vm559, %v525, 0
      %v639 = vsel %vm559, %v526, 0
      %v642 = vsel %vm559, %v527, 0
      %v645 = vsel %vm559, %v528, 0
      %v648 = vsel %vm559, %v529, 0
      %v651 = vsel %vm559, %v530, 0
      %v654 = vsel %vm559, %v531, 0
      %vm656 = vcmask 1043456
      %v658 = vsel %vm656, %v554, 0
      %660 = vmatprep.subr.bf16.mxu0 0
      %661 = vmatpush1.bf16.msra.mxu0 %v550
      %662 = vmatprep.subr.bf16.mxu0 0
      %663 = vmatpush1.bf16.msra.mxu0 %v551
      %664 = vmatprep.subr.bf16.mxu0 0
      %665 = vmatpush1.bf16.msra.mxu0 %v552
      %666 = vmatprep.subr.bf16.mxu0 0
      %667 = vmatpush1.bf16.msra.mxu0 %v553
      %668 = vmatprep.subr.bf16.mxu0 0
      %669 = vmatpush1.bf16.msra.mxu0 %v658
      %670 = vmatprep.subr.bf16.mxu0 0
      %671 = vmatpush1.bf16.msra.mxu0 0
      %672 = vmatprep.subr.bf16.mxu0 0
      %673 = vmatpush1.bf16.msra.mxu0 0
      %674 = vmatprep.subr.bf16.mxu0 0
      %675 = vmatpush1.bf16.msra.mxu0 0
      %676 = vmatprep.subr.bf16.mxu0 0
      %677 = vmatpush1.bf16.msra.mxu0 0
      %678 = vmatprep.subr.bf16.mxu0 0
      %679 = vmatpush1.bf16.msra.mxu0 0
      %680 = vmatprep.subr.bf16.mxu0 0
      %681 = vmatpush1.bf16.msra.mxu0 0
      %682 = vmatprep.subr.bf16.mxu0 0
      %683 = vmatpush1.bf16.msra.mxu0 0
      %684 = vmatprep.subr.bf16.mxu0 0
      %685 = vmatpush1.bf16.msra.mxu0 0
      %686 = vmatprep.subr.bf16.mxu0 0
      %687 = vmatpush1.bf16.msra.mxu0 0
      %688 = vmatprep.subr.bf16.mxu0 0
      %689 = vmatpush1.bf16.msra.mxu0 0
      %690 = vmatprep.subr.bf16.mxu0 0
      %691 = vmatpush1.bf16.msra.mxu0 0
      %692 = vmatprep.mubr.bf16.mxu0 0
      %693 = vmatmul.mubr.bf16.gmra.mrb[0].mxu0 %v561
      %v694 = vpop.f32.mrb[0].mxu0
      %v695 = vadd.f32 0.0, %v694
      %v696 = vpop.f32.mrb[0].mxu0
      %v697 = vpop.f32.mrb[0].mxu0
      %v698 = vadd.f32 0.0, %v697
      %v699 = vpop.f32.mrb[0].mxu0
      %700 = vmatprep.mubr.bf16.mxu0 0
      %701 = vmatmul.mubr.bf16.gmra.mrb[0].mxu0 %v564
      %v702 = vpop.f32.mrb[0].mxu0
      %v703 = vadd.f32 0.0, %v702
      %v704 = vpop.f32.mrb[0].mxu0
      %v705 = vpop.f32.mrb[0].mxu0
      %v706 = vadd.f32 0.0, %v705
      %v707 = vpop.f32.mrb[0].mxu0
      %708 = vmatprep.mubr.bf16.mxu0 0
      %709 = vmatmul.mubr.bf16.gmra.mrb[0].mxu0 %v567
      %v710 = vpop.f32.mrb[0].mxu0
      %v711 = vadd.f32 0.0, %v710
      %v712 = vpop.f32.mrb[0].mxu0
      %v713 = vpop.f32.mrb[0].mxu0
      %v714 = vadd.f32 0.0, %v713
      %v715 = vpop.f32.mrb[0].mxu0
      %716 = vmatprep.mubr.bf16.mxu0 0
      %717 = vmatmul.mubr.bf16.gmra.mrb[0].mxu0 %v570
      %v718 = vpop.f32.mrb[0].mxu0
      %v719 = vadd.f32 0.0, %v718
      %v720 = vpop.f32.mrb[0].mxu0
      %v721 = vpop.f32.mrb[0].mxu0
      %v722 = vadd.f32 0.0, %v721
      %v723 = vpop.f32.mrb[0].mxu0
      %724 = vmatprep.mubr.bf16.mxu0 0
      %725 = vmatmul.mubr.bf16.gmra.mrb[0].mxu0 %v573
      %v726 = vpop.f32.mrb[0].mxu0
      %v727 = vadd.f32 0.0, %v726
      %v728 = vpop.f32.mrb[0].mxu0
      %v729 = vpop.f32.mrb[0].mxu0
      %v730 = vadd.f32 0.0, %v729
      %v731 = vpop.f32.mrb[0].mxu0
      %732 = vmatprep.mubr.bf16.mxu0 0
      %733 = vmatmul.mubr.bf16.gmra.mrb[0].mxu0 %v576
      %v734 = vpop.f32.mrb[0].mxu0
      %v735 = vadd.f32 0.0, %v734
      %v736 = vpop.f32.mrb[0].mxu0
      %v737 = vpop.f32.mrb[0].mxu0
      %v738 = vadd.f32 0.0, %v737
      %v739 = vpop.f32.mrb[0].mxu0
      %740 = vmatprep.mubr.bf16.mxu0 0
      %741 = vmatmul.mubr.bf16.gmra.mrb[0].mxu0 %v579
      %v742 = vpop.f32.mrb[0].mxu0
      %v743 = vadd.f32 0.0, %v742
      %v744 = vpop.f32.mrb[0].mxu0
      %v745 = vpop.f32.mrb[0].mxu0
      %v746 = vadd.f32 0.0, %v745
      %v747 = vpop.f32.mrb[0].mxu0
      %748 = vmatprep.mubr.bf16.mxu0 0
      %749 = vmatmul.mubr.bf16.gmra.mrb[0].mxu0 %v582
      %v750 = vpop.f32.mrb[0].mxu0
      %v751 = vadd.f32 0.0, %v750
      %v752 = vpop.f32.mrb[0].mxu0
      %v753 = vpop.f32.mrb[0].mxu0
      %v754 = vadd.f32 0.0, %v753
      %v755 = vpop.f32.mrb[0].mxu0
      %756 = vmatprep.mubr.bf16.mxu0 0
      %757 = vmatmul.mubr.bf16.gmra.mrb[0].mxu0 %v585
      %v758 = vpop.f32.mrb[0].mxu0
      %v759 = vadd.f32 0.0, %v758
      %v760 = vpop.f32.mrb[0].mxu0
      %v761 = vpop.f32.mrb[0].mxu0
      %v762 = vadd.f32 0.0, %v761
      %v763 = vpop.f32.mrb[0].mxu0
      %764 = vmatprep.mubr.bf16.mxu0 0
      %765 = vmatmul.mubr.bf16.gmra.mrb[0].mxu0 %v588
      %v766 = vpop.f32.mrb[0].mxu0
      %v767 = vadd.f32 0.0, %v766
      %v768 = vpop.f32.mrb[0].mxu0
      %v769 = vpop.f32.mrb[0].mxu0
      %v770 = vadd.f32 0.0, %v769
      %v771 = vpop.f32.mrb[0].mxu0
      %772 = vmatprep.mubr.bf16.mxu0 0
      %773 = vmatmul.mubr.bf16.gmra.mrb[0].mxu0 %v591
      %v774 = vpop.f32.mrb[0].mxu0
      %v775 = vadd.f32 0.0, %v774
      %v776 = vpop.f32.mrb[0].mxu0
      %v777 = vpop.f32.mrb[0].mxu0
      %v778 = vadd.f32 0.0, %v777
      %v779 = vpop.f32.mrb[0].mxu0
      %780 = vmatprep.mubr.bf16.mxu0 0
      %781 = vmatmul.mubr.bf16.gmra.mrb[0].mxu0 %v594
      %v782 = vpop.f32.mrb[0].mxu0
      %v783 = vadd.f32 0.0, %v782
      %v784 = vpop.f32.mrb[0].mxu0
      %v785 = vpop.f32.mrb[0].mxu0
      %v786 = vadd.f32 0.0, %v785
      %v787 = vpop.f32.mrb[0].mxu0
      %788 = vmatprep.mubr.bf16.mxu0 0
      %789 = vmatmul.mubr.bf16.gmra.mrb[0].mxu0 %v597
      %v790 = vpop.f32.mrb[0].mxu0
      %v791 = vadd.f32 0.0, %v790
      %v792 = vpop.f32.mrb[0].mxu0
      %v793 = vpop.f32.mrb[0].mxu0
      %v794 = vadd.f32 0.0, %v793
      %v795 = vpop.f32.mrb[0].mxu0
      %796 = vmatprep.mubr.bf16.mxu0 0
      %797 = vmatmul.mubr.bf16.gmra.mrb[0].mxu0 %v600
      %v798 = vpop.f32.mrb[0].mxu0
      %v799 = vadd.f32 0.0, %v798
      %v800 = vpop.f32.mrb[0].mxu0
      %v801 = vpop.f32.mrb[0].mxu0
      %v802 = vadd.f32 0.0, %v801
      %v803 = vpop.f32.mrb[0].mxu0
      %804 = vmatprep.mubr.bf16.mxu0 0
      %805 = vmatmul.mubr.bf16.gmra.mrb[0].mxu0 %v603
      %v806 = vpop.f32.mrb[0].mxu0
      %v807 = vadd.f32 0.0, %v806
      %v808 = vpop.f32.mrb[0].mxu0
      %v809 = vpop.f32.mrb[0].mxu0
      %v810 = vadd.f32 0.0, %v809
      %v811 = vpop.f32.mrb[0].mxu0
      %812 = vmatprep.mubr.bf16.mxu0 0
      %813 = vmatmul.mubr.bf16.gmra.mrb[0].mxu0 %v606
      %v814 = vpop.f32.mrb[0].mxu0
      %v815 = vadd.f32 0.0, %v814
      %v816 = vpop.f32.mrb[0].mxu0
      %v817 = vpop.f32.mrb[0].mxu0
      %v818 = vadd.f32 0.0, %v817
      %v819 = vpop.f32.mrb[0].mxu0
      %820 = vmatprep.mubr.bf16.mxu0 0
      %821 = vmatmul.mubr.bf16.gmra.mrb[0].mxu0 %v609
      %v822 = vpop.f32.mrb[0].mxu0
      %v823 = vadd.f32 0.0, %v822
      %v824 = vpop.f32.mrb[0].mxu0
      %v825 = vpop.f32.mrb[0].mxu0
      %v826 = vadd.f32 0.0, %v825
      %v827 = vpop.f32.mrb[0].mxu0
      %828 = vmatprep.mubr.bf16.mxu0 0
      %829 = vmatmul.mubr.bf16.gmra.mrb[0].mxu0 %v612
      %v830 = vpop.f32.mrb[0].mxu0
      %v831 = vadd.f32 0.0, %v830
      %v832 = vpop.f32.mrb[0].mxu0
      %v833 = vpop.f32.mrb[0].mxu0
      %v834 = vadd.f32 0.0, %v833
      %v835 = vpop.f32.mrb[0].mxu0
      %836 = vmatprep.mubr.bf16.mxu0 0
      %837 = vmatmul.mubr.bf16.gmra.mrb[0].mxu0 %v615
      %v838 = vpop.f32.mrb[0].mxu0
      %v839 = vadd.f32 0.0, %v838
      %v840 = vpop.f32.mrb[0].mxu0
      %v841 = vpop.f32.mrb[0].mxu0
      %v842 = vadd.f32 0.0, %v841
      %v843 = vpop.f32.mrb[0].mxu0
      %844 = vmatprep.mubr.bf16.mxu0 0
      %845 = vmatmul.mubr.bf16.gmra.mrb[0].mxu0 %v618
      %v846 = vpop.f32.mrb[0].mxu0
      %v847 = vadd.f32 0.0, %v846
      %v848 = vpop.f32.mrb[0].mxu0
      %v849 = vpop.f32.mrb[0].mxu0
      %v850 = vadd.f32 0.0, %v849
      %v851 = vpop.f32.mrb[0].mxu0
      %852 = vmatprep.mubr.bf16.mxu0 0
      %853 = vmatmul.mubr.bf16.gmra.mrb[0].mxu0 %v621
      %v854 = vpop.f32.mrb[0].mxu0
      %v855 = vadd.f32 0.0, %v854
      %v856 = vpop.f32.mrb[0].mxu0
      %v857 = vpop.f32.mrb[0].mxu0
      %v858 = vadd.f32 0.0, %v857
      %v859 = vpop.f32.mrb[0].mxu0
      %860 = vmatprep.mubr.bf16.mxu0 0
      %861 = vmatmul.mubr.bf16.gmra.mrb[0].mxu0 %v624
      %v862 = vpop.f32.mrb[0].mxu0
      %v863 = vadd.f32 0.0, %v862
      %v864 = vpop.f32.mrb[0].mxu0
      %v865 = vpop.f32.mrb[0].mxu0
      %v866 = vadd.f32 0.0, %v865
      %v867 = vpop.f32.mrb[0].mxu0
      %868 = vmatprep.mubr.bf16.mxu0 0
      %869 = vmatmul.mubr.bf16.gmra.mrb[0].mxu0 %v627
      %v870 = vpop.f32.mrb[0].mxu0
      %v871 = vadd.f32 0.0, %v870
      %v872 = vpop.f32.mrb[0].mxu0
      %v873 = vpop.f32.mrb[0].mxu0
      %v874 = vadd.f32 0.0, %v873
      %v875 = vpop.f32.mrb[0].mxu0
      %876 = vmatprep.mubr.bf16.mxu0 0
      %877 = vmatmul.mubr.bf16.gmra.mrb[0].mxu0 %v630
      %v878 = vpop.f32.mrb[0].mxu0
      %v879 = vadd.f32 0.0, %v878
      %v880 = vpop.f32.mrb[0].mxu0
      %v881 = vpop.f32.mrb[0].mxu0
      %v882 = vadd.f32 0.0, %v881
      %v883 = vpop.f32.mrb[0].mxu0
      %884 = vmatprep.mubr.bf16.mxu0 0
      %885 = vmatmul.mubr.bf16.gmra.mrb[0].mxu0 %v633
      %v886 = vpop.f32.mrb[0].mxu0
      %v887 = vadd.f32 0.0, %v886
      %v888 = vpop.f32.mrb[0].mxu0
      %v889 = vpop.f32.mrb[0].mxu0
      %v890 = vadd.f32 0.0, %v889
      %v891 = vpop.f32.mrb[0].mxu0
      %892 = vmatprep.mubr.bf16.mxu0 0
      %893 = vmatmul.mubr.bf16.gmra.mrb[0].mxu0 %v636
      %v894 = vpop.f32.mrb[0].mxu0
      %v895 = vadd.f32 0.0, %v894
      %v896 = vpop.f32.mrb[0].mxu0
      %v897 = vpop.f32.mrb[0].mxu0
      %v898 = vadd.f32 0.0, %v897
      %v899 = vpop.f32.mrb[0].mxu0
      %900 = vmatprep.mubr.bf16.mxu0 0
      %901 = vmatmul.mubr.bf16.gmra.mrb[0].mxu0 %v639
      %v902 = vpop.f32.mrb[0].mxu0
      %v903 = vadd.f32 0.0, %v902
      %v904 = vpop.f32.mrb[0].mxu0
      %v905 = vpop.f32.mrb[0].mxu0
      %v906 = vadd.f32 0.0, %v905
      %v907 = vpop.f32.mrb[0].mxu0
      %908 = vmatprep.mubr.bf16.mxu0 0
      %909 = vmatmul.mubr.bf16.gmra.mrb[0].mxu0 %v642
      %v910 = vpop.f32.mrb[0].mxu0
      %v911 = vadd.f32 0.0, %v910
      %v912 = vpop.f32.mrb[0].mxu0
      %v913 = vpop.f32.mrb[0].mxu0
      %v914 = vadd.f32 0.0, %v913
      %v915 = vpop.f32.mrb[0].mxu0
      %916 = vmatprep.mubr.bf16.mxu0 0
      %917 = vmatmul.mubr.bf16.gmra.mrb[0].mxu0 %v645
      %v918 = vpop.f32.mrb[0].mxu0
      %v919 = vadd.f32 0.0, %v918
      %v920 = vpop.f32.mrb[0].mxu0
      %v921 = vpop.f32.mrb[0].mxu0
      %v922 = vadd.f32 0.0, %v921
      %v923 = vpop.f32.mrb[0].mxu0
      %924 = vmatprep.mubr.bf16.mxu0 0
      %925 = vmatmul.mubr.bf16.gmra.mrb[0].mxu0 %v648
      %v926 = vpop.f32.mrb[0].mxu0
      %v927 = vadd.f32 0.0, %v926
      %v928 = vpop.f32.mrb[0].mxu0
      %v929 = vpop.f32.mrb[0].mxu0
      %v930 = vadd.f32 0.0, %v929
      %v931 = vpop.f32.mrb[0].mxu0
      %932 = vmatprep.mubr.bf16.mxu0 0
      %933 = vmatmul.mubr.bf16.gmra.mrb[0].mxu0 %v651
      %v934 = vpop.f32.mrb[0].mxu0
      %v935 = vadd.f32 0.0, %v934
      %v936 = vpop.f32.mrb[0].mxu0
      %v937 = vpop.f32.mrb[0].mxu0
      %v938 = vadd.f32 0.0, %v937
      %v939 = vpop.f32.mrb[0].mxu0
      %940 = vmatprep.mubr.bf16.mxu0 0
      %941 = vmatmul.mubr.bf16.gmra.mrb[0].mxu0 %v654
      %v942 = vpop.f32.mrb[0].mxu0
      %v943 = vadd.f32 0.0, %v942
      %v944 = vpop.f32.mrb[0].mxu0
      %v945 = vpop.f32.mrb[0].mxu0
      %v946 = vadd.f32 0.0, %v945
      %v947 = vpop.f32.mrb[0].mxu0
      %948 = vdwg.mxu0
      %v1013 = vunpack.c.l.b16 %v243
      %v1014 = vunpack.c.l.b16 %v244
      %v1015 = vunpack.c.l.b16 %v245
      %v1016 = vunpack.c.l.b16 %v246
      %v1017 = vunpack.c.l.b16 %v247
      %v1018 = vunpack.c.l.b16 %v248
      %v1019 = vunpack.c.l.b16 %v249
      %v1020 = vunpack.c.l.b16 %v250
      %v1021 = vunpack.c.l.b16 %v251
      %v1022 = vunpack.c.l.b16 %v252
      %v1023 = vunpack.c.l.b16 %v253
      %v1024 = vunpack.c.l.b16 %v254
      %v1025 = vunpack.c.l.b16 %v255
      %v1026 = vunpack.c.l.b16 %v256
      %v1027 = vunpack.c.l.b16 %v257
      %v1028 = vunpack.c.l.b16 %v258
      %v1029 = vunpack.c.l.b16 %v259
      %v1030 = vunpack.c.l.b16 %v260
      %v1031 = vunpack.c.l.b16 %v261
      %v1032 = vunpack.c.l.b16 %v262
      %v1033 = vunpack.c.l.b16 %v263
      %v1034 = vunpack.c.l.b16 %v264
      %v1035 = vunpack.c.l.b16 %v265
      %v1036 = vunpack.c.l.b16 %v266
      %v1037 = vunpack.c.l.b16 %v267
      %v1038 = vunpack.c.l.b16 %v268
      %v1039 = vunpack.c.l.b16 %v269
      %v1040 = vunpack.c.l.b16 %v270
      %v1041 = vunpack.c.l.b16 %v271
      %v1042 = vunpack.c.l.b16 %v272
      %v1043 = vunpack.c.l.b16 %v273
      %v1044 = vunpack.c.l.b16 %v274
      %v1045 = vunpack.c.l.b16 %v275
      %v1046 = vunpack.c.l.b16 %v276
      %v1047 = vunpack.c.l.b16 %v277
      %v1048 = vunpack.c.l.b16 %v278
      %v1049 = vunpack.c.l.b16 %v279
      %v1050 = vunpack.c.l.b16 %v280
      %v1051 = vunpack.c.l.b16 %v281
      %v1052 = vunpack.c.l.b16 %v282
      %v1053 = vunpack.c.l.b16 %v283
      %v1054 = vunpack.c.l.b16 %v284
      %v1055 = vunpack.c.l.b16 %v285
      %v1056 = vunpack.c.l.b16 %v286
      %v1057 = vunpack.c.l.b16 %v287
      %v1058 = vunpack.c.l.b16 %v288
      %v1059 = vunpack.c.l.b16 %v289
      %v1060 = vunpack.c.l.b16 %v290
      %v1061 = vunpack.c.l.b16 %v291
      %v1062 = vunpack.c.l.b16 %v292
      %v1063 = vunpack.c.l.b16 %v293
      %v1064 = vunpack.c.l.b16 %v294
      %v1065 = vunpack.c.l.b16 %v295
      %v1066 = vunpack.c.l.b16 %v296
      %v1067 = vunpack.c.l.b16 %v297
      %v1068 = vunpack.c.l.b16 %v298
      %v1069 = vunpack.c.l.b16 %v299
      %v1070 = vunpack.c.l.b16 %v300
      %v1071 = vunpack.c.l.b16 %v301
      %v1072 = vunpack.c.l.b16 %v302
      %v1073 = vunpack.c.l.b16 %v303
      %v1074 = vunpack.c.l.b16 %v304
      %v1075 = vunpack.c.l.b16 %v305
      %v1076 = vunpack.c.l.b16 %v306
      %v1077 = vpack.c.b16 %v1014, %v1013
      %v1078 = vpack.c.b16 %v1016, %v1015
      %v1079 = vpack.c.b16 %v1018, %v1017
      %v1080 = vpack.c.b16 %v1020, %v1019
      %v1081 = vpack.c.b16 %v1022, %v1021
      %v1082 = vpack.c.b16 %v1024, %v1023
      %v1083 = vpack.c.b16 %v1026, %v1025
      %v1084 = vpack.c.b16 %v1028, %v1027
      %v1085 = vpack.c.b16 %v1030, %v1029
      %v1086 = vpack.c.b16 %v1032, %v1031
      %v1087 = vpack.c.b16 %v1034, %v1033
      %v1088 = vpack.c.b16 %v1036, %v1035
      %v1089 = vpack.c.b16 %v1038, %v1037
      %v1090 = vpack.c.b16 %v1040, %v1039
      %v1091 = vpack.c.b16 %v1042, %v1041
      %v1092 = vpack.c.b16 %v1044, %v1043
      %v1093 = vpack.c.b16 %v1046, %v1045
      %v1094 = vpack.c.b16 %v1048, %v1047
      %v1095 = vpack.c.b16 %v1050, %v1049
      %v1096 = vpack.c.b16 %v1052, %v1051
      %v1097 = vpack.c.b16 %v1054, %v1053
      %v1098 = vpack.c.b16 %v1056, %v1055
      %v1099 = vpack.c.b16 %v1058, %v1057
      %v1100 = vpack.c.b16 %v1060, %v1059
      %v1101 = vpack.c.b16 %v1062, %v1061
      %v1102 = vpack.c.b16 %v1064, %v1063
      %v1103 = vpack.c.b16 %v1066, %v1065
      %v1104 = vpack.c.b16 %v1068, %v1067
      %v1105 = vpack.c.b16 %v1070, %v1069
      %v1106 = vpack.c.b16 %v1072, %v1071
      %v1107 = vpack.c.b16 %v1074, %v1073
      %v1108 = vpack.c.b16 %v1076, %v1075
      %v1118 = vunpack.c.l.b16 %v216
      %v1119 = vunpack.c.l.b16 %v217
      %v1120 = vunpack.c.l.b16 %v218
      %v1121 = vunpack.c.l.b16 %v219
      %v1122 = vunpack.c.l.b16 %v220
      %v1123 = vunpack.c.l.b16 %v221
      %v1124 = vunpack.c.l.b16 %v222
      %v1125 = vunpack.c.l.b16 %v223
      %v1126 = vunpack.c.l.b16 %v224
      %v1127 = vpack.c.b16 %v1119, %v1118
      %v1128 = vpack.c.b16 %v1121, %v1120
      %v1129 = vpack.c.b16 %v1123, %v1122
      %v1130 = vpack.c.b16 %v1125, %v1124
      %v1131 = vpack.c.b16 %v1126, %v1126
      %v1137 = vsel %vm559, %v1077, 0
      %v1140 = vsel %vm559, %v1078, 0
      %v1143 = vsel %vm559, %v1079, 0
      %v1146 = vsel %vm559, %v1080, 0
      %v1149 = vsel %vm559, %v1081, 0
      %v1152 = vsel %vm559, %v1082, 0
      %v1155 = vsel %vm559, %v1083, 0
      %v1158 = vsel %vm559, %v1084, 0
      %v1161 = vsel %vm559, %v1085, 0
      %v1164 = vsel %vm559, %v1086, 0
      %v1167 = vsel %vm559, %v1087, 0
      %v1170 = vsel %vm559, %v1088, 0
      %v1173 = vsel %vm559, %v1089, 0
      %v1176 = vsel %vm559, %v1090, 0
      %v1179 = vsel %vm559, %v1091, 0
      %v1182 = vsel %vm559, %v1092, 0
      %v1185 = vsel %vm559, %v1093, 0
      %v1188 = vsel %vm559, %v1094, 0
      %v1191 = vsel %vm559, %v1095, 0
      %v1194 = vsel %vm559, %v1096, 0
      %v1197 = vsel %vm559, %v1097, 0
      %v1200 = vsel %vm559, %v1098, 0
      %v1203 = vsel %vm559, %v1099, 0
      %v1206 = vsel %vm559, %v1100, 0
      %v1209 = vsel %vm559, %v1101, 0
      %v1212 = vsel %vm559, %v1102, 0
      %v1215 = vsel %vm559, %v1103, 0
      %v1218 = vsel %vm559, %v1104, 0
      %v1221 = vsel %vm559, %v1105, 0
      %v1224 = vsel %vm559, %v1106, 0
      %v1227 = vsel %vm559, %v1107, 0
      %v1230 = vsel %vm559, %v1108, 0
      %v1233 = vsel %vm656, %v1131, 0
      %1235 = vmatprep.subr.bf16.mxu0 0
      %1236 = vmatpush1.bf16.msra.mxu0 %v1127
      %1237 = vmatprep.subr.bf16.mxu0 0
      %1238 = vmatpush1.bf16.msra.mxu0 %v1128
      %1239 = vmatprep.subr.bf16.mxu0 0
      %1240 = vmatpush1.bf16.msra.mxu0 %v1129
      %1241 = vmatprep.subr.bf16.mxu0 0
      %1242 = vmatpush1.bf16.msra.mxu0 %v1130
      %1243 = vmatprep.subr.bf16.mxu0 0
      %1244 = vmatpush1.bf16.msra.mxu0 %v1233
      %1245 = vmatprep.subr.bf16.mxu0 0
      %1246 = vmatpush1.bf16.msra.mxu0 0
      %1247 = vmatprep.subr.bf16.mxu0 0
      %1248 = vmatpush1.bf16.msra.mxu0 0
      %1249 = vmatprep.subr.bf16.mxu0 0
      %1250 = vmatpush1.bf16.msra.mxu0 0
      %1251 = vmatprep.subr.bf16.mxu0 0
      %1252 = vmatpush1.bf16.msra.mxu0 0
      %1253 = vmatprep.subr.bf16.mxu0 0
      %1254 = vmatpush1.bf16.msra.mxu0 0
      %1255 = vmatprep.subr.bf16.mxu0 0
      %1256 = vmatpush1.bf16.msra.mxu0 0
      %1257 = vmatprep.subr.bf16.mxu0 0
      %1258 = vmatpush1.bf16.msra.mxu0 0
      %1259 = vmatprep.subr.bf16.mxu0 0
      %1260 = vmatpush1.bf16.msra.mxu0 0
      %1261 = vmatprep.subr.bf16.mxu0 0
      %1262 = vmatpush1.bf16.msra.mxu0 0
      %1263 = vmatprep.subr.bf16.mxu0 0
      %1264 = vmatpush1.bf16.msra.mxu0 0
      %1265 = vmatprep.subr.bf16.mxu0 0
      %1266 = vmatpush1.bf16.msra.mxu0 0
      %1267 = vmatprep.mubr.bf16.mxu0 0
      %1268 = vmatmul.mubr.bf16.gmra.mrb[0].mxu0 %v1137
      %v1269 = vpop.f32.mrb[0].mxu0
      %v1270 = vadd.f32 %v695, %v1269
      %v1271 = vpop.f32.mrb[0].mxu0
      %v1272 = vpop.f32.mrb[0].mxu0
      %v1273 = vadd.f32 %v698, %v1272
      %v1274 = vpop.f32.mrb[0].mxu0
      %1275 = vmatprep.mubr.bf16.mxu0 0
      %1276 = vmatmul.mubr.bf16.gmra.mrb[0].mxu0 %v1140
      %v1277 = vpop.f32.mrb[0].mxu0
      %v1278 = vadd.f32 %v703, %v1277
      %v1279 = vpop.f32.mrb[0].mxu0
      %v1280 = vpop.f32.mrb[0].mxu0
      %v1281 = vadd.f32 %v706, %v1280
      %v1282 = vpop.f32.mrb[0].mxu0
      %1283 = vmatprep.mubr.bf16.mxu0 0
      %1284 = vmatmul.mubr.bf16.gmra.mrb[0].mxu0 %v1143
      %v1285 = vpop.f32.mrb[0].mxu0
      %v1286 = vadd.f32 %v711, %v1285
      %v1287 = vpop.f32.mrb[0].mxu0
      %v1288 = vpop.f32.mrb[0].mxu0
      %v1289 = vadd.f32 %v714, %v1288
      %v1290 = vpop.f32.mrb[0].mxu0
      %1291 = vmatprep.mubr.bf16.mxu0 0
      %1292 = vmatmul.mubr.bf16.gmra.mrb[0].mxu0 %v1146
      %v1293 = vpop.f32.mrb[0].mxu0
      %v1294 = vadd.f32 %v719, %v1293
      %v1295 = vpop.f32.mrb[0].mxu0
      %v1296 = vpop.f32.mrb[0].mxu0
      %v1297 = vadd.f32 %v722, %v1296
      %v1298 = vpop.f32.mrb[0].mxu0
      %1299 = vmatprep.mubr.bf16.mxu0 0
      %1300 = vmatmul.mubr.bf16.gmra.mrb[0].mxu0 %v1149
      %v1301 = vpop.f32.mrb[0].mxu0
      %v1302 = vadd.f32 %v727, %v1301
      %v1303 = vpop.f32.mrb[0].mxu0
      %v1304 = vpop.f32.mrb[0].mxu0
      %v1305 = vadd.f32 %v730, %v1304
      %v1306 = vpop.f32.mrb[0].mxu0
      %1307 = vmatprep.mubr.bf16.mxu0 0
      %1308 = vmatmul.mubr.bf16.gmra.mrb[0].mxu0 %v1152
      %v1309 = vpop.f32.mrb[0].mxu0
      %v1310 = vadd.f32 %v735, %v1309
      %v1311 = vpop.f32.mrb[0].mxu0
      %v1312 = vpop.f32.mrb[0].mxu0
      %v1313 = vadd.f32 %v738, %v1312
      %v1314 = vpop.f32.mrb[0].mxu0
      %1315 = vmatprep.mubr.bf16.mxu0 0
      %1316 = vmatmul.mubr.bf16.gmra.mrb[0].mxu0 %v1155
      %v1317 = vpop.f32.mrb[0].mxu0
      %v1318 = vadd.f32 %v743, %v1317
      %v1319 = vpop.f32.mrb[0].mxu0
      %v1320 = vpop.f32.mrb[0].mxu0
      %v1321 = vadd.f32 %v746, %v1320
      %v1322 = vpop.f32.mrb[0].mxu0
      %1323 = vmatprep.mubr.bf16.mxu0 0
      %1324 = vmatmul.mubr.bf16.gmra.mrb[0].mxu0 %v1158
      %v1325 = vpop.f32.mrb[0].mxu0
      %v1326 = vadd.f32 %v751, %v1325
      %v1327 = vpop.f32.mrb[0].mxu0
      %v1328 = vpop.f32.mrb[0].mxu0
      %v1329 = vadd.f32 %v754, %v1328
      %v1330 = vpop.f32.mrb[0].mxu0
      %1331 = vmatprep.mubr.bf16.mxu0 0
      %1332 = vmatmul.mubr.bf16.gmra.mrb[0].mxu0 %v1161
      %v1333 = vpop.f32.mrb[0].mxu0
      %v1334 = vadd.f32 %v759, %v1333
      %v1335 = vpop.f32.mrb[0].mxu0
      %v1336 = vpop.f32.mrb[0].mxu0
      %v1337 = vadd.f32 %v762, %v1336
      %v1338 = vpop.f32.mrb[0].mxu0
      %1339 = vmatprep.mubr.bf16.mxu0 0
      %1340 = vmatmul.mubr.bf16.gmra.mrb[0].mxu0 %v1164
      %v1341 = vpop.f32.mrb[0].mxu0
      %v1342 = vadd.f32 %v767, %v1341
      %v1343 = vpop.f32.mrb[0].mxu0
      %v1344 = vpop.f32.mrb[0].mxu0
      %v1345 = vadd.f32 %v770, %v1344
      %v1346 = vpop.f32.mrb[0].mxu0
      %1347 = vmatprep.mubr.bf16.mxu0 0
      %1348 = vmatmul.mubr.bf16.gmra.mrb[0].mxu0 %v1167
      %v1349 = vpop.f32.mrb[0].mxu0
      %v1350 = vadd.f32 %v775, %v1349
      %v1351 = vpop.f32.mrb[0].mxu0
      %v1352 = vpop.f32.mrb[0].mxu0
      %v1353 = vadd.f32 %v778, %v1352
      %v1354 = vpop.f32.mrb[0].mxu0
      %1355 = vmatprep.mubr.bf16.mxu0 0
      %1356 = vmatmul.mubr.bf16.gmra.mrb[0].mxu0 %v1170
      %v1357 = vpop.f32.mrb[0].mxu0
      %v1358 = vadd.f32 %v783, %v1357
      %v1359 = vpop.f32.mrb[0].mxu0
      %v1360 = vpop.f32.mrb[0].mxu0
      %v1361 = vadd.f32 %v786, %v1360
      %v1362 = vpop.f32.mrb[0].mxu0
      %1363 = vmatprep.mubr.bf16.mxu0 0
      %1364 = vmatmul.mubr.bf16.gmra.mrb[0].mxu0 %v1173
      %v1365 = vpop.f32.mrb[0].mxu0
      %v1366 = vadd.f32 %v791, %v1365
      %v1367 = vpop.f32.mrb[0].mxu0
      %v1368 = vpop.f32.mrb[0].mxu0
      %v1369 = vadd.f32 %v794, %v1368
      %v1370 = vpop.f32.mrb[0].mxu0
      %1371 = vmatprep.mubr.bf16.mxu0 0
      %1372 = vmatmul.mubr.bf16.gmra.mrb[0].mxu0 %v1176
      %v1373 = vpop.f32.mrb[0].mxu0
      %v1374 = vadd.f32 %v799, %v1373
      %v1375 = vpop.f32.mrb[0].mxu0
      %v1376 = vpop.f32.mrb[0].mxu0
      %v1377 = vadd.f32 %v802, %v1376
      %v1378 = vpop.f32.mrb[0].mxu0
      %1379 = vmatprep.mubr.bf16.mxu0 0
      %1380 = vmatmul.mubr.bf16.gmra.mrb[0].mxu0 %v1179
      %v1381 = vpop.f32.mrb[0].mxu0
      %v1382 = vadd.f32 %v807, %v1381
      %v1383 = vpop.f32.mrb[0].mxu0
      %v1384 = vpop.f32.mrb[0].mxu0
      %v1385 = vadd.f32 %v810, %v1384
      %v1386 = vpop.f32.mrb[0].mxu0
      %1387 = vmatprep.mubr.bf16.mxu0 0
      %1388 = vmatmul.mubr.bf16.gmra.mrb[0].mxu0 %v1182
      %v1389 = vpop.f32.mrb[0].mxu0
      %v1390 = vadd.f32 %v815, %v1389
      %v1391 = vpop.f32.mrb[0].mxu0
      %v1392 = vpop.f32.mrb[0].mxu0
      %v1393 = vadd.f32 %v818, %v1392
      %v1394 = vpop.f32.mrb[0].mxu0
      %1395 = vmatprep.mubr.bf16.mxu0 0
      %1396 = vmatmul.mubr.bf16.gmra.mrb[0].mxu0 %v1185
      %v1397 = vpop.f32.mrb[0].mxu0
      %v1398 = vadd.f32 %v823, %v1397
      %v1399 = vpop.f32.mrb[0].mxu0
      %v1400 = vpop.f32.mrb[0].mxu0
      %v1401 = vadd.f32 %v826, %v1400
      %v1402 = vpop.f32.mrb[0].mxu0
      %1403 = vmatprep.mubr.bf16.mxu0 0
      %1404 = vmatmul.mubr.bf16.gmra.mrb[0].mxu0 %v1188
      %v1405 = vpop.f32.mrb[0].mxu0
      %v1406 = vadd.f32 %v831, %v1405
      %v1407 = vpop.f32.mrb[0].mxu0
      %v1408 = vpop.f32.mrb[0].mxu0
      %v1409 = vadd.f32 %v834, %v1408
      %v1410 = vpop.f32.mrb[0].mxu0
      %1411 = vmatprep.mubr.bf16.mxu0 0
      %1412 = vmatmul.mubr.bf16.gmra.mrb[0].mxu0 %v1191
      %v1413 = vpop.f32.mrb[0].mxu0
      %v1414 = vadd.f32 %v839, %v1413
      %v1415 = vpop.f32.mrb[0].mxu0
      %v1416 = vpop.f32.mrb[0].mxu0
      %v1417 = vadd.f32 %v842, %v1416
      %v1418 = vpop.f32.mrb[0].mxu0
      %1419 = vmatprep.mubr.bf16.mxu0 0
      %1420 = vmatmul.mubr.bf16.gmra.mrb[0].mxu0 %v1194
      %v1421 = vpop.f32.mrb[0].mxu0
      %v1422 = vadd.f32 %v847, %v1421
      %v1423 = vpop.f32.mrb[0].mxu0
      %v1424 = vpop.f32.mrb[0].mxu0
      %v1425 = vadd.f32 %v850, %v1424
      %v1426 = vpop.f32.mrb[0].mxu0
      %1427 = vmatprep.mubr.bf16.mxu0 0
      %1428 = vmatmul.mubr.bf16.gmra.mrb[0].mxu0 %v1197
      %v1429 = vpop.f32.mrb[0].mxu0
      %v1430 = vadd.f32 %v855, %v1429
      %v1431 = vpop.f32.mrb[0].mxu0
      %v1432 = vpop.f32.mrb[0].mxu0
      %v1433 = vadd.f32 %v858, %v1432
      %v1434 = vpop.f32.mrb[0].mxu0
      %1435 = vmatprep.mubr.bf16.mxu0 0
      %1436 = vmatmul.mubr.bf16.gmra.mrb[0].mxu0 %v1200
      %v1437 = vpop.f32.mrb[0].mxu0
      %v1438 = vadd.f32 %v863, %v1437
      %v1439 = vpop.f32.mrb[0].mxu0
      %v1440 = vpop.f32.mrb[0].mxu0
      %v1441 = vadd.f32 %v866, %v1440
      %v1442 = vpop.f32.mrb[0].mxu0
      %1443 = vmatprep.mubr.bf16.mxu0 0
      %1444 = vmatmul.mubr.bf16.gmra.mrb[0].mxu0 %v1203
      %v1445 = vpop.f32.mrb[0].mxu0
      %v1446 = vadd.f32 %v871, %v1445
      %v1447 = vpop.f32.mrb[0].mxu0
      %v1448 = vpop.f32.mrb[0].mxu0
      %v1449 = vadd.f32 %v874, %v1448
      %v1450 = vpop.f32.mrb[0].mxu0
      %1451 = vmatprep.mubr.bf16.mxu0 0
      %1452 = vmatmul.mubr.bf16.gmra.mrb[0].mxu0 %v1206
      %v1453 = vpop.f32.mrb[0].mxu0
      %v1454 = vadd.f32 %v879, %v1453
      %v1455 = vpop.f32.mrb[0].mxu0
      %v1456 = vpop.f32.mrb[0].mxu0
      %v1457 = vadd.f32 %v882, %v1456
      %v1458 = vpop.f32.mrb[0].mxu0
      %1459 = vmatprep.mubr.bf16.mxu0 0
      %1460 = vmatmul.mubr.bf16.gmra.mrb[0].mxu0 %v1209
      %v1461 = vpop.f32.mrb[0].mxu0
      %v1462 = vadd.f32 %v887, %v1461
      %v1463 = vpop.f32.mrb[0].mxu0
      %v1464 = vpop.f32.mrb[0].mxu0
      %v1465 = vadd.f32 %v890, %v1464
      %v1466 = vpop.f32.mrb[0].mxu0
      %1467 = vmatprep.mubr.bf16.mxu0 0
      %1468 = vmatmul.mubr.bf16.gmra.mrb[0].mxu0 %v1212
      %v1469 = vpop.f32.mrb[0].mxu0
      %v1470 = vadd.f32 %v895, %v1469
      %v1471 = vpop.f32.mrb[0].mxu0
      %v1472 = vpop.f32.mrb[0].mxu0
      %v1473 = vadd.f32 %v898, %v1472
      %v1474 = vpop.f32.mrb[0].mxu0
      %1475 = vmatprep.mubr.bf16.mxu0 0
      %1476 = vmatmul.mubr.bf16.gmra.mrb[0].mxu0 %v1215
      %v1477 = vpop.f32.mrb[0].mxu0
      %v1478 = vadd.f32 %v903, %v1477
      %v1479 = vpop.f32.mrb[0].mxu0
      %v1480 = vpop.f32.mrb[0].mxu0
      %v1481 = vadd.f32 %v906, %v1480
      %v1482 = vpop.f32.mrb[0].mxu0
      %1483 = vmatprep.mubr.bf16.mxu0 0
      %1484 = vmatmul.mubr.bf16.gmra.mrb[0].mxu0 %v1218
      %v1485 = vpop.f32.mrb[0].mxu0
      %v1486 = vadd.f32 %v911, %v1485
      %v1487 = vpop.f32.mrb[0].mxu0
      %v1488 = vpop.f32.mrb[0].mxu0
      %v1489 = vadd.f32 %v914, %v1488
      %v1490 = vpop.f32.mrb[0].mxu0
      %1491 = vmatprep.mubr.bf16.mxu0 0
      %1492 = vmatmul.mubr.bf16.gmra.mrb[0].mxu0 %v1221
      %v1493 = vpop.f32.mrb[0].mxu0
      %v1494 = vadd.f32 %v919, %v1493
      %v1495 = vpop.f32.mrb[0].mxu0
      %v1496 = vpop.f32.mrb[0].mxu0
      %v1497 = vadd.f32 %v922, %v1496
      %v1498 = vpop.f32.mrb[0].mxu0
      %1499 = vmatprep.mubr.bf16.mxu0 0
      %1500 = vmatmul.mubr.bf16.gmra.mrb[0].mxu0 %v1224
      %v1501 = vpop.f32.mrb[0].mxu0
      %v1502 = vadd.f32 %v927, %v1501
      %v1503 = vpop.f32.mrb[0].mxu0
      %v1504 = vpop.f32.mrb[0].mxu0
      %v1505 = vadd.f32 %v930, %v1504
      %v1506 = vpop.f32.mrb[0].mxu0
      %1507 = vmatprep.mubr.bf16.mxu0 0
      %1508 = vmatmul.mubr.bf16.gmra.mrb[0].mxu0 %v1227
      %v1509 = vpop.f32.mrb[0].mxu0
      %v1510 = vadd.f32 %v935, %v1509
      %v1511 = vpop.f32.mrb[0].mxu0
      %v1512 = vpop.f32.mrb[0].mxu0
      %v1513 = vadd.f32 %v938, %v1512
      %v1514 = vpop.f32.mrb[0].mxu0
      %1515 = vmatprep.mubr.bf16.mxu0 0
      %1516 = vmatmul.mubr.bf16.gmra.mrb[0].mxu0 %v1230
      %v1517 = vpop.f32.mrb[0].mxu0
      %v1518 = vadd.f32 %v943, %v1517
      %v1519 = vpop.f32.mrb[0].mxu0
      %v1520 = vpop.f32.mrb[0].mxu0
      %v1521 = vadd.f32 %v946, %v1520
      %v1522 = vpop.f32.mrb[0].mxu0
      %1523 = vdwg.mxu0
      %s1524 = scalar_lea.vmem %s203, 64
      %v1525 = vld [vmem:[%s1524] sm:$0xf]
      %v1526 = vld [vmem:[%s1524 + $0x4] sm:$0xf]
      %v1527 = vld [vmem:[%s1524 + $0x8] sm:$0xf]
      %v1528 = vld [vmem:[%s1524 + $0xc] sm:$0xf]
      %v1529 = vld [vmem:[%s1524 + $0x10] sm:$0xf]
      %v1530 = vld [vmem:[%s1524 + $0x14] sm:$0xf]
      %v1531 = vld [vmem:[%s1524 + $0x18] sm:$0xf]
      %v1532 = vld [vmem:[%s1524 + $0x1c] sm:$0xf]
      %v1533 = vld [vmem:[%s1524 + $0x20] sm:$0xf]
      %v1534 = vld [vmem:[%s1524 + $0x24] sm:$0xf]
      %v1535 = vld [vmem:[%s1524 + $0x28] sm:$0xf]
      %v1536 = vld [vmem:[%s1524 + $0x2c] sm:$0xf]
      %v1537 = vld [vmem:[%s1524 + $0x30] sm:$0xf]
      %v1538 = vld [vmem:[%s1524 + $0x34] sm:$0xf]
      %v1539 = vld [vmem:[%s1524 + $0x38] sm:$0xf]
      %v1540 = vld [vmem:[%s1524 + $0x3c] sm:$0xf]
      %v1541 = vld [vmem:[%s1524 + $0x40] sm:$0xf]
      %v1542 = vld [vmem:[%s1524 + $0x44] sm:$0xf]
      %v1543 = vld [vmem:[%s1524 + $0x48] sm:$0xf]
      %v1544 = vld [vmem:[%s1524 + $0x4c] sm:$0xf]
      %v1545 = vld [vmem:[%s1524 + $0x50] sm:$0xf]
      %v1546 = vld [vmem:[%s1524 + $0x54] sm:$0xf]
      %v1547 = vld [vmem:[%s1524 + $0x58] sm:$0xf]
      %v1548 = vld [vmem:[%s1524 + $0x5c] sm:$0xf]
      %v1549 = vld [vmem:[%s1524 + $0x60] sm:$0xf]
      %v1550 = vld [vmem:[%s1524 + $0x64] sm:$0xf]
      %v1551 = vld [vmem:[%s1524 + $0x68] sm:$0xf]
      %v1552 = vld [vmem:[%s1524 + $0x6c] sm:$0xf]
      %v1553 = vld [vmem:[%s1524 + $0x70] sm:$0xf]
      %v1554 = vld [vmem:[%s1524 + $0x74] sm:$0xf]
      %v1555 = vld [vmem:[%s1524 + $0x78] sm:$0xf]
      %v1556 = vld [vmem:[%s1524 + $0x7c] sm:$0xf]
      %v1557 = vld [vmem:[%s1524 + $0x80] sm:$0xf]
      %v1558 = vld [vmem:[%s1524 + $0x84] sm:$0xf]
      %v1559 = vld [vmem:[%s1524 + $0x88] sm:$0xf]
      %v1560 = vld [vmem:[%s1524 + $0x8c] sm:$0xf]
      %v1561 = vld [vmem:[%s1524 + $0x90] sm:$0xf]
      %v1562 = vld [vmem:[%s1524 + $0x94] sm:$0xf]
      %v1563 = vld [vmem:[%s1524 + $0x98] sm:$0xf]
      %v1564 = vld [vmem:[%s1524 + $0x9c] sm:$0xf]
      %v1565 = vld [vmem:[%s1524 + $0xa0] sm:$0xf]
      %v1566 = vld [vmem:[%s1524 + $0xa4] sm:$0xf]
      %v1567 = vld [vmem:[%s1524 + $0xa8] sm:$0xf]
      %v1568 = vld [vmem:[%s1524 + $0xac] sm:$0xf]
      %v1569 = vld [vmem:[%s1524 + $0xb0] sm:$0xf]
      %v1570 = vld [vmem:[%s1524 + $0xb4] sm:$0xf]
      %v1571 = vld [vmem:[%s1524 + $0xb8] sm:$0xf]
      %v1572 = vld [vmem:[%s1524 + $0xbc] sm:$0xf]
      %v1573 = vld [vmem:[%s1524 + $0xc0] sm:$0xf]
      %v1574 = vld [vmem:[%s1524 + $0xc4] sm:$0xf]
      %v1575 = vld [vmem:[%s1524 + $0xc8] sm:$0xf]
      %v1576 = vld [vmem:[%s1524 + $0xcc] sm:$0xf]
      %v1577 = vld [vmem:[%s1524 + $0xd0] sm:$0xf]
      %v1578 = vld [vmem:[%s1524 + $0xd4] sm:$0xf]
      %v1579 = vld [vmem:[%s1524 + $0xd8] sm:$0xf]
      %v1580 = vld [vmem:[%s1524 + $0xdc] sm:$0xf]
      %v1581 = vld [vmem:[%s1524 + $0xe0] sm:$0xf]
      %v1582 = vld [vmem:[%s1524 + $0xe4] sm:$0xf]
      %v1583 = vld [vmem:[%s1524 + $0xe8] sm:$0xf]
      %v1584 = vld [vmem:[%s1524 + $0xec] sm:$0xf]
      %v1585 = vld [vmem:[%s1524 + $0xf0] sm:$0xf]
      %v1586 = vld [vmem:[%s1524 + $0xf4] sm:$0xf]
      %v1587 = vld [vmem:[%s1524 + $0xf8] sm:$0xf]
      %v1588 = vld [vmem:[%s1524 + $0xfc] sm:$0xf]
      %v1653 = vunpack.c.l.b16 %v1525
      %v1654 = vunpack.c.l.b16 %v1526
      %v1655 = vunpack.c.l.b16 %v1527
      %v1656 = vunpack.c.l.b16 %v1528
      %v1657 = vunpack.c.l.b16 %v1529
      %v1658 = vunpack.c.l.b16 %v1530
      %v1659 = vunpack.c.l.b16 %v1531
      %v1660 = vunpack.c.l.b16 %v1532
      %v1661 = vunpack.c.l.b16 %v1533
      %v1662 = vunpack.c.l.b16 %v1534
      %v1663 = vunpack.c.l.b16 %v1535
      %v1664 = vunpack.c.l.b16 %v1536
      %v1665 = vunpack.c.l.b16 %v1537
      %v1666 = vunpack.c.l.b16 %v1538
      %v1667 = vunpack.c.l.b16 %v1539
      %v1668 = vunpack.c.l.b16 %v1540
      %v1669 = vunpack.c.l.b16 %v1541
      %v1670 = vunpack.c.l.b16 %v1542
      %v1671 = vunpack.c.l.b16 %v1543
      %v1672 = vunpack.c.l.b16 %v1544
      %v1673 = vunpack.c.l.b16 %v1545
      %v1674 = vunpack.c.l.b16 %v1546
      %v1675 = vunpack.c.l.b16 %v1547
      %v1676 = vunpack.c.l.b16 %v1548
      %v1677 = vunpack.c.l.b16 %v1549
      %v1678 = vunpack.c.l.b16 %v1550
      %v1679 = vunpack.c.l.b16 %v1551
      %v1680 = vunpack.c.l.b16 %v1552
      %v1681 = vunpack.c.l.b16 %v1553
      %v1682 = vunpack.c.l.b16 %v1554
      %v1683 = vunpack.c.l.b16 %v1555
      %v1684 = vunpack.c.l.b16 %v1556
      %v1685 = vunpack.c.l.b16 %v1557
      %v1686 = vunpack.c.l.b16 %v1558
      %v1687 = vunpack.c.l.b16 %v1559
      %v1688 = vunpack.c.l.b16 %v1560
      %v1689 = vunpack.c.l.b16 %v1561
      %v1690 = vunpack.c.l.b16 %v1562
      %v1691 = vunpack.c.l.b16 %v1563
      %v1692 = vunpack.c.l.b16 %v1564
      %v1693 = vunpack.c.l.b16 %v1565
      %v1694 = vunpack.c.l.b16 %v1566
      %v1695 = vunpack.c.l.b16 %v1567
      %v1696 = vunpack.c.l.b16 %v1568
      %v1697 = vunpack.c.l.b16 %v1569
      %v1698 = vunpack.c.l.b16 %v1570
      %v1699 = vunpack.c.l.b16 %v1571
      %v1700 = vunpack.c.l.b16 %v1572
      %v1701 = vunpack.c.l.b16 %v1573
      %v1702 = vunpack.c.l.b16 %v1574
      %v1703 = vunpack.c.l.b16 %v1575
      %v1704 = vunpack.c.l.b16 %v1576
      %v1705 = vunpack.c.l.b16 %v1577
      %v1706 = vunpack.c.l.b16 %v1578
      %v1707 = vunpack.c.l.b16 %v1579
      %v1708 = vunpack.c.l.b16 %v1580
      %v1709 = vunpack.c.l.b16 %v1581
      %v1710 = vunpack.c.l.b16 %v1582
      %v1711 = vunpack.c.l.b16 %v1583
      %v1712 = vunpack.c.l.b16 %v1584
      %v1713 = vunpack.c.l.b16 %v1585
      %v1714 = vunpack.c.l.b16 %v1586
      %v1715 = vunpack.c.l.b16 %v1587
      %v1716 = vunpack.c.l.b16 %v1588
      %v1717 = vpack.c.b16 %v1654, %v1653
      %v1718 = vpack.c.b16 %v1656, %v1655
      %v1719 = vpack.c.b16 %v1658, %v1657
      %v1720 = vpack.c.b16 %v1660, %v1659
      %v1721 = vpack.c.b16 %v1662, %v1661
      %v1722 = vpack.c.b16 %v1664, %v1663
      %v1723 = vpack.c.b16 %v1666, %v1665
      %v1724 = vpack.c.b16 %v1668, %v1667
      %v1725 = vpack.c.b16 %v1670, %v1669
      %v1726 = vpack.c.b16 %v1672, %v1671
      %v1727 = vpack.c.b16 %v1674, %v1673
      %v1728 = vpack.c.b16 %v1676, %v1675
      %v1729 = vpack.c.b16 %v1678, %v1677
      %v1730 = vpack.c.b16 %v1680, %v1679
      %v1731 = vpack.c.b16 %v1682, %v1681
      %v1732 = vpack.c.b16 %v1684, %v1683
      %v1733 = vpack.c.b16 %v1686, %v1685
      %v1734 = vpack.c.b16 %v1688, %v1687
      %v1735 = vpack.c.b16 %v1690, %v1689
      %v1736 = vpack.c.b16 %v1692, %v1691
      %v1737 = vpack.c.b16 %v1694, %v1693
      %v1738 = vpack.c.b16 %v1696, %v1695
      %v1739 = vpack.c.b16 %v1698, %v1697
      %v1740 = vpack.c.b16 %v1700, %v1699
      %v1741 = vpack.c.b16 %v1702, %v1701
      %v1742 = vpack.c.b16 %v1704, %v1703
      %v1743 = vpack.c.b16 %v1706, %v1705
      %v1744 = vpack.c.b16 %v1708, %v1707
      %v1745 = vpack.c.b16 %v1710, %v1709
      %v1746 = vpack.c.b16 %v1712, %v1711
      %v1747 = vpack.c.b16 %v1714, %v1713
      %v1748 = vpack.c.b16 %v1716, %v1715
      %v1758 = vunpack.c.l.b16 %v234
      %v1759 = vunpack.c.l.b16 %v235
      %v1760 = vunpack.c.l.b16 %v236
      %v1761 = vunpack.c.l.b16 %v237
      %v1762 = vunpack.c.l.b16 %v238
      %v1763 = vunpack.c.l.b16 %v239
      %v1764 = vunpack.c.l.b16 %v240
      %v1765 = vunpack.c.l.b16 %v241
      %v1766 = vunpack.c.l.b16 %v242
      %v1767 = vpack.c.b16 %v1759, %v1758
      %v1768 = vpack.c.b16 %v1761, %v1760
      %v1769 = vpack.c.b16 %v1763, %v1762
      %v1770 = vpack.c.b16 %v1765, %v1764
      %v1771 = vpack.c.b16 %v1766, %v1766
      %v1777 = vsel %vm559, %v1717, 0
      %v1780 = vsel %vm559, %v1718, 0
      %v1783 = vsel %vm559, %v1719, 0
      %v1786 = vsel %vm559, %v1720, 0
      %v1789 = vsel %vm559, %v1721, 0
      %v1792 = vsel %vm559, %v1722, 0
      %v1795 = vsel %vm559, %v1723, 0
      %v1798 = vsel %vm559, %v1724, 0
      %v1801 = vsel %vm559, %v1725, 0
      %v1804 = vsel %vm559, %v1726, 0
      %v1807 = vsel %vm559, %v1727, 0
      %v1810 = vsel %vm559, %v1728, 0
      %v1813 = vsel %vm559, %v1729, 0
      %v1816 = vsel %vm559, %v1730, 0
      %v1819 = vsel %vm559, %v1731, 0
      %v1822 = vsel %vm559, %v1732, 0
      %v1825 = vsel %vm559, %v1733, 0
      %v1828 = vsel %vm559, %v1734, 0
      %v1831 = vsel %vm559, %v1735, 0
      %v1834 = vsel %vm559, %v1736, 0
      %v1837 = vsel %vm559, %v1737, 0
      %v1840 = vsel %vm559, %v1738, 0
      %v1843 = vsel %vm559, %v1739, 0
      %v1846 = vsel %vm559, %v1740, 0
      %v1849 = vsel %vm559, %v1741, 0
      %v1852 = vsel %vm559, %v1742, 0
      %v1855 = vsel %vm559, %v1743, 0
      %v1858 = vsel %vm559, %v1744, 0
      %v1861 = vsel %vm559, %v1745, 0
      %v1864 = vsel %vm559, %v1746, 0
      %v1867 = vsel %vm559, %v1747, 0
      %v1870 = vsel %vm559, %v1748, 0
      %v1873 = vsel %vm656, %v1771, 0
      %1875 = vmatprep.subr.bf16.mxu0 0
      %1876 = vmatpush1.bf16.msra.mxu0 %v1767
      %1877 = vmatprep.subr.bf16.mxu0 0
      %1878 = vmatpush1.bf16.msra.mxu0 %v1768
      %1879 = vmatprep.subr.bf16.mxu0 0
      %1880 = vmatpush1.bf16.msra.mxu0 %v1769
      %1881 = vmatprep.subr.bf16.mxu0 0
      %1882 = vmatpush1.bf16.msra.mxu0 %v1770
      %1883 = vmatprep.subr.bf16.mxu0 0
      %1884 = vmatpush1.bf16.msra.mxu0 %v1873
      %1885 = vmatprep.subr.bf16.mxu0 0
      %1886 = vmatpush1.bf16.msra.mxu0 0
      %1887 = vmatprep.subr.bf16.mxu0 0
      %1888 = vmatpush1.bf16.msra.mxu0 0
      %1889 = vmatprep.subr.bf16.mxu0 0
      %1890 = vmatpush1.bf16.msra.mxu0 0
      %1891 = vmatprep.subr.bf16.mxu0 0
      %1892 = vmatpush1.bf16.msra.mxu0 0
      %1893 = vmatprep.subr.bf16.mxu0 0
      %1894 = vmatpush1.bf16.msra.mxu0 0
      %1895 = vmatprep.subr.bf16.mxu0 0
      %1896 = vmatpush1.bf16.msra.mxu0 0
      %1897 = vmatprep.subr.bf16.mxu0 0
      %1898 = vmatpush1.bf16.msra.mxu0 0
      %1899 = vmatprep.subr.bf16.mxu0 0
      %1900 = vmatpush1.bf16.msra.mxu0 0
      %1901 = vmatprep.subr.bf16.mxu0 0
      %1902 = vmatpush1.bf16.msra.mxu0 0
      %1903 = vmatprep.subr.bf16.mxu0 0
      %1904 = vmatpush1.bf16.msra.mxu0 0
      %1905 = vmatprep.subr.bf16.mxu0 0
      %1906 = vmatpush1.bf16.msra.mxu0 0
      %1907 = vmatprep.mubr.bf16.mxu0 0
      %1908 = vmatmul.mubr.bf16.gmra.mrb[0].mxu0 %v1777
      %v1909 = vpop.f32.mrb[0].mxu0
      %v1910 = vadd.f32 0.0, %v1909
      %v1911 = vpop.f32.mrb[0].mxu0
      %v1912 = vpop.f32.mrb[0].mxu0
      %v1913 = vadd.f32 0.0, %v1912
      %v1914 = vpop.f32.mrb[0].mxu0
      %1915 = vmatprep.mubr.bf16.mxu0 0
      %1916 = vmatmul.mubr.bf16.gmra.mrb[0].mxu0 %v1780
      %v1917 = vpop.f32.mrb[0].mxu0
      %v1918 = vadd.f32 0.0, %v1917
      %v1919 = vpop.f32.mrb[0].mxu0
      %v1920 = vpop.f32.mrb[0].mxu0
      %v1921 = vadd.f32 0.0, %v1920
      %v1922 = vpop.f32.mrb[0].mxu0
      %1923 = vmatprep.mubr.bf16.mxu0 0
      %1924 = vmatmul.mubr.bf16.gmra.mrb[0].mxu0 %v1783
      %v1925 = vpop.f32.mrb[0].mxu0
      %v1926 = vadd.f32 0.0, %v1925
      %v1927 = vpop.f32.mrb[0].mxu0
      %v1928 = vpop.f32.mrb[0].mxu0
      %v1929 = vadd.f32 0.0, %v1928
      %v1930 = vpop.f32.mrb[0].mxu0
      %1931 = vmatprep.mubr.bf16.mxu0 0
      %1932 = vmatmul.mubr.bf16.gmra.mrb[0].mxu0 %v1786
      %v1933 = vpop.f32.mrb[0].mxu0
      %v1934 = vadd.f32 0.0, %v1933
      %v1935 = vpop.f32.mrb[0].mxu0
      %v1936 = vpop.f32.mrb[0].mxu0
      %v1937 = vadd.f32 0.0, %v1936
      %v1938 = vpop.f32.mrb[0].mxu0
      %1939 = vmatprep.mubr.bf16.mxu0 0
      %1940 = vmatmul.mubr.bf16.gmra.mrb[0].mxu0 %v1789
      %v1941 = vpop.f32.mrb[0].mxu0
      %v1942 = vadd.f32 0.0, %v1941
      %v1943 = vpop.f32.mrb[0].mxu0
      %v1944 = vpop.f32.mrb[0].mxu0
      %v1945 = vadd.f32 0.0, %v1944
      %v1946 = vpop.f32.mrb[0].mxu0
      %1947 = vmatprep.mubr.bf16.mxu0 0
      %1948 = vmatmul.mubr.bf16.gmra.mrb[0].mxu0 %v1792
      %v1949 = vpop.f32.mrb[0].mxu0
      %v1950 = vadd.f32 0.0, %v1949
      %v1951 = vpop.f32.mrb[0].mxu0
      %v1952 = vpop.f32.mrb[0].mxu0
      %v1953 = vadd.f32 0.0, %v1952
      %v1954 = vpop.f32.mrb[0].mxu0
      %1955 = vmatprep.mubr.bf16.mxu0 0
      %1956 = vmatmul.mubr.bf16.gmra.mrb[0].mxu0 %v1795
      %v1957 = vpop.f32.mrb[0].mxu0
      %v1958 = vadd.f32 0.0, %v1957
      %v1959 = vpop.f32.mrb[0].mxu0
      %v1960 = vpop.f32.mrb[0].mxu0
      %v1961 = vadd.f32 0.0, %v1960
      %v1962 = vpop.f32.mrb[0].mxu0
      %1963 = vmatprep.mubr.bf16.mxu0 0
      %1964 = vmatmul.mubr.bf16.gmra.mrb[0].mxu0 %v1798
      %v1965 = vpop.f32.mrb[0].mxu0
      %v1966 = vadd.f32 0.0, %v1965
      %v1967 = vpop.f32.mrb[0].mxu0
      %v1968 = vpop.f32.mrb[0].mxu0
      %v1969 = vadd.f32 0.0, %v1968
      %v1970 = vpop.f32.mrb[0].mxu0
      %1971 = vmatprep.mubr.bf16.mxu0 0
      %1972 = vmatmul.mubr.bf16.gmra.mrb[0].mxu0 %v1801
      %v1973 = vpop.f32.mrb[0].mxu0
      %v1974 = vadd.f32 0.0, %v1973
      %v1975 = vpop.f32.mrb[0].mxu0
      %v1976 = vpop.f32.mrb[0].mxu0
      %v1977 = vadd.f32 0.0, %v1976
      %v1978 = vpop.f32.mrb[0].mxu0
      %1979 = vmatprep.mubr.bf16.mxu0 0
      %1980 = vmatmul.mubr.bf16.gmra.mrb[0].mxu0 %v1804
      %v1981 = vpop.f32.mrb[0].mxu0
      %v1982 = vadd.f32 0.0, %v1981
      %v1983 = vpop.f32.mrb[0].mxu0
      %v1984 = vpop.f32.mrb[0].mxu0
      %v1985 = vadd.f32 0.0, %v1984
      %v1986 = vpop.f32.mrb[0].mxu0
      %1987 = vmatprep.mubr.bf16.mxu0 0
      %1988 = vmatmul.mubr.bf16.gmra.mrb[0].mxu0 %v1807
      %v1989 = vpop.f32.mrb[0].mxu0
      %v1990 = vadd.f32 0.0, %v1989
      %v1991 = vpop.f32.mrb[0].mxu0
      %v1992 = vpop.f32.mrb[0].mxu0
      %v1993 = vadd.f32 0.0, %v1992
      %v1994 = vpop.f32.mrb[0].mxu0
      %1995 = vmatprep.mubr.bf16.mxu0 0
      %1996 = vmatmul.mubr.bf16.gmra.mrb[0].mxu0 %v1810
      %v1997 = vpop.f32.mrb[0].mxu0
      %v1998 = vadd.f32 0.0, %v1997
      %v1999 = vpop.f32.mrb[0].mxu0
      %v2000 = vpop.f32.mrb[0].mxu0
      %v2001 = vadd.f32 0.0, %v2000
      %v2002 = vpop.f32.mrb[0].mxu0
      %2003 = vmatprep.mubr.bf16.mxu0 0
      %2004 = vmatmul.mubr.bf16.gmra.mrb[0].mxu0 %v1813
      %v2005 = vpop.f32.mrb[0].mxu0
      %v2006 = vadd.f32 0.0, %v2005
      %v2007 = vpop.f32.mrb[0].mxu0
      %v2008 = vpop.f32.mrb[0].mxu0
      %v2009 = vadd.f32 0.0, %v2008
      %v2010 = vpop.f32.mrb[0].mxu0
      %2011 = vmatprep.mubr.bf16.mxu0 0
      %2012 = vmatmul.mubr.bf16.gmra.mrb[0].mxu0 %v1816
      %v2013 = vpop.f32.mrb[0].mxu0
      %v2014 = vadd.f32 0.0, %v2013
      %v2015 = vpop.f32.mrb[0].mxu0
      %v2016 = vpop.f32.mrb[0].mxu0
      %v2017 = vadd.f32 0.0, %v2016
      %v2018 = vpop.f32.mrb[0].mxu0
      %2019 = vmatprep.mubr.bf16.mxu0 0
      %2020 = vmatmul.mubr.bf16.gmra.mrb[0].mxu0 %v1819
      %v2021 = vpop.f32.mrb[0].mxu0
      %v2022 = vadd.f32 0.0, %v2021
      %v2023 = vpop.f32.mrb[0].mxu0
      %v2024 = vpop.f32.mrb[0].mxu0
      %v2025 = vadd.f32 0.0, %v2024
      %v2026 = vpop.f32.mrb[0].mxu0
      %2027 = vmatprep.mubr.bf16.mxu0 0
      %2028 = vmatmul.mubr.bf16.gmra.mrb[0].mxu0 %v1822
      %v2029 = vpop.f32.mrb[0].mxu0
      %v2030 = vadd.f32 0.0, %v2029
      %v2031 = vpop.f32.mrb[0].mxu0
      %v2032 = vpop.f32.mrb[0].mxu0
      %v2033 = vadd.f32 0.0, %v2032
      %v2034 = vpop.f32.mrb[0].mxu0
      %2035 = vmatprep.mubr.bf16.mxu0 0
      %2036 = vmatmul.mubr.bf16.gmra.mrb[0].mxu0 %v1825
      %v2037 = vpop.f32.mrb[0].mxu0
      %v2038 = vadd.f32 0.0, %v2037
      %v2039 = vpop.f32.mrb[0].mxu0
      %v2040 = vpop.f32.mrb[0].mxu0
      %v2041 = vadd.f32 0.0, %v2040
      %v2042 = vpop.f32.mrb[0].mxu0
      %2043 = vmatprep.mubr.bf16.mxu0 0
      %2044 = vmatmul.mubr.bf16.gmra.mrb[0].mxu0 %v1828
      %v2045 = vpop.f32.mrb[0].mxu0
      %v2046 = vadd.f32 0.0, %v2045
      %v2047 = vpop.f32.mrb[0].mxu0
      %v2048 = vpop.f32.mrb[0].mxu0
      %v2049 = vadd.f32 0.0, %v2048
      %v2050 = vpop.f32.mrb[0].mxu0
      %2051 = vmatprep.mubr.bf16.mxu0 0
      %2052 = vmatmul.mubr.bf16.gmra.mrb[0].mxu0 %v1831
      %v2053 = vpop.f32.mrb[0].mxu0
      %v2054 = vadd.f32 0.0, %v2053
      %v2055 = vpop.f32.mrb[0].mxu0
      %v2056 = vpop.f32.mrb[0].mxu0
      %v2057 = vadd.f32 0.0, %v2056
      %v2058 = vpop.f32.mrb[0].mxu0
      %2059 = vmatprep.mubr.bf16.mxu0 0
      %2060 = vmatmul.mubr.bf16.gmra.mrb[0].mxu0 %v1834
      %v2061 = vpop.f32.mrb[0].mxu0
      %v2062 = vadd.f32 0.0, %v2061
      %v2063 = vpop.f32.mrb[0].mxu0
      %v2064 = vpop.f32.mrb[0].mxu0
      %v2065 = vadd.f32 0.0, %v2064
      %v2066 = vpop.f32.mrb[0].mxu0
      %2067 = vmatprep.mubr.bf16.mxu0 0
      %2068 = vmatmul.mubr.bf16.gmra.mrb[0].mxu0 %v1837
      %v2069 = vpop.f32.mrb[0].mxu0
      %v2070 = vadd.f32 0.0, %v2069
      %v2071 = vpop.f32.mrb[0].mxu0
      %v2072 = vpop.f32.mrb[0].mxu0
      %v2073 = vadd.f32 0.0, %v2072
      %v2074 = vpop.f32.mrb[0].mxu0
      %2075 = vmatprep.mubr.bf16.mxu0 0
      %2076 = vmatmul.mubr.bf16.gmra.mrb[0].mxu0 %v1840
      %v2077 = vpop.f32.mrb[0].mxu0
      %v2078 = vadd.f32 0.0, %v2077
      %v2079 = vpop.f32.mrb[0].mxu0
      %v2080 = vpop.f32.mrb[0].mxu0
      %v2081 = vadd.f32 0.0, %v2080
      %v2082 = vpop.f32.mrb[0].mxu0
      %2083 = vmatprep.mubr.bf16.mxu0 0
      %2084 = vmatmul.mubr.bf16.gmra.mrb[0].mxu0 %v1843
      %v2085 = vpop.f32.mrb[0].mxu0
      %v2086 = vadd.f32 0.0, %v2085
      %v2087 = vpop.f32.mrb[0].mxu0
      %v2088 = vpop.f32.mrb[0].mxu0
      %v2089 = vadd.f32 0.0, %v2088
      %v2090 = vpop.f32.mrb[0].mxu0
      %2091 = vmatprep.mubr.bf16.mxu0 0
      %2092 = vmatmul.mubr.bf16.gmra.mrb[0].mxu0 %v1846
      %v2093 = vpop.f32.mrb[0].mxu0
      %v2094 = vadd.f32 0.0, %v2093
      %v2095 = vpop.f32.mrb[0].mxu0
      %v2096 = vpop.f32.mrb[0].mxu0
      %v2097 = vadd.f32 0.0, %v2096
      %v2098 = vpop.f32.mrb[0].mxu0
      %2099 = vmatprep.mubr.bf16.mxu0 0
      %2100 = vmatmul.mubr.bf16.gmra.mrb[0].mxu0 %v1849
      %v2101 = vpop.f32.mrb[0].mxu0
      %v2102 = vadd.f32 0.0, %v2101
      %v2103 = vpop.f32.mrb[0].mxu0
      %v2104 = vpop.f32.mrb[0].mxu0
      %v2105 = vadd.f32 0.0, %v2104
      %v2106 = vpop.f32.mrb[0].mxu0
      %2107 = vmatprep.mubr.bf16.mxu0 0
      %2108 = vmatmul.mubr.bf16.gmra.mrb[0].mxu0 %v1852
      %v2109 = vpop.f32.mrb[0].mxu0
      %v2110 = vadd.f32 0.0, %v2109
      %v2111 = vpop.f32.mrb[0].mxu0
      %v2112 = vpop.f32.mrb[0].mxu0
      %v2113 = vadd.f32 0.0, %v2112
      %v2114 = vpop.f32.mrb[0].mxu0
      %2115 = vmatprep.mubr.bf16.mxu0 0
      %2116 = vmatmul.mubr.bf16.gmra.mrb[0].mxu0 %v1855
      %v2117 = vpop.f32.mrb[0].mxu0
      %v2118 = vadd.f32 0.0, %v2117
      %v2119 = vpop.f32.mrb[0].mxu0
      %v2120 = vpop.f32.mrb[0].mxu0
      %v2121 = vadd.f32 0.0, %v2120
      %v2122 = vpop.f32.mrb[0].mxu0
      %2123 = vmatprep.mubr.bf16.mxu0 0
      %2124 = vmatmul.mubr.bf16.gmra.mrb[0].mxu0 %v1858
      %v2125 = vpop.f32.mrb[0].mxu0
      %v2126 = vadd.f32 0.0, %v2125
      %v2127 = vpop.f32.mrb[0].mxu0
      %v2128 = vpop.f32.mrb[0].mxu0
      %v2129 = vadd.f32 0.0, %v2128
      %v2130 = vpop.f32.mrb[0].mxu0
      %2131 = vmatprep.mubr.bf16.mxu0 0
      %2132 = vmatmul.mubr.bf16.gmra.mrb[0].mxu0 %v1861
      %v2133 = vpop.f32.mrb[0].mxu0
      %v2134 = vadd.f32 0.0, %v2133
      %v2135 = vpop.f32.mrb[0].mxu0
      %v2136 = vpop.f32.mrb[0].mxu0
      %v2137 = vadd.f32 0.0, %v2136
      %v2138 = vpop.f32.mrb[0].mxu0
      %2139 = vmatprep.mubr.bf16.mxu0 0
      %2140 = vmatmul.mubr.bf16.gmra.mrb[0].mxu0 %v1864
      %v2141 = vpop.f32.mrb[0].mxu0
      %v2142 = vadd.f32 0.0, %v2141
      %v2143 = vpop.f32.mrb[0].mxu0
      %v2144 = vpop.f32.mrb[0].mxu0
      %v2145 = vadd.f32 0.0, %v2144
      %v2146 = vpop.f32.mrb[0].mxu0
      %2147 = vmatprep.mubr.bf16.mxu0 0
      %2148 = vmatmul.mubr.bf16.gmra.mrb[0].mxu0 %v1867
      %v2149 = vpop.f32.mrb[0].mxu0
      %v2150 = vadd.f32 0.0, %v2149
      %v2151 = vpop.f32.mrb[0].mxu0
      %v2152 = vpop.f32.mrb[0].mxu0
      %v2153 = vadd.f32 0.0, %v2152
      %v2154 = vpop.f32.mrb[0].mxu0
      %2155 = vmatprep.mubr.bf16.mxu0 0
      %2156 = vmatmul.mubr.bf16.gmra.mrb[0].mxu0 %v1870
      %v2157 = vpop.f32.mrb[0].mxu0
      %v2158 = vadd.f32 0.0, %v2157
      %v2159 = vpop.f32.mrb[0].mxu0
      %v2160 = vpop.f32.mrb[0].mxu0
      %v2161 = vadd.f32 0.0, %v2160
      %v2162 = vpop.f32.mrb[0].mxu0
      %2163 = vdwg.mxu0
      %v2164 = vadd.f32 %v1270, %v1910
      %v2165 = vadd.f32 %v1273, %v1913
      %v2166 = vadd.f32 %v1278, %v1918
      %v2167 = vadd.f32 %v1281, %v1921
      %v2168 = vadd.f32 %v1286, %v1926
      %v2169 = vadd.f32 %v1289, %v1929
      %v2170 = vadd.f32 %v1294, %v1934
      %v2171 = vadd.f32 %v1297, %v1937
      %v2172 = vadd.f32 %v1302, %v1942
      %v2173 = vadd.f32 %v1305, %v1945
      %v2174 = vadd.f32 %v1310, %v1950
      %v2175 = vadd.f32 %v1313, %v1953
      %v2176 = vadd.f32 %v1318, %v1958
      %v2177 = vadd.f32 %v1321, %v1961
      %v2178 = vadd.f32 %v1326, %v1966
      %v2179 = vadd.f32 %v1329, %v1969
      %v2180 = vadd.f32 %v1334, %v1974
      %v2181 = vadd.f32 %v1337, %v1977
      %v2182 = vadd.f32 %v1342, %v1982
      %v2183 = vadd.f32 %v1345, %v1985
      %v2184 = vadd.f32 %v1350, %v1990
      %v2185 = vadd.f32 %v1353, %v1993
      %v2186 = vadd.f32 %v1358, %v1998
      %v2187 = vadd.f32 %v1361, %v2001
      %v2188 = vadd.f32 %v1366, %v2006
      %v2189 = vadd.f32 %v1369, %v2009
      %v2190 = vadd.f32 %v1374, %v2014
      %v2191 = vadd.f32 %v1377, %v2017
      %v2192 = vadd.f32 %v1382, %v2022
      %v2193 = vadd.f32 %v1385, %v2025
      %v2194 = vadd.f32 %v1390, %v2030
      %v2195 = vadd.f32 %v1393, %v2033
      %v2196 = vadd.f32 %v1398, %v2038
      %v2197 = vadd.f32 %v1401, %v2041
      %v2198 = vadd.f32 %v1406, %v2046
      %v2199 = vadd.f32 %v1409, %v2049
      %v2200 = vadd.f32 %v1414, %v2054
      %v2201 = vadd.f32 %v1417, %v2057
      %v2202 = vadd.f32 %v1422, %v2062
      %v2203 = vadd.f32 %v1425, %v2065
      %v2204 = vadd.f32 %v1430, %v2070
      %v2205 = vadd.f32 %v1433, %v2073
      %v2206 = vadd.f32 %v1438, %v2078
      %v2207 = vadd.f32 %v1441, %v2081
      %v2208 = vadd.f32 %v1446, %v2086
      %v2209 = vadd.f32 %v1449, %v2089
      %v2210 = vadd.f32 %v1454, %v2094
      %v2211 = vadd.f32 %v1457, %v2097
      %v2212 = vadd.f32 %v1462, %v2102
      %v2213 = vadd.f32 %v1465, %v2105
      %v2214 = vadd.f32 %v1470, %v2110
      %v2215 = vadd.f32 %v1473, %v2113
      %v2216 = vadd.f32 %v1478, %v2118
      %v2217 = vadd.f32 %v1481, %v2121
      %v2218 = vadd.f32 %v1486, %v2126
      %v2219 = vadd.f32 %v1489, %v2129
      %v2220 = vadd.f32 %v1494, %v2134
      %v2221 = vadd.f32 %v1497, %v2137
      %v2222 = vadd.f32 %v1502, %v2142
      %v2223 = vadd.f32 %v1505, %v2145
      %v2224 = vadd.f32 %v1510, %v2150
      %v2225 = vadd.f32 %v1513, %v2153
      %v2226 = vadd.f32 %v1518, %v2158
      %v2227 = vadd.f32 %v1521, %v2161
      %v2228 = vpack.c.bf16 %v2165, %v2164
      %v2229 = vpack.c.bf16 %v2167, %v2166
      %v2230 = vpack.c.bf16 %v2169, %v2168
      %v2231 = vpack.c.bf16 %v2171, %v2170
      %v2232 = vpack.c.bf16 %v2173, %v2172
      %v2233 = vpack.c.bf16 %v2175, %v2174
      %v2234 = vpack.c.bf16 %v2177, %v2176
      %v2235 = vpack.c.bf16 %v2179, %v2178
      %v2236 = vpack.c.bf16 %v2181, %v2180
      %v2237 = vpack.c.bf16 %v2183, %v2182
      %v2238 = vpack.c.bf16 %v2185, %v2184
      %v2239 = vpack.c.bf16 %v2187, %v2186
      %v2240 = vpack.c.bf16 %v2189, %v2188
      %v2241 = vpack.c.bf16 %v2191, %v2190
      %v2242 = vpack.c.bf16 %v2193, %v2192
      %v2243 = vpack.c.bf16 %v2195, %v2194
      %v2244 = vpack.c.bf16 %v2197, %v2196
      %v2245 = vpack.c.bf16 %v2199, %v2198
      %v2246 = vpack.c.bf16 %v2201, %v2200
      %v2247 = vpack.c.bf16 %v2203, %v2202
      %v2248 = vpack.c.bf16 %v2205, %v2204
      %v2249 = vpack.c.bf16 %v2207, %v2206
      %v2250 = vpack.c.bf16 %v2209, %v2208
      %v2251 = vpack.c.bf16 %v2211, %v2210
      %v2252 = vpack.c.bf16 %v2213, %v2212
      %v2253 = vpack.c.bf16 %v2215, %v2214
      %v2254 = vpack.c.bf16 %v2217, %v2216
      %v2255 = vpack.c.bf16 %v2219, %v2218
      %v2256 = vpack.c.bf16 %v2221, %v2220
      %v2257 = vpack.c.bf16 %v2223, %v2222
      %v2258 = vpack.c.bf16 %v2225, %v2224
      %v2259 = vpack.c.bf16 %v2227, %v2226
      %v2292 = vunpack.c.l.b16 %v2228
      %v2293 = vunpack.c.h.b16 %v2228
      %v2294 = vunpack.c.l.b16 %v2229
      %v2295 = vunpack.c.h.b16 %v2229
      %v2296 = vunpack.c.l.b16 %v2230
      %v2297 = vunpack.c.h.b16 %v2230
      %v2298 = vunpack.c.l.b16 %v2231
      %v2299 = vunpack.c.h.b16 %v2231
      %v2300 = vunpack.c.l.b16 %v2232
      %v2301 = vunpack.c.h.b16 %v2232
      %v2302 = vunpack.c.l.b16 %v2233
      %v2303 = vunpack.c.h.b16 %v2233
      %v2304 = vunpack.c.l.b16 %v2234
      %v2305 = vunpack.c.h.b16 %v2234
      %v2306 = vunpack.c.l.b16 %v2235
      %v2307 = vunpack.c.h.b16 %v2235
      %v2308 = vunpack.c.l.b16 %v2236
      %v2309 = vunpack.c.h.b16 %v2236
      %v2310 = vunpack.c.l.b16 %v2237
      %v2311 = vunpack.c.h.b16 %v2237
      %v2312 = vunpack.c.l.b16 %v2238
      %v2313 = vunpack.c.h.b16 %v2238
      %v2314 = vunpack.c.l.b16 %v2239
      %v2315 = vunpack.c.h.b16 %v2239
      %v2316 = vunpack.c.l.b16 %v2240
      %v2317 = vunpack.c.h.b16 %v2240
      %v2318 = vunpack.c.l.b16 %v2241
      %v2319 = vunpack.c.h.b16 %v2241
      %v2320 = vunpack.c.l.b16 %v2242
      %v2321 = vunpack.c.h.b16 %v2242
      %v2322 = vunpack.c.l.b16 %v2243
      %v2323 = vunpack.c.h.b16 %v2243
      %v2324 = vunpack.c.l.b16 %v2244
      %v2325 = vunpack.c.h.b16 %v2244
      %v2326 = vunpack.c.l.b16 %v2245
      %v2327 = vunpack.c.h.b16 %v2245
      %v2328 = vunpack.c.l.b16 %v2246
      %v2329 = vunpack.c.h.b16 %v2246
      %v2330 = vunpack.c.l.b16 %v2247
      %v2331 = vunpack.c.h.b16 %v2247
      %v2332 = vunpack.c.l.b16 %v2248
      %v2333 = vunpack.c.h.b16 %v2248
      %v2334 = vunpack.c.l.b16 %v2249
      %v2335 = vunpack.c.h.b16 %v2249
      %v2336 = vunpack.c.l.b16 %v2250
      %v2337 = vunpack.c.h.b16 %v2250
      %v2338 = vunpack.c.l.b16 %v2251
      %v2339 = vunpack.c.h.b16 %v2251
      %v2340 = vunpack.c.l.b16 %v2252
      %v2341 = vunpack.c.h.b16 %v2252
      %v2342 = vunpack.c.l.b16 %v2253
      %v2343 = vunpack.c.h.b16 %v2253
      %v2344 = vunpack.c.l.b16 %v2254
      %v2345 = vunpack.c.h.b16 %v2254
      %v2346 = vunpack.c.l.b16 %v2255
      %v2347 = vunpack.c.h.b16 %v2255
      %v2348 = vunpack.c.l.b16 %v2256
      %v2349 = vunpack.c.h.b16 %v2256
      %v2350 = vunpack.c.l.b16 %v2257
      %v2351 = vunpack.c.h.b16 %v2257
      %v2352 = vunpack.c.l.b16 %v2258
      %v2353 = vunpack.c.h.b16 %v2258
      %v2354 = vunpack.c.l.b16 %v2259
      %v2355 = vunpack.c.h.b16 %v2259
      %v2356 = vpack.c.b16 %v2292, %v2292
      %v2357 = vpack.c.b16 %v2293, %v2293
      %v2358 = vpack.c.b16 %v2294, %v2294
      %v2359 = vpack.c.b16 %v2295, %v2295
      %v2360 = vpack.c.b16 %v2296, %v2296
      %v2361 = vpack.c.b16 %v2297, %v2297
      %v2362 = vpack.c.b16 %v2298, %v2298
      %v2363 = vpack.c.b16 %v2299, %v2299
      %v2364 = vpack.c.b16 %v2300, %v2300
      %v2365 = vpack.c.b16 %v2301, %v2301
      %v2366 = vpack.c.b16 %v2302, %v2302
      %v2367 = vpack.c.b16 %v2303, %v2303
      %v2368 = vpack.c.b16 %v2304, %v2304
      %v2369 = vpack.c.b16 %v2305, %v2305
      %v2370 = vpack.c.b16 %v2306, %v2306
      %v2371 = vpack.c.b16 %v2307, %v2307
      %v2372 = vpack.c.b16 %v2308, %v2308
      %v2373 = vpack.c.b16 %v2309, %v2309
      %v2374 = vpack.c.b16 %v2310, %v2310
      %v2375 = vpack.c.b16 %v2311, %v2311
      %v2376 = vpack.c.b16 %v2312, %v2312
      %v2377 = vpack.c.b16 %v2313, %v2313
      %v2378 = vpack.c.b16 %v2314, %v2314
      %v2379 = vpack.c.b16 %v2315, %v2315
      %v2380 = vpack.c.b16 %v2316, %v2316
      %v2381 = vpack.c.b16 %v2317, %v2317
      %v2382 = vpack.c.b16 %v2318, %v2318
      %v2383 = vpack.c.b16 %v2319, %v2319
      %v2384 = vpack.c.b16 %v2320, %v2320
      %v2385 = vpack.c.b16 %v2321, %v2321
      %v2386 = vpack.c.b16 %v2322, %v2322
      %v2387 = vpack.c.b16 %v2323, %v2323
      %v2388 = vpack.c.b16 %v2324, %v2324
      %v2389 = vpack.c.b16 %v2325, %v2325
      %v2390 = vpack.c.b16 %v2326, %v2326
      %v2391 = vpack.c.b16 %v2327, %v2327
      %v2392 = vpack.c.b16 %v2328, %v2328
      %v2393 = vpack.c.b16 %v2329, %v2329
      %v2394 = vpack.c.b16 %v2330, %v2330
      %v2395 = vpack.c.b16 %v2331, %v2331
      %v2396 = vpack.c.b16 %v2332, %v2332
      %v2397 = vpack.c.b16 %v2333, %v2333
      %v2398 = vpack.c.b16 %v2334, %v2334
      %v2399 = vpack.c.b16 %v2335, %v2335
      %v2400 = vpack.c.b16 %v2336, %v2336
      %v2401 = vpack.c.b16 %v2337, %v2337
      %v2402 = vpack.c.b16 %v2338, %v2338
      %v2403 = vpack.c.b16 %v2339, %v2339
      %v2404 = vpack.c.b16 %v2340, %v2340
      %v2405 = vpack.c.b16 %v2341, %v2341
      %v2406 = vpack.c.b16 %v2342, %v2342
      %v2407 = vpack.c.b16 %v2343, %v2343
      %v2408 = vpack.c.b16 %v2344, %v2344
      %v2409 = vpack.c.b16 %v2345, %v2345
      %v2410 = vpack.c.b16 %v2346, %v2346
      %v2411 = vpack.c.b16 %v2347, %v2347
      %v2412 = vpack.c.b16 %v2348, %v2348
      %v2413 = vpack.c.b16 %v2349, %v2349
      %v2414 = vpack.c.b16 %v2350, %v2350
      %v2415 = vpack.c.b16 %v2351, %v2351
      %v2416 = vpack.c.b16 %v2352, %v2352
      %v2417 = vpack.c.b16 %v2353, %v2353
      %v2418 = vpack.c.b16 %v2354, %v2354
      %v2419 = vpack.c.b16 %v2355, %v2355
      %vm2484 = vcmask 60416
      %2485 = vst.msk [vmem:[%s208] sm:$0xf] %vm2484, %v2356
      %2486 = vst.msk [vmem:[%s208 + $0x4] sm:$0xf] %vm2484, %v2357
      %2487 = vst.msk [vmem:[%s208 + $0x8] sm:$0xf] %vm2484, %v2358
      %2488 = vst.msk [vmem:[%s208 + $0xc] sm:$0xf] %vm2484, %v2359
      %2489 = vst.msk [vmem:[%s208 + $0x10] sm:$0xf] %vm2484, %v2360
      %2490 = vst.msk [vmem:[%s208 + $0x14] sm:$0xf] %vm2484, %v2361
      %2491 = vst.msk [vmem:[%s208 + $0x18] sm:$0xf] %vm2484, %v2362
      %2492 = vst.msk [vmem:[%s208 + $0x1c] sm:$0xf] %vm2484, %v2363
      %2493 = vst.msk [vmem:[%s208 + $0x20] sm:$0xf] %vm2484, %v2364
      %2494 = vst.msk [vmem:[%s208 + $0x24] sm:$0xf] %vm2484, %v2365
      %2495 = vst.msk [vmem:[%s208 + $0x28] sm:$0xf] %vm2484, %v2366
      %2496 = vst.msk [vmem:[%s208 + $0x2c] sm:$0xf] %vm2484, %v2367
      %2497 = vst.msk [vmem:[%s208 + $0x30] sm:$0xf] %vm2484, %v2368
      %2498 = vst.msk [vmem:[%s208 + $0x34] sm:$0xf] %vm2484, %v2369
      %2499 = vst.msk [vmem:[%s208 + $0x38] sm:$0xf] %vm2484, %v2370
      %2500 = vst.msk [vmem:[%s208 + $0x3c] sm:$0xf] %vm2484, %v2371
      %2501 = vst.msk [vmem:[%s208 + $0x40] sm:$0xf] %vm2484, %v2372
      %2502 = vst.msk [vmem:[%s208 + $0x44] sm:$0xf] %vm2484, %v2373
      %2503 = vst.msk [vmem:[%s208 + $0x48] sm:$0xf] %vm2484, %v2374
      %2504 = vst.msk [vmem:[%s208 + $0x4c] sm:$0xf] %vm2484, %v2375
      %2505 = vst.msk [vmem:[%s208 + $0x50] sm:$0xf] %vm2484, %v2376
      %2506 = vst.msk [vmem:[%s208 + $0x54] sm:$0xf] %vm2484, %v2377
      %2507 = vst.msk [vmem:[%s208 + $0x58] sm:$0xf] %vm2484, %v2378
      %2508 = vst.msk [vmem:[%s208 + $0x5c] sm:$0xf] %vm2484, %v2379
      %2509 = vst.msk [vmem:[%s208 + $0x60] sm:$0xf] %vm2484, %v2380
      %2510 = vst.msk [vmem:[%s208 + $0x64] sm:$0xf] %vm2484, %v2381
      %2511 = vst.msk [vmem:[%s208 + $0x68] sm:$0xf] %vm2484, %v2382
      %2512 = vst.msk [vmem:[%s208 + $0x6c] sm:$0xf] %vm2484, %v2383
      %2513 = vst.msk [vmem:[%s208 + $0x70] sm:$0xf] %vm2484, %v2384
      %2514 = vst.msk [vmem:[%s208 + $0x74] sm:$0xf] %vm2484, %v2385
      %2515 = vst.msk [vmem:[%s208 + $0x78] sm:$0xf] %vm2484, %v2386
      %2516 = vst.msk [vmem:[%s208 + $0x7c] sm:$0xf] %vm2484, %v2387
      %2517 = vst.msk [vmem:[%s208 + $0x80] sm:$0xf] %vm2484, %v2388
      %2518 = vst.msk [vmem:[%s208 + $0x84] sm:$0xf] %vm2484, %v2389
      %2519 = vst.msk [vmem:[%s208 + $0x88] sm:$0xf] %vm2484, %v2390
      %2520 = vst.msk [vmem:[%s208 + $0x8c] sm:$0xf] %vm2484, %v2391
      %2521 = vst.msk [vmem:[%s208 + $0x90] sm:$0xf] %vm2484, %v2392
      %2522 = vst.msk [vmem:[%s208 + $0x94] sm:$0xf] %vm2484, %v2393
      %2523 = vst.msk [vmem:[%s208 + $0x98] sm:$0xf] %vm2484, %v2394
      %2524 = vst.msk [vmem:[%s208 + $0x9c] sm:$0xf] %vm2484, %v2395
      %2525 = vst.msk [vmem:[%s208 + $0xa0] sm:$0xf] %vm2484, %v2396
      %2526 = vst.msk [vmem:[%s208 + $0xa4] sm:$0xf] %vm2484, %v2397
      %2527 = vst.msk [vmem:[%s208 + $0xa8] sm:$0xf] %vm2484, %v2398
      %2528 = vst.msk [vmem:[%s208 + $0xac] sm:$0xf] %vm2484, %v2399
      %2529 = vst.msk [vmem:[%s208 + $0xb0] sm:$0xf] %vm2484, %v2400
      %2530 = vst.msk [vmem:[%s208 + $0xb4] sm:$0xf] %vm2484, %v2401
      %2531 = vst.msk [vmem:[%s208 + $0xb8] sm:$0xf] %vm2484, %v2402
      %2532 = vst.msk [vmem:[%s208 + $0xbc] sm:$0xf] %vm2484, %v2403
      %2533 = vst.msk [vmem:[%s208 + $0xc0] sm:$0xf] %vm2484, %v2404
      %2534 = vst.msk [vmem:[%s208 + $0xc4] sm:$0xf] %vm2484, %v2405
      %2535 = vst.msk [vmem:[%s208 + $0xc8] sm:$0xf] %vm2484, %v2406
      %2536 = vst.msk [vmem:[%s208 + $0xcc] sm:$0xf] %vm2484, %v2407
      %2537 = vst.msk [vmem:[%s208 + $0xd0] sm:$0xf] %vm2484, %v2408
      %2538 = vst.msk [vmem:[%s208 + $0xd4] sm:$0xf] %vm2484, %v2409
      %2539 = vst.msk [vmem:[%s208 + $0xd8] sm:$0xf] %vm2484, %v2410
      %2540 = vst.msk [vmem:[%s208 + $0xdc] sm:$0xf] %vm2484, %v2411
      %2541 = vst.msk [vmem:[%s208 + $0xe0] sm:$0xf] %vm2484, %v2412
      %2542 = vst.msk [vmem:[%s208 + $0xe4] sm:$0xf] %vm2484, %v2413
      %2543 = vst.msk [vmem:[%s208 + $0xe8] sm:$0xf] %vm2484, %v2414
      %2544 = vst.msk [vmem:[%s208 + $0xec] sm:$0xf] %vm2484, %v2415
      %2545 = vst.msk [vmem:[%s208 + $0xf0] sm:$0xf] %vm2484, %v2416
      %2546 = vst.msk [vmem:[%s208 + $0xf4] sm:$0xf] %vm2484, %v2417
      %2547 = vst.msk [vmem:[%s208 + $0xf8] sm:$0xf] %vm2484, %v2418
      %2548 = vst.msk [vmem:[%s208 + $0xfc] sm:$0xf] %vm2484, %v2419
      %vm2549 = vcmask 64512
      %v2550 = vsel %vm2549, %v2164, 0.0
      %v2551 = vsel %vm2549, %v2165, 0.0
      %v2552 = vadd.f32 %v2550, %v2551
      %v2553 = vsel %vm2549, %v2166, 0.0
      %v2554 = vadd.f32 %v2552, %v2553
      %v2555 = vsel %vm2549, %v2167, 0.0
      %v2556 = vadd.f32 %v2554, %v2555
      %v2557 = vsel %vm2549, %v2168, 0.0
      %v2558 = vadd.f32 %v2556, %v2557
      %v2559 = vsel %vm2549, %v2169, 0.0
      %v2560 = vadd.f32 %v2558, %v2559
      %v2561 = vsel %vm2549, %v2170, 0.0
      %v2562 = vadd.f32 %v2560, %v2561
      %v2563 = vsel %vm2549, %v2171, 0.0
      %v2564 = vadd.f32 %v2562, %v2563
      %v2565 = vsel %vm2549, %v2172, 0.0
      %v2566 = vadd.f32 %v2564, %v2565
      %v2567 = vsel %vm2549, %v2173, 0.0
      %v2568 = vadd.f32 %v2566, %v2567
      %v2569 = vsel %vm2549, %v2174, 0.0
      %v2570 = vadd.f32 %v2568, %v2569
      %v2571 = vsel %vm2549, %v2175, 0.0
      %v2572 = vadd.f32 %v2570, %v2571
      %v2573 = vsel %vm2549, %v2176, 0.0
      %v2574 = vadd.f32 %v2572, %v2573
      %v2575 = vsel %vm2549, %v2177, 0.0
      %v2576 = vadd.f32 %v2574, %v2575
      %v2577 = vsel %vm2549, %v2178, 0.0
      %v2578 = vadd.f32 %v2576, %v2577
      %v2579 = vsel %vm2549, %v2179, 0.0
      %v2580 = vadd.f32 %v2578, %v2579
      %v2581 = vsel %vm2549, %v2180, 0.0
      %v2582 = vadd.f32 %v2580, %v2581
      %v2583 = vsel %vm2549, %v2181, 0.0
      %v2584 = vadd.f32 %v2582, %v2583
      %v2585 = vsel %vm2549, %v2182, 0.0
      %v2586 = vadd.f32 %v2584, %v2585
      %v2587 = vsel %vm2549, %v2183, 0.0
      %v2588 = vadd.f32 %v2586, %v2587
      %v2589 = vsel %vm2549, %v2184, 0.0
      %v2590 = vadd.f32 %v2588, %v2589
      %v2591 = vsel %vm2549, %v2185, 0.0
      %v2592 = vadd.f32 %v2590, %v2591
      %v2593 = vsel %vm2549, %v2186, 0.0
      %v2594 = vadd.f32 %v2592, %v2593
      %v2595 = vsel %vm2549, %v2187, 0.0
      %v2596 = vadd.f32 %v2594, %v2595
      %v2597 = vsel %vm2549, %v2188, 0.0
      %v2598 = vadd.f32 %v2596, %v2597
      %v2599 = vsel %vm2549, %v2189, 0.0
      %v2600 = vadd.f32 %v2598, %v2599
      %v2601 = vsel %vm2549, %v2190, 0.0
      %v2602 = vadd.f32 %v2600, %v2601
      %v2603 = vsel %vm2549, %v2191, 0.0
      %v2604 = vadd.f32 %v2602, %v2603
      %v2605 = vsel %vm2549, %v2192, 0.0
      %v2606 = vadd.f32 %v2604, %v2605
      %v2607 = vsel %vm2549, %v2193, 0.0
      %v2608 = vadd.f32 %v2606, %v2607
      %v2609 = vsel %vm2549, %v2194, 0.0
      %v2610 = vadd.f32 %v2608, %v2609
      %v2611 = vsel %vm2549, %v2195, 0.0
      %v2612 = vadd.f32 %v2610, %v2611
      %v2613 = vsel %vm2549, %v2196, 0.0
      %v2614 = vadd.f32 %v2612, %v2613
      %v2615 = vsel %vm2549, %v2197, 0.0
      %v2616 = vadd.f32 %v2614, %v2615
      %v2617 = vsel %vm2549, %v2198, 0.0
      %v2618 = vadd.f32 %v2616, %v2617
      %v2619 = vsel %vm2549, %v2199, 0.0
      %v2620 = vadd.f32 %v2618, %v2619
      %v2621 = vsel %vm2549, %v2200, 0.0
      %v2622 = vadd.f32 %v2620, %v2621
      %v2623 = vsel %vm2549, %v2201, 0.0
      %v2624 = vadd.f32 %v2622, %v2623
      %v2625 = vsel %vm2549, %v2202, 0.0
      %v2626 = vadd.f32 %v2624, %v2625
      %v2627 = vsel %vm2549, %v2203, 0.0
      %v2628 = vadd.f32 %v2626, %v2627
      %v2629 = vsel %vm2549, %v2204, 0.0
      %v2630 = vadd.f32 %v2628, %v2629
      %v2631 = vsel %vm2549, %v2205, 0.0
      %v2632 = vadd.f32 %v2630, %v2631
      %v2633 = vsel %vm2549, %v2206, 0.0
      %v2634 = vadd.f32 %v2632, %v2633
      %v2635 = vsel %vm2549, %v2207, 0.0
      %v2636 = vadd.f32 %v2634, %v2635
      %v2637 = vsel %vm2549, %v2208, 0.0
      %v2638 = vadd.f32 %v2636, %v2637
      %v2639 = vsel %vm2549, %v2209, 0.0
      %v2640 = vadd.f32 %v2638, %v2639
      %v2641 = vsel %vm2549, %v2210, 0.0
      %v2642 = vadd.f32 %v2640, %v2641
      %v2643 = vsel %vm2549, %v2211, 0.0
      %v2644 = vadd.f32 %v2642, %v2643
      %v2645 = vsel %vm2549, %v2212, 0.0
      %v2646 = vadd.f32 %v2644, %v2645
      %v2647 = vsel %vm2549, %v2213, 0.0
      %v2648 = vadd.f32 %v2646, %v2647
      %v2649 = vsel %vm2549, %v2214, 0.0
      %v2650 = vadd.f32 %v2648, %v2649
      %v2651 = vsel %vm2549, %v2215, 0.0
      %v2652 = vadd.f32 %v2650, %v2651
      %v2653 = vsel %vm2549, %v2216, 0.0
      %v2654 = vadd.f32 %v2652, %v2653
      %v2655 = vsel %vm2549, %v2217, 0.0
      %v2656 = vadd.f32 %v2654, %v2655
      %v2657 = vsel %vm2549, %v2218, 0.0
      %v2658 = vadd.f32 %v2656, %v2657
      %v2659 = vsel %vm2549, %v2219, 0.0
      %v2660 = vadd.f32 %v2658, %v2659
      %v2661 = vsel %vm2549, %v2220, 0.0
      %v2662 = vadd.f32 %v2660, %v2661
      %v2663 = vsel %vm2549, %v2221, 0.0
      %v2664 = vadd.f32 %v2662, %v2663
      %v2665 = vsel %vm2549, %v2222, 0.0
      %v2666 = vadd.f32 %v2664, %v2665
      %v2667 = vsel %vm2549, %v2223, 0.0
      %v2668 = vadd.f32 %v2666, %v2667
      %v2669 = vsel %vm2549, %v2224, 0.0
      %v2670 = vadd.f32 %v2668, %v2669
      %v2671 = vsel %vm2549, %v2225, 0.0
      %v2672 = vadd.f32 %v2670, %v2671
      %v2673 = vsel %vm2549, %v2226, 0.0
      %v2674 = vadd.f32 %v2672, %v2673
      %v2675 = vsel %vm2549, %v2227, 0.0
      %v2676 = vadd.f32 %v2674, %v2675
      %v2677 = vrot.slane %v2676, 4
      %v2678 = vadd.f32 %v2676, %v2677
      %v2679 = vrot.slane %v2678, 2
      %v2680 = vadd.f32 %v2678, %v2679
      %v2681 = vrot.slane %v2680, 1
      %v2682 = vadd.f32 %v2680, %v2681
      %vm2683 = vcmask 57344
      %2684 = vst.msk [vmem:[%s211] sm:$0x1] %vm2683, %v2682
      %v2685 = vmul.f32 %v2164, %v2164
      %v2686 = vmul.f32 %v2165, %v2165
      %v2687 = vmul.f32 %v2166, %v2166
      %v2688 = vmul.f32 %v2167, %v2167
      %v2689 = vmul.f32 %v2168, %v2168
      %v2690 = vmul.f32 %v2169, %v2169
      %v2691 = vmul.f32 %v2170, %v2170
      %v2692 = vmul.f32 %v2171, %v2171
      %v2693 = vmul.f32 %v2172, %v2172
      %v2694 = vmul.f32 %v2173, %v2173
      %v2695 = vmul.f32 %v2174, %v2174
      %v2696 = vmul.f32 %v2175, %v2175
      %v2697 = vmul.f32 %v2176, %v2176
      %v2698 = vmul.f32 %v2177, %v2177
      %v2699 = vmul.f32 %v2178, %v2178
      %v2700 = vmul.f32 %v2179, %v2179
      %v2701 = vmul.f32 %v2180, %v2180
      %v2702 = vmul.f32 %v2181, %v2181
      %v2703 = vmul.f32 %v2182, %v2182
      %v2704 = vmul.f32 %v2183, %v2183
      %v2705 = vmul.f32 %v2184, %v2184
      %v2706 = vmul.f32 %v2185, %v2185
      %v2707 = vmul.f32 %v2186, %v2186
      %v2708 = vmul.f32 %v2187, %v2187
      %v2709 = vmul.f32 %v2188, %v2188
      %v2710 = vmul.f32 %v2189, %v2189
      %v2711 = vmul.f32 %v2190, %v2190
      %v2712 = vmul.f32 %v2191, %v2191
      %v2713 = vmul.f32 %v2192, %v2192
      %v2714 = vmul.f32 %v2193, %v2193
      %v2715 = vmul.f32 %v2194, %v2194
      %v2716 = vmul.f32 %v2195, %v2195
      %v2717 = vmul.f32 %v2196, %v2196
      %v2718 = vmul.f32 %v2197, %v2197
      %v2719 = vmul.f32 %v2198, %v2198
      %v2720 = vmul.f32 %v2199, %v2199
      %v2721 = vmul.f32 %v2200, %v2200
      %v2722 = vmul.f32 %v2201, %v2201
      %v2723 = vmul.f32 %v2202, %v2202
      %v2724 = vmul.f32 %v2203, %v2203
      %v2725 = vmul.f32 %v2204, %v2204
      %v2726 = vmul.f32 %v2205, %v2205
      %v2727 = vmul.f32 %v2206, %v2206
      %v2728 = vmul.f32 %v2207, %v2207
      %v2729 = vmul.f32 %v2208, %v2208
      %v2730 = vmul.f32 %v2209, %v2209
      %v2731 = vmul.f32 %v2210, %v2210
      %v2732 = vmul.f32 %v2211, %v2211
      %v2733 = vmul.f32 %v2212, %v2212
      %v2734 = vmul.f32 %v2213, %v2213
      %v2735 = vmul.f32 %v2214, %v2214
      %v2736 = vmul.f32 %v2215, %v2215
      %v2737 = vmul.f32 %v2216, %v2216
      %v2738 = vmul.f32 %v2217, %v2217
      %v2739 = vmul.f32 %v2218, %v2218
      %v2740 = vmul.f32 %v2219, %v2219
      %v2741 = vmul.f32 %v2220, %v2220
      %v2742 = vmul.f32 %v2221, %v2221
      %v2743 = vmul.f32 %v2222, %v2222
      %v2744 = vmul.f32 %v2223, %v2223
      %v2745 = vmul.f32 %v2224, %v2224
      %v2746 = vmul.f32 %v2225, %v2225
      %v2747 = vmul.f32 %v2226, %v2226
      %v2748 = vmul.f32 %v2227, %v2227
      %v2749 = vsel %vm2549, %v2685, 0.0
      %v2750 = vsel %vm2549, %v2686, 0.0
      %v2751 = vadd.f32 %v2749, %v2750
      %v2752 = vsel %vm2549, %v2687, 0.0
      %v2753 = vadd.f32 %v2751, %v2752
      %v2754 = vsel %vm2549, %v2688, 0.0
      %v2755 = vadd.f32 %v2753, %v2754
      %v2756 = vsel %vm2549, %v2689, 0.0
      %v2757 = vadd.f32 %v2755, %v2756
      %v2758 = vsel %vm2549, %v2690, 0.0
      %v2759 = vadd.f32 %v2757, %v2758
      %v2760 = vsel %vm2549, %v2691, 0.0
      %v2761 = vadd.f32 %v2759, %v2760
      %v2762 = vsel %vm2549, %v2692, 0.0
      %v2763 = vadd.f32 %v2761, %v2762
      %v2764 = vsel %vm2549, %v2693, 0.0
      %v2765 = vadd.f32 %v2763, %v2764
      %v2766 = vsel %vm2549, %v2694, 0.0
      %v2767 = vadd.f32 %v2765, %v2766
      %v2768 = vsel %vm2549, %v2695, 0.0
      %v2769 = vadd.f32 %v2767, %v2768
      %v2770 = vsel %vm2549, %v2696, 0.0
      %v2771 = vadd.f32 %v2769, %v2770
      %v2772 = vsel %vm2549, %v2697, 0.0
      %v2773 = vadd.f32 %v2771, %v2772
      %v2774 = vsel %vm2549, %v2698, 0.0
      %v2775 = vadd.f32 %v2773, %v2774
      %v2776 = vsel %vm2549, %v2699, 0.0
      %v2777 = vadd.f32 %v2775, %v2776
      %v2778 = vsel %vm2549, %v2700, 0.0
      %v2779 = vadd.f32 %v2777, %v2778
      %v2780 = vsel %vm2549, %v2701, 0.0
      %v2781 = vadd.f32 %v2779, %v2780
      %v2782 = vsel %vm2549, %v2702, 0.0
      %v2783 = vadd.f32 %v2781, %v2782
      %v2784 = vsel %vm2549, %v2703, 0.0
      %v2785 = vadd.f32 %v2783, %v2784
      %v2786 = vsel %vm2549, %v2704, 0.0
      %v2787 = vadd.f32 %v2785, %v2786
      %v2788 = vsel %vm2549, %v2705, 0.0
      %v2789 = vadd.f32 %v2787, %v2788
      %v2790 = vsel %vm2549, %v2706, 0.0
      %v2791 = vadd.f32 %v2789, %v2790
      %v2792 = vsel %vm2549, %v2707, 0.0
      %v2793 = vadd.f32 %v2791, %v2792
      %v2794 = vsel %vm2549, %v2708, 0.0
      %v2795 = vadd.f32 %v2793, %v2794
      %v2796 = vsel %vm2549, %v2709, 0.0
      %v2797 = vadd.f32 %v2795, %v2796
      %v2798 = vsel %vm2549, %v2710, 0.0
      %v2799 = vadd.f32 %v2797, %v2798
      %v2800 = vsel %vm2549, %v2711, 0.0
      %v2801 = vadd.f32 %v2799, %v2800
      %v2802 = vsel %vm2549, %v2712, 0.0
      %v2803 = vadd.f32 %v2801, %v2802
      %v2804 = vsel %vm2549, %v2713, 0.0
      %v2805 = vadd.f32 %v2803, %v2804
      %v2806 = vsel %vm2549, %v2714, 0.0
      %v2807 = vadd.f32 %v2805, %v2806
      %v2808 = vsel %vm2549, %v2715, 0.0
      %v2809 = vadd.f32 %v2807, %v2808
      %v2810 = vsel %vm2549, %v2716, 0.0
      %v2811 = vadd.f32 %v2809, %v2810
      %v2812 = vsel %vm2549, %v2717, 0.0
      %v2813 = vadd.f32 %v2811, %v2812
      %v2814 = vsel %vm2549, %v2718, 0.0
      %v2815 = vadd.f32 %v2813, %v2814
      %v2816 = vsel %vm2549, %v2719, 0.0
      %v2817 = vadd.f32 %v2815, %v2816
      %v2818 = vsel %vm2549, %v2720, 0.0
      %v2819 = vadd.f32 %v2817, %v2818
      %v2820 = vsel %vm2549, %v2721, 0.0
      %v2821 = vadd.f32 %v2819, %v2820
      %v2822 = vsel %vm2549, %v2722, 0.0
      %v2823 = vadd.f32 %v2821, %v2822
      %v2824 = vsel %vm2549, %v2723, 0.0
      %v2825 = vadd.f32 %v2823, %v2824
      %v2826 = vsel %vm2549, %v2724, 0.0
      %v2827 = vadd.f32 %v2825, %v2826
      %v2828 = vsel %vm2549, %v2725, 0.0
      %v2829 = vadd.f32 %v2827, %v2828
      %v2830 = vsel %vm2549, %v2726, 0.0
      %v2831 = vadd.f32 %v2829, %v2830
      %v2832 = vsel %vm2549, %v2727, 0.0
      %v2833 = vadd.f32 %v2831, %v2832
      %v2834 = vsel %vm2549, %v2728, 0.0
      %v2835 = vadd.f32 %v2833, %v2834
      %v2836 = vsel %vm2549, %v2729, 0.0
      %v2837 = vadd.f32 %v2835, %v2836
      %v2838 = vsel %vm2549, %v2730, 0.0
      %v2839 = vadd.f32 %v2837, %v2838
      %v2840 = vsel %vm2549, %v2731, 0.0
      %v2841 = vadd.f32 %v2839, %v2840
      %v2842 = vsel %vm2549, %v2732, 0.0
      %v2843 = vadd.f32 %v2841, %v2842
      %v2844 = vsel %vm2549, %v2733, 0.0
      %v2845 = vadd.f32 %v2843, %v2844
      %v2846 = vsel %vm2549, %v2734, 0.0
      %v2847 = vadd.f32 %v2845, %v2846
      %v2848 = vsel %vm2549, %v2735, 0.0
      %v2849 = vadd.f32 %v2847, %v2848
      %v2850 = vsel %vm2549, %v2736, 0.0
      %v2851 = vadd.f32 %v2849, %v2850
      %v2852 = vsel %vm2549, %v2737, 0.0
      %v2853 = vadd.f32 %v2851, %v2852
      %v2854 = vsel %vm2549, %v2738, 0.0
      %v2855 = vadd.f32 %v2853, %v2854
      %v2856 = vsel %vm2549, %v2739, 0.0
      %v2857 = vadd.f32 %v2855, %v2856
      %v2858 = vsel %vm2549, %v2740, 0.0
      %v2859 = vadd.f32 %v2857, %v2858
      %v2860 = vsel %vm2549, %v2741, 0.0
      %v2861 = vadd.f32 %v2859, %v2860
      %v2862 = vsel %vm2549, %v2742, 0.0
      %v2863 = vadd.f32 %v2861, %v2862
      %v2864 = vsel %vm2549, %v2743, 0.0
      %v2865 = vadd.f32 %v2863, %v2864
      %v2866 = vsel %vm2549, %v2744, 0.0
      %v2867 = vadd.f32 %v2865, %v2866
      %v2868 = vsel %vm2549, %v2745, 0.0
      %v2869 = vadd.f32 %v2867, %v2868
      %v2870 = vsel %vm2549, %v2746, 0.0
      %v2871 = vadd.f32 %v2869, %v2870
      %v2872 = vsel %vm2549, %v2747, 0.0
      %v2873 = vadd.f32 %v2871, %v2872
      %v2874 = vsel %vm2549, %v2748, 0.0
      %v2875 = vadd.f32 %v2873, %v2874
      %v2876 = vrot.slane %v2875, 4
      %v2877 = vadd.f32 %v2875, %v2876
      %v2878 = vrot.slane %v2877, 2
      %v2879 = vadd.f32 %v2877, %v2878
      %v2880 = vrot.slane %v2879, 1
      %v2881 = vadd.f32 %v2879, %v2880
      %2882 = vst.msk [vmem:[%s214] sm:$0x1] %vm2683, %v2881
      %p2883 = scmp.lt.s32.totalorder %s16, 1
      %s2884 = scalar_select %p2883, %s16, 1
      %s2885 = smul.addr %s2884, 64
      %s2886 = smul.addr %s2885, 4
      %s2887 = scalar_lea.vmem %s2, %s2886
      %p2888 = scmp.lt.s32.totalorder %s16, 1
      %s2889 = scalar_select %p2888, %s16, 1
      %s2890 = scalar_lea.vmem %s3, %s2889
      %p2891 = scmp.lt.s32.totalorder %s16, 1
      %s2892 = scalar_select %p2891, %s16, 1
      %s2893 = scalar_lea.vmem %s4, %s2892
      // Predicated region
      $region29: #{down_forward.6} parent=27 // pred_check
        %p2894 = pneg %p81
      $region30: #{down_forward.6} parent=27 // pred_check_branch
        %2896 = sbr.rel (%p2894) target = $region32
      $region31: #{down_forward.6} parent=27 // pred_region
        _
      $region32: #{down_forward.6} parent=27 // pred_fallthru
        _
      // Predicated region
      $region33: #{down_forward.6} parent=27 // pred_check
        %p2897 = pneg %p107
      $region34: #{down_forward.6} parent=27 // pred_check_branch
        %2899 = sbr.rel (%p2897) target = $region36
      $region35: #{down_forward.6} parent=27 // pred_region
        _
      $region36: #{down_forward.6} parent=27 // pred_fallthru
        _
      // Predicated region
      $region37: #{down_forward.6} parent=27 // pred_check
        %p2900 = pneg %p133
      $region38: #{down_forward.6} parent=27 // pred_check_branch
        %2902 = sbr.rel (%p2900) target = $region40
      $region39: #{down_forward.6} parent=27 // pred_region
        _
      $region40: #{down_forward.6} parent=27 // pred_fallthru
        _
    $region28: #{down_forward.6} parent=5 // pred_fallthru
      _
    %p2903 = scmp.le.s32.totalorder 2, %s11
    // Predicated region
    $region41: #{down_forward.6} parent=5 // pred_check
      %p2904 = pneg %p2903
    $region42: #{down_forward.6} parent=5 // pred_check_branch
      %2906 = sbr.rel (%p2904) target = $region44
    $region43: #{down_forward.6} parent=5 // pred_region
      %s2907 = ssub.s32 %s11, 2
      // Predicated region
      $region45: #{down_forward.6} parent=43 // pred_check
        %p2908 = pneg %p87
      $region46: #{down_forward.6} parent=43 // pred_check_branch
        %2910 = sbr.rel (%p2908) target = $region48
      $region47: #{down_forward.6} parent=43 // pred_region
        %p2911 = scmp.lt.s32.totalorder %s17, 1
        %s2912 = scalar_select %p2911, %s17, 1
        %s2913 = smul.addr %s2912, 64
        %s2914 = smul.addr %s2913, 4
        %s2915 = scalar_lea.vmem %s2, %s2914
      $region48: #{down_forward.6} parent=43 // pred_fallthru
        _
      // Predicated region
      $region49: #{down_forward.6} parent=43 // pred_check
        %p2916 = pneg %p113
      $region50: #{down_forward.6} parent=43 // pred_check_branch
        %2918 = sbr.rel (%p2916) target = $region52
      $region51: #{down_forward.6} parent=43 // pred_region
        %p2919 = scmp.lt.s32.totalorder %s17, 1
        %s2920 = scalar_select %p2919, %s17, 1
        %s2921 = scalar_lea.vmem %s3, %s2920
      $region52: #{down_forward.6} parent=43 // pred_fallthru
        _
      // Predicated region
      $region53: #{down_forward.6} parent=43 // pred_check
        %p2922 = pneg %p139
      $region54: #{down_forward.6} parent=43 // pred_check_branch
        %2924 = sbr.rel (%p2922) target = $region56
      $region55: #{down_forward.6} parent=43 // pred_region
        %p2925 = scmp.lt.s32.totalorder %s17, 1
        %s2926 = scalar_select %p2925, %s17, 1
        %s2927 = scalar_lea.vmem %s4, %s2926
      $region56: #{down_forward.6} parent=43 // pred_fallthru
        _
    $region44: #{down_forward.6} parent=5 // pred_fallthru
      _
  $region6: #{down_forward.6} parent=0 // loop_footer
    %s15 = sadd.s32 1, %s11
  $region7: #{down_forward.6} parent=0 // loop_footer_branch
    %10 = sbr.rel target = $region3
  $region8: #{down_forward.6} parent=0 // loop_exit
    _

</llo_original>
